<compile_context>
chip_gen: v7x
topology: tpu7x:2x2x1
jax: 0.10.0
libtpu: 0.0.40
codegen_flags: <defaults>
</compile_context>

<pallas_src>
import math
import functools

import jax
import jax.numpy as jnp
from jax import lax
from jax.experimental import pallas as pl
from jax.experimental.pallas import tpu as pltpu

HIDDEN = 16
ENC_IN = 7
DEC_IN = 6
OUT_DIM = 6

# Row layout of the packed weight array (sublane-tile-aligned segments).
ROW_EW_IH = 0                       # rows 0:7    encoder W_ih (7, 48)
ROW_DW_IH = 8                       # rows 8:14   decoder W_ih (6, 48)
ROW_EW_HH = 16                      # rows 16:32  encoder W_hh (16, 48)
ROW_DW_HH = 16 + HIDDEN             # rows 32:48  decoder W_hh (16, 48)
HEAD_BASE = 16 + 2 * HIDDEN         # rows 48:... per-step head slabs (16, 48) each


# --------------------------------------------------------------------------
# Fused Pallas kernel: encoder GRU -> decoder GRU -> ReLU + Linear(16, 6)
# --------------------------------------------------------------------------
def fused_gru_kernel(x_enc_ref, x_dec_ref, h0_ref, w_ref, b_ref, y_ref):
    B, H = h0_ref.shape
    T_enc = x_enc_ref.shape[0] // B
    T_dec = x_dec_ref.shape[0] // B
    H2 = 2 * H
    H3 = 3 * H
    Y = T_dec * OUT_DIM

    # Static row slices of the single packed weight array (all VMEM-resident).
    ew_ih = w_ref[ROW_EW_IH:ROW_EW_IH + ENC_IN, :H3]      # (7, 48)
    dw_ih = w_ref[ROW_DW_IH:ROW_DW_IH + DEC_IN, :H3]      # (6, 48)
    ew_hh = w_ref[ROW_EW_HH:ROW_EW_HH + H, :H3]           # (16, 48)
    dw_hh = w_ref[ROW_DW_HH:ROW_DW_HH + H, :H3]           # (16, 48)

    # Hoisted bias broadcasts (used on every recurrence step).
    eb_hh = jnp.broadcast_to(b_ref[1:2, :H3], (B, H3))
    db_hh = jnp.broadcast_to(b_ref[3:4, :H3], (B, H3))

    # Batched, h-independent input projections: one MXU push per stage with the
    # input bias folded in; sliced per step inside the recurrence.
    gi_enc = (jnp.dot(x_enc_ref[...], ew_ih, preferred_element_type=jnp.float32)
              + jnp.broadcast_to(b_ref[0:1, :H3], (T_enc * B, H3)))
    gi_dec = (jnp.dot(x_dec_ref[...], dw_ih, preferred_element_type=jnp.float32)
              + jnp.broadcast_to(b_ref[2:3, :H3], (T_dec * B, H3)))

    def gru_step(gi, gh, h_prev):
        # PyTorch gate order (r, z, n); r and z share one fused sigmoid.
        rz = jax.nn.sigmoid(gi[:, :H2] + gh[:, :H2])
        r = rz[:, :H]
        z = rz[:, H:]
        n = jnp.tanh(gi[:, H2:H3] + r * gh[:, H2:H3])
        return n + z * (h_prev - n)            # == (1-z)*n + z*h_prev

    # ------------------------- encoder -------------------------
    h = h0_ref[...]
    for t in range(T_enc):
        gh = jnp.dot(h, ew_hh, preferred_element_type=jnp.float32) + eb_hh
        h = gru_step(gi_enc[t * B:(t + 1) * B, :], gh, h)

    # ------------------- decoder + fused head -------------------
    # y accumulates the lane-dense (B, T_dec*OUT_DIM) output.  The head slab for
    # step t is W_out placed at lane block t (zeros elsewhere), so each step's
    # head matmul lands directly in its output columns; one store at the end.
    y = jnp.broadcast_to(b_ref[4:5, :Y], (B, Y))
    for t in range(T_dec):
        gh = jnp.dot(h, dw_hh, preferred_element_type=jnp.float32) + db_hh
        h = gru_step(gi_dec[t * B:(t + 1) * B, :], gh, h)
        w_head_t = w_ref[HEAD_BASE + t * H:HEAD_BASE + (t + 1) * H, :Y]
        y = y + jnp.dot(jnp.maximum(h, 0.0), w_head_t,
                        preferred_element_type=jnp.float32)

    y_ref[...] = y          # single lane-dense store


# --------------------------------------------------------------------------
# One-time parameter packing (NOT on the forward path)
# --------------------------------------------------------------------------
def prepare_params(params, t_dec):
    """Pack all weights into (HEAD_BASE + t_dec*H, lanes) and biases into (5, lanes)."""
    H = HIDDEN
    lanes = max(3 * H, t_dec * OUT_DIM)
    n_rows = HEAD_BASE + t_dec * H

    w_pack = jnp.zeros((n_rows, lanes), jnp.float32)
    w_pack = w_pack.at[ROW_EW_IH:ROW_EW_IH + ENC_IN, 0:3 * H].set(params["enc_w_ih"])
    w_pack = w_pack.at[ROW_DW_IH:ROW_DW_IH + DEC_IN, 0:3 * H].set(params["dec_w_ih"])
    w_pack = w_pack.at[ROW_EW_HH:ROW_EW_HH + H, 0:3 * H].set(params["enc_w_hh"])
    w_pack = w_pack.at[ROW_DW_HH:ROW_DW_HH + H, 0:3 * H].set(params["dec_w_hh"])
    for t in range(t_dec):
        w_pack = w_pack.at[HEAD_BASE + t * H:HEAD_BASE + (t + 1) * H,
                           t * OUT_DIM:(t + 1) * OUT_DIM].set(params["w_out"])

    b_pack = jnp.zeros((5, lanes), jnp.float32)
    b_pack = b_pack.at[0, 0:3 * H].set(params["enc_b_ih"][0])
    b_pack = b_pack.at[1, 0:3 * H].set(params["enc_b_hh"][0])
    b_pack = b_pack.at[2, 0:3 * H].set(params["dec_b_ih"][0])
    b_pack = b_pack.at[3, 0:3 * H].set(params["dec_b_hh"][0])
    b_pack = b_pack.at[4, 0:t_dec * OUT_DIM].set(jnp.tile(params["b_out"][0], t_dec))
    return w_pack, b_pack


# --------------------------------------------------------------------------
# Forward wrapper (single ungridded pallas_call, everything in VMEM)
# --------------------------------------------------------------------------
@jax.jit
def maize_gru_forward(inputs, inputs_, h0, w_pack, b_pack):
    """inputs: (B, T_enc, 7), inputs_: (B, T_dec, 6), h0: (B, 16) -> (B, T_dec, 6)."""
    B, T_enc, _ = inputs.shape
    _, T_dec, _ = inputs_.shape

    # (B, T, D) -> (T*B, D): time-major flatten in XLA (fused under jit), so the
    # kernel only does contiguous static row slices per timestep.
    x_enc = jnp.transpose(inputs, (1, 0, 2)).reshape(T_enc * B, ENC_IN)
    x_dec = jnp.transpose(inputs_, (1, 0, 2)).reshape(T_dec * B, DEC_IN)

    vmem = pl.BlockSpec(memory_space=pltpu.MemorySpace.VMEM)
    y_flat = pl.pallas_call(
        fused_gru_kernel,
        out_shape=jax.ShapeDtypeStruct((B, T_dec * OUT_DIM), jnp.float32),
        in_specs=[vmem, vmem, vmem, vmem, vmem],
        out_specs=vmem,
    )(x_enc, x_dec, h0, w_pack, b_pack)

    # Free row-major reshape back to (B, T_dec, OUT_DIM).
    return y_flat.reshape(B, T_dec, OUT_DIM)


# --------------------------------------------------------------------------
# Pure-JAX reference (for correctness check)
# --------------------------------------------------------------------------
def _gru_cell_ref(x_t, h_prev, w_ih, w_hh, b_ih, b_hh):
    gi = x_t @ w_ih + b_ih
    gh = h_prev @ w_hh + b_hh
    H = HIDDEN
    r = jax.nn.sigmoid(gi[:, 0:H] + gh[:, 0:H])
    z = jax.nn.sigmoid(gi[:, H:2 * H] + gh[:, H:2 * H])
    n = jnp.tanh(gi[:, 2 * H:3 * H] + r * gh[:, 2 * H:3 * H])
    return (1.0 - z) * n + z * h_prev


def _gru_scan(x_btd, h0, w_ih, w_hh, b_ih, b_hh):
    def step(h, x_t):
        h_new = _gru_cell_ref(x_t, h, w_ih, w_hh, b_ih, b_hh)
        return h_new, h_new
    hT, hs = lax.scan(step, h0, jnp.swapaxes(x_btd, 0, 1))
    return hT, jnp.swapaxes(hs, 0, 1)


def maize_gru_forward_ref(inputs, inputs_, h0, params):
    h1, _ = _gru_scan(inputs, h0, params["enc_w_ih"], params["enc_w_hh"],
                      params["enc_b_ih"], params["enc_b_hh"])
    _, hs = _gru_scan(inputs_, h1, params["dec_w_ih"], params["dec_w_hh"],
                      params["dec_b_ih"], params["dec_b_hh"])
    return jnp.maximum(hs, 0.0) @ params["w_out"] + params["b_out"]


# --------------------------------------------------------------------------
# Main
# --------------------------------------------------------------------------
if __name__ == "__main__":
    key = jax.random.PRNGKey(0)
    ks = jax.random.split(key, 16)

    B, T_enc, T_dec = 2, 8, 8
    inputs = jax.random.normal(ks[0], (B, T_enc, ENC_IN), jnp.float32)
    inputs_ = jax.random.normal(ks[1], (B, T_dec, DEC_IN), jnp.float32)
    h0 = jax.random.normal(ks[2], (B, HIDDEN), jnp.float32)

    s = 1.0 / math.sqrt(HIDDEN)
    u = lambda k_, shape: jax.random.uniform(k_, shape, jnp.float32, -s, s)
    params = {
        "enc_w_ih": u(ks[3], (ENC_IN, 3 * HIDDEN)),
        "enc_w_hh": u(ks[4], (HIDDEN, 3 * HIDDEN)),
        "enc_b_ih": u(ks[5], (1, 3 * HIDDEN)),
        "enc_b_hh": u(ks[6], (1, 3 * HIDDEN)),
        "dec_w_ih": u(ks[7], (DEC_IN, 3 * HIDDEN)),
        "dec_w_hh": u(ks[8], (HIDDEN, 3 * HIDDEN)),
        "dec_b_ih": u(ks[9], (1, 3 * HIDDEN)),
        "dec_b_hh": u(ks[10], (1, 3 * HIDDEN)),
        "w_out": u(ks[11], (HIDDEN, OUT_DIM)),
        "b_out": u(ks[12], (1, OUT_DIM)),
    }

    # One-time packing (kept off the per-call forward path).
    w_pack, b_pack = prepare_params(params, T_dec)
    w_pack = jax.block_until_ready(w_pack)
    b_pack = jax.block_until_ready(b_pack)

    out = jax.block_until_ready(maize_gru_forward(inputs, inputs_, h0, w_pack, b_pack))
    ref = jax.block_until_ready(maize_gru_forward_ref(inputs, inputs_, h0, params))

    assert out.shape == (B, T_dec, OUT_DIM)
    assert jnp.allclose(out, ref, atol=1e-3, rtol=1e-3), "kernel/ref mismatch"

    print("KERNEL_OK")
</pallas_src>

<mosaic_0001>
module attributes {stable_mosaic.version = 11 : i64} {
  func.func @fused_gru_kernel(%arg0: memref<16x7xf32, #tpu.memory_space<vmem>>, %arg1: memref<16x6xf32, #tpu.memory_space<vmem>>, %arg2: memref<2x16xf32, #tpu.memory_space<vmem>>, %arg3: memref<176x48xf32, #tpu.memory_space<vmem>>, %arg4: memref<5x48xf32, #tpu.memory_space<vmem>>, %arg5: memref<2x48xf32, #tpu.memory_space<vmem>>) attributes {dimension_semantics = [], scalar_prefetch = 0 : i64, scratch_operands = 0 : i64, tpu.core_type = #tpu.core_type<tc>} {
    %c0 = arith.constant 0 : index
    %c0_0 = arith.constant 0 : index
    %0 = vector.load %arg3[%c0, %c0_0] : memref<176x48xf32, #tpu.memory_space<vmem>>, vector<7x48xf32>
    %c8 = arith.constant 8 : index
    %c0_1 = arith.constant 0 : index
    %1 = vector.load %arg3[%c8, %c0_1] : memref<176x48xf32, #tpu.memory_space<vmem>>, vector<6x48xf32>
    %c16 = arith.constant 16 : index
    %c0_2 = arith.constant 0 : index
    %2 = vector.load %arg3[%c16, %c0_2] : memref<176x48xf32, #tpu.memory_space<vmem>>, vector<16x48xf32>
    %c32 = arith.constant 32 : index
    %c0_3 = arith.constant 0 : index
    %3 = vector.load %arg3[%c32, %c0_3] : memref<176x48xf32, #tpu.memory_space<vmem>>, vector<16x48xf32>
    %c1 = arith.constant 1 : index
    %c0_4 = arith.constant 0 : index
    %4 = vector.load %arg4[%c1, %c0_4] : memref<5x48xf32, #tpu.memory_space<vmem>>, vector<1x48xf32>
    %5 = vector.shape_cast %4 : vector<1x48xf32> to vector<1x48xf32>
    %6 = vector.broadcast %5 : vector<1x48xf32> to vector<2x48xf32>
    %c3 = arith.constant 3 : index
    %c0_5 = arith.constant 0 : index
    %7 = vector.load %arg4[%c3, %c0_5] : memref<5x48xf32, #tpu.memory_space<vmem>>, vector<1x48xf32>
    %8 = vector.shape_cast %7 : vector<1x48xf32> to vector<1x48xf32>
    %9 = vector.broadcast %8 : vector<1x48xf32> to vector<2x48xf32>
    %c0_6 = arith.constant 0 : index
    %c0_7 = arith.constant 0 : index
    %10 = vector.load %arg0[%c0_6, %c0_7] : memref<16x7xf32, #tpu.memory_space<vmem>>, vector<16x7xf32>
    %cst = arith.constant dense<0.000000e+00> : vector<16x48xf32>
    %11 = tpu.matmul %10, %0, %cst {dimension_numbers = #tpu.dot_dimension_numbers<[1], [0], [0], [1], [0, 0, 1, 1], [], []>} : vector<16x7xf32>, vector<7x48xf32>, vector<16x48xf32> -> vector<16x48xf32>
    %c0_8 = arith.constant 0 : index
    %c0_9 = arith.constant 0 : index
    %12 = vector.load %arg4[%c0_8, %c0_9] : memref<5x48xf32, #tpu.memory_space<vmem>>, vector<1x48xf32>
    %13 = vector.shape_cast %12 : vector<1x48xf32> to vector<1x48xf32>
    %14 = vector.broadcast %13 : vector<1x48xf32> to vector<16x48xf32>
    %15 = arith.addf %11, %14 : vector<16x48xf32>
    %c0_10 = arith.constant 0 : index
    %c0_11 = arith.constant 0 : index
    %16 = vector.load %arg1[%c0_10, %c0_11] : memref<16x6xf32, #tpu.memory_space<vmem>>, vector<16x6xf32>
    %cst_12 = arith.constant dense<0.000000e+00> : vector<16x48xf32>
    %17 = tpu.matmul %16, %1, %cst_12 {dimension_numbers = #tpu.dot_dimension_numbers<[1], [0], [0], [1], [0, 0, 1, 1], [], []>} : vector<16x6xf32>, vector<6x48xf32>, vector<16x48xf32> -> vector<16x48xf32>
    %c2 = arith.constant 2 : index
    %c0_13 = arith.constant 0 : index
    %18 = vector.load %arg4[%c2, %c0_13] : memref<5x48xf32, #tpu.memory_space<vmem>>, vector<1x48xf32>
    %19 = vector.shape_cast %18 : vector<1x48xf32> to vector<1x48xf32>
    %20 = vector.broadcast %19 : vector<1x48xf32> to vector<16x48xf32>
    %21 = arith.addf %17, %20 : vector<16x48xf32>
    %c0_14 = arith.constant 0 : index
    %c0_15 = arith.constant 0 : index
    %22 = vector.load %arg2[%c0_14, %c0_15] : memref<2x16xf32, #tpu.memory_space<vmem>>, vector<2x16xf32>
    %cst_16 = arith.constant dense<0.000000e+00> : vector<2x48xf32>
    %23 = tpu.matmul %22, %2, %cst_16 {dimension_numbers = #tpu.dot_dimension_numbers<[1], [0], [0], [1], [0, 0, 1, 1], [], []>} : vector<2x16xf32>, vector<16x48xf32>, vector<2x48xf32> -> vector<2x48xf32>
    %24 = arith.addf %23, %6 : vector<2x48xf32>
    %25 = vector.extract_strided_slice %15 {offsets = [0, 0], sizes = [2, 48], strides = [1, 1]} : vector<16x48xf32> to vector<2x48xf32>
    %26 = vector.extract_strided_slice %25 {offsets = [0, 0], sizes = [2, 32], strides = [1, 1]} : vector<2x48xf32> to vector<2x32xf32>
    %27 = vector.extract_strided_slice %24 {offsets = [0, 0], sizes = [2, 32], strides = [1, 1]} : vector<2x48xf32> to vector<2x32xf32>
    %28 = arith.addf %26, %27 : vector<2x32xf32>
    %29 = arith.negf %28 : vector<2x32xf32>
    %30 = math.exp %29 : vector<2x32xf32>
    %cst_17 = arith.constant 1.000000e+00 : f32
    %31 = vector.broadcast %cst_17 : f32 to vector<2x32xf32>
    %32 = arith.addf %31, %30 : vector<2x32xf32>
    %33 = arith.divf %31, %32 : vector<2x32xf32>
    %34 = vector.extract_strided_slice %33 {offsets = [0, 0], sizes = [2, 16], strides = [1, 1]} : vector<2x32xf32> to vector<2x16xf32>
    %35 = vector.extract_strided_slice %33 {offsets = [0, 16], sizes = [2, 16], strides = [1, 1]} : vector<2x32xf32> to vector<2x16xf32>
    %36 = vector.extract_strided_slice %25 {offsets = [0, 32], sizes = [2, 16], strides = [1, 1]} : vector<2x48xf32> to vector<2x16xf32>
    %37 = vector.extract_strided_slice %24 {offsets = [0, 32], sizes = [2, 16], strides = [1, 1]} : vector<2x48xf32> to vector<2x16xf32>
    %38 = arith.mulf %34, %37 : vector<2x16xf32>
    %39 = arith.addf %36, %38 : vector<2x16xf32>
    %40 = math.tanh %39 : vector<2x16xf32>
    %41 = arith.subf %22, %40 : vector<2x16xf32>
    %42 = arith.mulf %35, %41 : vector<2x16xf32>
    %43 = arith.addf %40, %42 : vector<2x16xf32>
    %cst_18 = arith.constant dense<0.000000e+00> : vector<2x48xf32>
    %44 = tpu.matmul %43, %2, %cst_18 {dimension_numbers = #tpu.dot_dimension_numbers<[1], [0], [0], [1], [0, 0, 1, 1], [], []>} : vector<2x16xf32>, vector<16x48xf32>, vector<2x48xf32> -> vector<2x48xf32>
    %45 = arith.addf %44, %6 : vector<2x48xf32>
    %46 = vector.extract_strided_slice %15 {offsets = [2, 0], sizes = [2, 48], strides = [1, 1]} : vector<16x48xf32> to vector<2x48xf32>
    %47 = vector.extract_strided_slice %46 {offsets = [0, 0], sizes = [2, 32], strides = [1, 1]} : vector<2x48xf32> to vector<2x32xf32>
    %48 = vector.extract_strided_slice %45 {offsets = [0, 0], sizes = [2, 32], strides = [1, 1]} : vector<2x48xf32> to vector<2x32xf32>
    %49 = arith.addf %47, %48 : vector<2x32xf32>
    %50 = arith.negf %49 : vector<2x32xf32>
    %51 = math.exp %50 : vector<2x32xf32>
    %cst_19 = arith.constant 1.000000e+00 : f32
    %52 = vector.broadcast %cst_19 : f32 to vector<2x32xf32>
    %53 = arith.addf %52, %51 : vector<2x32xf32>
    %54 = arith.divf %52, %53 : vector<2x32xf32>
    %55 = vector.extract_strided_slice %54 {offsets = [0, 0], sizes = [2, 16], strides = [1, 1]} : vector<2x32xf32> to vector<2x16xf32>
    %56 = vector.extract_strided_slice %54 {offsets = [0, 16], sizes = [2, 16], strides = [1, 1]} : vector<2x32xf32> to vector<2x16xf32>
    %57 = vector.extract_strided_slice %46 {offsets = [0, 32], sizes = [2, 16], strides = [1, 1]} : vector<2x48xf32> to vector<2x16xf32>
    %58 = vector.extract_strided_slice %45 {offsets = [0, 32], sizes = [2, 16], strides = [1, 1]} : vector<2x48xf32> to vector<2x16xf32>
    %59 = arith.mulf %55, %58 : vector<2x16xf32>
    %60 = arith.addf %57, %59 : vector<2x16xf32>
    %61 = math.tanh %60 : vector<2x16xf32>
    %62 = arith.subf %43, %61 : vector<2x16xf32>
    %63 = arith.mulf %56, %62 : vector<2x16xf32>
    %64 = arith.addf %61, %63 : vector<2x16xf32>
    %cst_20 = arith.constant dense<0.000000e+00> : vector<2x48xf32>
    %65 = tpu.matmul %64, %2, %cst_20 {dimension_numbers = #tpu.dot_dimension_numbers<[1], [0], [0], [1], [0, 0, 1, 1], [], []>} : vector<2x16xf32>, vector<16x48xf32>, vector<2x48xf32> -> vector<2x48xf32>
    %66 = arith.addf %65, %6 : vector<2x48xf32>
    %67 = vector.extract_strided_slice %15 {offsets = [4, 0], sizes = [2, 48], strides = [1, 1]} : vector<16x48xf32> to vector<2x48xf32>
    %68 = vector.extract_strided_slice %67 {offsets = [0, 0], sizes = [2, 32], strides = [1, 1]} : vector<2x48xf32> to vector<2x32xf32>
    %69 = vector.extract_strided_slice %66 {offsets = [0, 0], sizes = [2, 32], strides = [1, 1]} : vector<2x48xf32> to vector<2x32xf32>
    %70 = arith.addf %68, %69 : vector<2x32xf32>
    %71 = arith.negf %70 : vector<2x32xf32>
    %72 = math.exp %71 : vector<2x32xf32>
    %cst_21 = arith.constant 1.000000e+00 : f32
    %73 = vector.broadcast %cst_21 : f32 to vector<2x32xf32>
    %74 = arith.addf %73, %72 : vector<2x32xf32>
    %75 = arith.divf %73, %74 : vector<2x32xf32>
    %76 = vector.extract_strided_slice %75 {offsets = [0, 0], sizes = [2, 16], strides = [1, 1]} : vector<2x32xf32> to vector<2x16xf32>
    %77 = vector.extract_strided_slice %75 {offsets = [0, 16], sizes = [2, 16], strides = [1, 1]} : vector<2x32xf32> to vector<2x16xf32>
    %78 = vector.extract_strided_slice %67 {offsets = [0, 32], sizes = [2, 16], strides = [1, 1]} : vector<2x48xf32> to vector<2x16xf32>
    %79 = vector.extract_strided_slice %66 {offsets = [0, 32], sizes = [2, 16], strides = [1, 1]} : vector<2x48xf32> to vector<2x16xf32>
    %80 = arith.mulf %76, %79 : vector<2x16xf32>
    %81 = arith.addf %78, %80 : vector<2x16xf32>
    %82 = math.tanh %81 : vector<2x16xf32>
    %83 = arith.subf %64, %82 : vector<2x16xf32>
    %84 = arith.mulf %77, %83 : vector<2x16xf32>
    %85 = arith.addf %82, %84 : vector<2x16xf32>
    %cst_22 = arith.constant dense<0.000000e+00> : vector<2x48xf32>
    %86 = tpu.matmul %85, %2, %cst_22 {dimension_numbers = #tpu.dot_dimension_numbers<[1], [0], [0], [1], [0, 0, 1, 1], [], []>} : vector<2x16xf32>, vector<16x48xf32>, vector<2x48xf32> -> vector<2x48xf32>
    %87 = arith.addf %86, %6 : vector<2x48xf32>
    %88 = vector.extract_strided_slice %15 {offsets = [6, 0], sizes = [2, 48], strides = [1, 1]} : vector<16x48xf32> to vector<2x48xf32>
    %89 = vector.extract_strided_slice %88 {offsets = [0, 0], sizes = [2, 32], strides = [1, 1]} : vector<2x48xf32> to vector<2x32xf32>
    %90 = vector.extract_strided_slice %87 {offsets = [0, 0], sizes = [2, 32], strides = [1, 1]} : vector<2x48xf32> to vector<2x32xf32>
    %91 = arith.addf %89, %90 : vector<2x32xf32>
    %92 = arith.negf %91 : vector<2x32xf32>
    %93 = math.exp %92 : vector<2x32xf32>
    %cst_23 = arith.constant 1.000000e+00 : f32
    %94 = vector.broadcast %cst_23 : f32 to vector<2x32xf32>
    %95 = arith.addf %94, %93 : vector<2x32xf32>
    %96 = arith.divf %94, %95 : vector<2x32xf32>
    %97 = vector.extract_strided_slice %96 {offsets = [0, 0], sizes = [2, 16], strides = [1, 1]} : vector<2x32xf32> to vector<2x16xf32>
    %98 = vector.extract_strided_slice %96 {offsets = [0, 16], sizes = [2, 16], strides = [1, 1]} : vector<2x32xf32> to vector<2x16xf32>
    %99 = vector.extract_strided_slice %88 {offsets = [0, 32], sizes = [2, 16], strides = [1, 1]} : vector<2x48xf32> to vector<2x16xf32>
    %100 = vector.extract_strided_slice %87 {offsets = [0, 32], sizes = [2, 16], strides = [1, 1]} : vector<2x48xf32> to vector<2x16xf32>
    %101 = arith.mulf %97, %100 : vector<2x16xf32>
    %102 = arith.addf %99, %101 : vector<2x16xf32>
    %103 = math.tanh %102 : vector<2x16xf32>
    %104 = arith.subf %85, %103 : vector<2x16xf32>
    %105 = arith.mulf %98, %104 : vector<2x16xf32>
    %106 = arith.addf %103, %105 : vector<2x16xf32>
    %cst_24 = arith.constant dense<0.000000e+00> : vector<2x48xf32>
    %107 = tpu.matmul %106, %2, %cst_24 {dimension_numbers = #tpu.dot_dimension_numbers<[1], [0], [0], [1], [0, 0, 1, 1], [], []>} : vector<2x16xf32>, vector<16x48xf32>, vector<2x48xf32> -> vector<2x48xf32>
    %108 = arith.addf %107, %6 : vector<2x48xf32>
    %109 = vector.extract_strided_slice %15 {offsets = [8, 0], sizes = [2, 48], strides = [1, 1]} : vector<16x48xf32> to vector<2x48xf32>
    %110 = vector.extract_strided_slice %109 {offsets = [0, 0], sizes = [2, 32], strides = [1, 1]} : vector<2x48xf32> to vector<2x32xf32>
    %111 = vector.extract_strided_slice %108 {offsets = [0, 0], sizes = [2, 32], strides = [1, 1]} : vector<2x48xf32> to vector<2x32xf32>
    %112 = arith.addf %110, %111 : vector<2x32xf32>
    %113 = arith.negf %112 : vector<2x32xf32>
    %114 = math.exp %113 : vector<2x32xf32>
    %cst_25 = arith.constant 1.000000e+00 : f32
    %115 = vector.broadcast %cst_25 : f32 to vector<2x32xf32>
    %116 = arith.addf %115, %114 : vector<2x32xf32>
    %117 = arith.divf %115, %116 : vector<2x32xf32>
    %118 = vector.extract_strided_slice %117 {offsets = [0, 0], sizes = [2, 16], strides = [1, 1]} : vector<2x32xf32> to vector<2x16xf32>
    %119 = vector.extract_strided_slice %117 {offsets = [0, 16], sizes = [2, 16], strides = [1, 1]} : vector<2x32xf32> to vector<2x16xf32>
    %120 = vector.extract_strided_slice %109 {offsets = [0, 32], sizes = [2, 16], strides = [1, 1]} : vector<2x48xf32> to vector<2x16xf32>
    %121 = vector.extract_strided_slice %108 {offsets = [0, 32], sizes = [2, 16], strides = [1, 1]} : vector<2x48xf32> to vector<2x16xf32>
    %122 = arith.mulf %118, %121 : vector<2x16xf32>
    %123 = arith.addf %120, %122 : vector<2x16xf32>
    %124 = math.tanh %123 : vector<2x16xf32>
    %125 = arith.subf %106, %124 : vector<2x16xf32>
    %126 = arith.mulf %119, %125 : vector<2x16xf32>
    %127 = arith.addf %124, %126 : vector<2x16xf32>
    %cst_26 = arith.constant dense<0.000000e+00> : vector<2x48xf32>
    %128 = tpu.matmul %127, %2, %cst_26 {dimension_numbers = #tpu.dot_dimension_numbers<[1], [0], [0], [1], [0, 0, 1, 1], [], []>} : vector<2x16xf32>, vector<16x48xf32>, vector<2x48xf32> -> vector<2x48xf32>
    %129 = arith.addf %128, %6 : vector<2x48xf32>
    %130 = vector.extract_strided_slice %15 {offsets = [10, 0], sizes = [2, 48], strides = [1, 1]} : vector<16x48xf32> to vector<2x48xf32>
    %131 = vector.extract_strided_slice %130 {offsets = [0, 0], sizes = [2, 32], strides = [1, 1]} : vector<2x48xf32> to vector<2x32xf32>
    %132 = vector.extract_strided_slice %129 {offsets = [0, 0], sizes = [2, 32], strides = [1, 1]} : vector<2x48xf32> to vector<2x32xf32>
    %133 = arith.addf %131, %132 : vector<2x32xf32>
    %134 = arith.negf %133 : vector<2x32xf32>
    %135 = math.exp %134 : vector<2x32xf32>
    %cst_27 = arith.constant 1.000000e+00 : f32
    %136 = vector.broadcast %cst_27 : f32 to vector<2x32xf32>
    %137 = arith.addf %136, %135 : vector<2x32xf32>
    %138 = arith.divf %136, %137 : vector<2x32xf32>
    %139 = vector.extract_strided_slice %138 {offsets = [0, 0], sizes = [2, 16], strides = [1, 1]} : vector<2x32xf32> to vector<2x16xf32>
    %140 = vector.extract_strided_slice %138 {offsets = [0, 16], sizes = [2, 16], strides = [1, 1]} : vector<2x32xf32> to vector<2x16xf32>
    %141 = vector.extract_strided_slice %130 {offsets = [0, 32], sizes = [2, 16], strides = [1, 1]} : vector<2x48xf32> to vector<2x16xf32>
    %142 = vector.extract_strided_slice %129 {offsets = [0, 32], sizes = [2, 16], strides = [1, 1]} : vector<2x48xf32> to vector<2x16xf32>
    %143 = arith.mulf %139, %142 : vector<2x16xf32>
    %144 = arith.addf %141, %143 : vector<2x16xf32>
    %145 = math.tanh %144 : vector<2x16xf32>
    %146 = arith.subf %127, %145 : vector<2x16xf32>
    %147 = arith.mulf %140, %146 : vector<2x16xf32>
    %148 = arith.addf %145, %147 : vector<2x16xf32>
    %cst_28 = arith.constant dense<0.000000e+00> : vector<2x48xf32>
    %149 = tpu.matmul %148, %2, %cst_28 {dimension_numbers = #tpu.dot_dimension_numbers<[1], [0], [0], [1], [0, 0, 1, 1], [], []>} : vector<2x16xf32>, vector<16x48xf32>, vector<2x48xf32> -> vector<2x48xf32>
    %150 = arith.addf %149, %6 : vector<2x48xf32>
    %151 = vector.extract_strided_slice %15 {offsets = [12, 0], sizes = [2, 48], strides = [1, 1]} : vector<16x48xf32> to vector<2x48xf32>
    %152 = vector.extract_strided_slice %151 {offsets = [0, 0], sizes = [2, 32], strides = [1, 1]} : vector<2x48xf32> to vector<2x32xf32>
    %153 = vector.extract_strided_slice %150 {offsets = [0, 0], sizes = [2, 32], strides = [1, 1]} : vector<2x48xf32> to vector<2x32xf32>
    %154 = arith.addf %152, %153 : vector<2x32xf32>
    %155 = arith.negf %154 : vector<2x32xf32>
    %156 = math.exp %155 : vector<2x32xf32>
    %cst_29 = arith.constant 1.000000e+00 : f32
    %157 = vector.broadcast %cst_29 : f32 to vector<2x32xf32>
    %158 = arith.addf %157, %156 : vector<2x32xf32>
    %159 = arith.divf %157, %158 : vector<2x32xf32>
    %160 = vector.extract_strided_slice %159 {offsets = [0, 0], sizes = [2, 16], strides = [1, 1]} : vector<2x32xf32> to vector<2x16xf32>
    %161 = vector.extract_strided_slice %159 {offsets = [0, 16], sizes = [2, 16], strides = [1, 1]} : vector<2x32xf32> to vector<2x16xf32>
    %162 = vector.extract_strided_slice %151 {offsets = [0, 32], sizes = [2, 16], strides = [1, 1]} : vector<2x48xf32> to vector<2x16xf32>
    %163 = vector.extract_strided_slice %150 {offsets = [0, 32], sizes = [2, 16], strides = [1, 1]} : vector<2x48xf32> to vector<2x16xf32>
    %164 = arith.mulf %160, %163 : vector<2x16xf32>
    %165 = arith.addf %162, %164 : vector<2x16xf32>
    %166 = math.tanh %165 : vector<2x16xf32>
    %167 = arith.subf %148, %166 : vector<2x16xf32>
    %168 = arith.mulf %161, %167 : vector<2x16xf32>
    %169 = arith.addf %166, %168 : vector<2x16xf32>
    %cst_30 = arith.constant dense<0.000000e+00> : vector<2x48xf32>
    %170 = tpu.matmul %169, %2, %cst_30 {dimension_numbers = #tpu.dot_dimension_numbers<[1], [0], [0], [1], [0, 0, 1, 1], [], []>} : vector<2x16xf32>, vector<16x48xf32>, vector<2x48xf32> -> vector<2x48xf32>
    %171 = arith.addf %170, %6 : vector<2x48xf32>
    %172 = vector.extract_strided_slice %15 {offsets = [14, 0], sizes = [2, 48], strides = [1, 1]} : vector<16x48xf32> to vector<2x48xf32>
    %173 = vector.extract_strided_slice %172 {offsets = [0, 0], sizes = [2, 32], strides = [1, 1]} : vector<2x48xf32> to vector<2x32xf32>
    %174 = vector.extract_strided_slice %171 {offsets = [0, 0], sizes = [2, 32], strides = [1, 1]} : vector<2x48xf32> to vector<2x32xf32>
    %175 = arith.addf %173, %174 : vector<2x32xf32>
    %176 = arith.negf %175 : vector<2x32xf32>
    %177 = math.exp %176 : vector<2x32xf32>
    %cst_31 = arith.constant 1.000000e+00 : f32
    %178 = vector.broadcast %cst_31 : f32 to vector<2x32xf32>
    %179 = arith.addf %178, %177 : vector<2x32xf32>
    %180 = arith.divf %178, %179 : vector<2x32xf32>
    %181 = vector.extract_strided_slice %180 {offsets = [0, 0], sizes = [2, 16], strides = [1, 1]} : vector<2x32xf32> to vector<2x16xf32>
    %182 = vector.extract_strided_slice %180 {offsets = [0, 16], sizes = [2, 16], strides = [1, 1]} : vector<2x32xf32> to vector<2x16xf32>
    %183 = vector.extract_strided_slice %172 {offsets = [0, 32], sizes = [2, 16], strides = [1, 1]} : vector<2x48xf32> to vector<2x16xf32>
    %184 = vector.extract_strided_slice %171 {offsets = [0, 32], sizes = [2, 16], strides = [1, 1]} : vector<2x48xf32> to vector<2x16xf32>
    %185 = arith.mulf %181, %184 : vector<2x16xf32>
    %186 = arith.addf %183, %185 : vector<2x16xf32>
    %187 = math.tanh %186 : vector<2x16xf32>
    %188 = arith.subf %169, %187 : vector<2x16xf32>
    %189 = arith.mulf %182, %188 : vector<2x16xf32>
    %190 = arith.addf %187, %189 : vector<2x16xf32>
    %c4 = arith.constant 4 : index
    %c0_32 = arith.constant 0 : index
    %191 = vector.load %arg4[%c4, %c0_32] : memref<5x48xf32, #tpu.memory_space<vmem>>, vector<1x48xf32>
    %192 = vector.shape_cast %191 : vector<1x48xf32> to vector<1x48xf32>
    %193 = vector.broadcast %192 : vector<1x48xf32> to vector<2x48xf32>
    %cst_33 = arith.constant dense<0.000000e+00> : vector<2x48xf32>
    %194 = tpu.matmul %190, %3, %cst_33 {dimension_numbers = #tpu.dot_dimension_numbers<[1], [0], [0], [1], [0, 0, 1, 1], [], []>} : vector<2x16xf32>, vector<16x48xf32>, vector<2x48xf32> -> vector<2x48xf32>
    %195 = arith.addf %194, %9 : vector<2x48xf32>
    %196 = vector.extract_strided_slice %21 {offsets = [0, 0], sizes = [2, 48], strides = [1, 1]} : vector<16x48xf32> to vector<2x48xf32>
    %197 = vector.extract_strided_slice %196 {offsets = [0, 0], sizes = [2, 32], strides = [1, 1]} : vector<2x48xf32> to vector<2x32xf32>
    %198 = vector.extract_strided_slice %195 {offsets = [0, 0], sizes = [2, 32], strides = [1, 1]} : vector<2x48xf32> to vector<2x32xf32>
    %199 = arith.addf %197, %198 : vector<2x32xf32>
    %200 = arith.negf %199 : vector<2x32xf32>
    %201 = math.exp %200 : vector<2x32xf32>
    %cst_34 = arith.constant 1.000000e+00 : f32
    %202 = vector.broadcast %cst_34 : f32 to vector<2x32xf32>
    %203 = arith.addf %202, %201 : vector<2x32xf32>
    %204 = arith.divf %202, %203 : vector<2x32xf32>
    %205 = vector.extract_strided_slice %204 {offsets = [0, 0], sizes = [2, 16], strides = [1, 1]} : vector<2x32xf32> to vector<2x16xf32>
    %206 = vector.extract_strided_slice %204 {offsets = [0, 16], sizes = [2, 16], strides = [1, 1]} : vector<2x32xf32> to vector<2x16xf32>
    %207 = vector.extract_strided_slice %196 {offsets = [0, 32], sizes = [2, 16], strides = [1, 1]} : vector<2x48xf32> to vector<2x16xf32>
    %208 = vector.extract_strided_slice %195 {offsets = [0, 32], sizes = [2, 16], strides = [1, 1]} : vector<2x48xf32> to vector<2x16xf32>
    %209 = arith.mulf %205, %208 : vector<2x16xf32>
    %210 = arith.addf %207, %209 : vector<2x16xf32>
    %211 = math.tanh %210 : vector<2x16xf32>
    %212 = arith.subf %190, %211 : vector<2x16xf32>
    %213 = arith.mulf %206, %212 : vector<2x16xf32>
    %214 = arith.addf %211, %213 : vector<2x16xf32>
    %c48 = arith.constant 48 : index
    %c0_35 = arith.constant 0 : index
    %215 = vector.load %arg3[%c48, %c0_35] : memref<176x48xf32, #tpu.memory_space<vmem>>, vector<16x48xf32>
    %cst_36 = arith.constant 0.000000e+00 : f32
    %216 = vector.broadcast %cst_36 : f32 to vector<2x16xf32>
    %217 = arith.maximumf %214, %216 : vector<2x16xf32>
    %cst_37 = arith.constant dense<0.000000e+00> : vector<2x48xf32>
    %218 = tpu.matmul %217, %215, %cst_37 {dimension_numbers = #tpu.dot_dimension_numbers<[1], [0], [0], [1], [0, 0, 1, 1], [], []>} : vector<2x16xf32>, vector<16x48xf32>, vector<2x48xf32> -> vector<2x48xf32>
    %219 = arith.addf %193, %218 : vector<2x48xf32>
    %cst_38 = arith.constant dense<0.000000e+00> : vector<2x48xf32>
    %220 = tpu.matmul %214, %3, %cst_38 {dimension_numbers = #tpu.dot_dimension_numbers<[1], [0], [0], [1], [0, 0, 1, 1], [], []>} : vector<2x16xf32>, vector<16x48xf32>, vector<2x48xf32> -> vector<2x48xf32>
    %221 = arith.addf %220, %9 : vector<2x48xf32>
    %222 = vector.extract_strided_slice %21 {offsets = [2, 0], sizes = [2, 48], strides = [1, 1]} : vector<16x48xf32> to vector<2x48xf32>
    %223 = vector.extract_strided_slice %222 {offsets = [0, 0], sizes = [2, 32], strides = [1, 1]} : vector<2x48xf32> to vector<2x32xf32>
    %224 = vector.extract_strided_slice %221 {offsets = [0, 0], sizes = [2, 32], strides = [1, 1]} : vector<2x48xf32> to vector<2x32xf32>
    %225 = arith.addf %223, %224 : vector<2x32xf32>
    %226 = arith.negf %225 : vector<2x32xf32>
    %227 = math.exp %226 : vector<2x32xf32>
    %cst_39 = arith.constant 1.000000e+00 : f32
    %228 = vector.broadcast %cst_39 : f32 to vector<2x32xf32>
    %229 = arith.addf %228, %227 : vector<2x32xf32>
    %230 = arith.divf %228, %229 : vector<2x32xf32>
    %231 = vector.extract_strided_slice %230 {offsets = [0, 0], sizes = [2, 16], strides = [1, 1]} : vector<2x32xf32> to vector<2x16xf32>
    %232 = vector.extract_strided_slice %230 {offsets = [0, 16], sizes = [2, 16], strides = [1, 1]} : vector<2x32xf32> to vector<2x16xf32>
    %233 = vector.extract_strided_slice %222 {offsets = [0, 32], sizes = [2, 16], strides = [1, 1]} : vector<2x48xf32> to vector<2x16xf32>
    %234 = vector.extract_strided_slice %221 {offsets = [0, 32], sizes = [2, 16], strides = [1, 1]} : vector<2x48xf32> to vector<2x16xf32>
    %235 = arith.mulf %231, %234 : vector<2x16xf32>
    %236 = arith.addf %233, %235 : vector<2x16xf32>
    %237 = math.tanh %236 : vector<2x16xf32>
    %238 = arith.subf %214, %237 : vector<2x16xf32>
    %239 = arith.mulf %232, %238 : vector<2x16xf32>
    %240 = arith.addf %237, %239 : vector<2x16xf32>
    %c64 = arith.constant 64 : index
    %c0_40 = arith.constant 0 : index
    %241 = vector.load %arg3[%c64, %c0_40] : memref<176x48xf32, #tpu.memory_space<vmem>>, vector<16x48xf32>
    %cst_41 = arith.constant 0.000000e+00 : f32
    %242 = vector.broadcast %cst_41 : f32 to vector<2x16xf32>
    %243 = arith.maximumf %240, %242 : vector<2x16xf32>
    %cst_42 = arith.constant dense<0.000000e+00> : vector<2x48xf32>
    %244 = tpu.matmul %243, %241, %cst_42 {dimension_numbers = #tpu.dot_dimension_numbers<[1], [0], [0], [1], [0, 0, 1, 1], [], []>} : vector<2x16xf32>, vector<16x48xf32>, vector<2x48xf32> -> vector<2x48xf32>
    %245 = arith.addf %219, %244 : vector<2x48xf32>
    %cst_43 = arith.constant dense<0.000000e+00> : vector<2x48xf32>
    %246 = tpu.matmul %240, %3, %cst_43 {dimension_numbers = #tpu.dot_dimension_numbers<[1], [0], [0], [1], [0, 0, 1, 1], [], []>} : vector<2x16xf32>, vector<16x48xf32>, vector<2x48xf32> -> vector<2x48xf32>
    %247 = arith.addf %246, %9 : vector<2x48xf32>
    %248 = vector.extract_strided_slice %21 {offsets = [4, 0], sizes = [2, 48], strides = [1, 1]} : vector<16x48xf32> to vector<2x48xf32>
    %249 = vector.extract_strided_slice %248 {offsets = [0, 0], sizes = [2, 32], strides = [1, 1]} : vector<2x48xf32> to vector<2x32xf32>
    %250 = vector.extract_strided_slice %247 {offsets = [0, 0], sizes = [2, 32], strides = [1, 1]} : vector<2x48xf32> to vector<2x32xf32>
    %251 = arith.addf %249, %250 : vector<2x32xf32>
    %252 = arith.negf %251 : vector<2x32xf32>
    %253 = math.exp %252 : vector<2x32xf32>
    %cst_44 = arith.constant 1.000000e+00 : f32
    %254 = vector.broadcast %cst_44 : f32 to vector<2x32xf32>
    %255 = arith.addf %254, %253 : vector<2x32xf32>
    %256 = arith.divf %254, %255 : vector<2x32xf32>
    %257 = vector.extract_strided_slice %256 {offsets = [0, 0], sizes = [2, 16], strides = [1, 1]} : vector<2x32xf32> to vector<2x16xf32>
    %258 = vector.extract_strided_slice %256 {offsets = [0, 16], sizes = [2, 16], strides = [1, 1]} : vector<2x32xf32> to vector<2x16xf32>
    %259 = vector.extract_strided_slice %248 {offsets = [0, 32], sizes = [2, 16], strides = [1, 1]} : vector<2x48xf32> to vector<2x16xf32>
    %260 = vector.extract_strided_slice %247 {offsets = [0, 32], sizes = [2, 16], strides = [1, 1]} : vector<2x48xf32> to vector<2x16xf32>
    %261 = arith.mulf %257, %260 : vector<2x16xf32>
    %262 = arith.addf %259, %261 : vector<2x16xf32>
    %263 = math.tanh %262 : vector<2x16xf32>
    %264 = arith.subf %240, %263 : vector<2x16xf32>
    %265 = arith.mulf %258, %264 : vector<2x16xf32>
    %266 = arith.addf %263, %265 : vector<2x16xf32>
    %c80 = arith.constant 80 : index
    %c0_45 = arith.constant 0 : index
    %267 = vector.load %arg3[%c80, %c0_45] : memref<176x48xf32, #tpu.memory_space<vmem>>, vector<16x48xf32>
    %cst_46 = arith.constant 0.000000e+00 : f32
    %268 = vector.broadcast %cst_46 : f32 to vector<2x16xf32>
    %269 = arith.maximumf %266, %268 : vector<2x16xf32>
    %cst_47 = arith.constant dense<0.000000e+00> : vector<2x48xf32>
    %270 = tpu.matmul %269, %267, %cst_47 {dimension_numbers = #tpu.dot_dimension_numbers<[1], [0], [0], [1], [0, 0, 1, 1], [], []>} : vector<2x16xf32>, vector<16x48xf32>, vector<2x48xf32> -> vector<2x48xf32>
    %271 = arith.addf %245, %270 : vector<2x48xf32>
    %cst_48 = arith.constant dense<0.000000e+00> : vector<2x48xf32>
    %272 = tpu.matmul %266, %3, %cst_48 {dimension_numbers = #tpu.dot_dimension_numbers<[1], [0], [0], [1], [0, 0, 1, 1], [], []>} : vector<2x16xf32>, vector<16x48xf32>, vector<2x48xf32> -> vector<2x48xf32>
    %273 = arith.addf %272, %9 : vector<2x48xf32>
    %274 = vector.extract_strided_slice %21 {offsets = [6, 0], sizes = [2, 48], strides = [1, 1]} : vector<16x48xf32> to vector<2x48xf32>
    %275 = vector.extract_strided_slice %274 {offsets = [0, 0], sizes = [2, 32], strides = [1, 1]} : vector<2x48xf32> to vector<2x32xf32>
    %276 = vector.extract_strided_slice %273 {offsets = [0, 0], sizes = [2, 32], strides = [1, 1]} : vector<2x48xf32> to vector<2x32xf32>
    %277 = arith.addf %275, %276 : vector<2x32xf32>
    %278 = arith.negf %277 : vector<2x32xf32>
    %279 = math.exp %278 : vector<2x32xf32>
    %cst_49 = arith.constant 1.000000e+00 : f32
    %280 = vector.broadcast %cst_49 : f32 to vector<2x32xf32>
    %281 = arith.addf %280, %279 : vector<2x32xf32>
    %282 = arith.divf %280, %281 : vector<2x32xf32>
    %283 = vector.extract_strided_slice %282 {offsets = [0, 0], sizes = [2, 16], strides = [1, 1]} : vector<2x32xf32> to vector<2x16xf32>
    %284 = vector.extract_strided_slice %282 {offsets = [0, 16], sizes = [2, 16], strides = [1, 1]} : vector<2x32xf32> to vector<2x16xf32>
    %285 = vector.extract_strided_slice %274 {offsets = [0, 32], sizes = [2, 16], strides = [1, 1]} : vector<2x48xf32> to vector<2x16xf32>
    %286 = vector.extract_strided_slice %273 {offsets = [0, 32], sizes = [2, 16], strides = [1, 1]} : vector<2x48xf32> to vector<2x16xf32>
    %287 = arith.mulf %283, %286 : vector<2x16xf32>
    %288 = arith.addf %285, %287 : vector<2x16xf32>
    %289 = math.tanh %288 : vector<2x16xf32>
    %290 = arith.subf %266, %289 : vector<2x16xf32>
    %291 = arith.mulf %284, %290 : vector<2x16xf32>
    %292 = arith.addf %289, %291 : vector<2x16xf32>
    %c96 = arith.constant 96 : index
    %c0_50 = arith.constant 0 : index
    %293 = vector.load %arg3[%c96, %c0_50] : memref<176x48xf32, #tpu.memory_space<vmem>>, vector<16x48xf32>
    %cst_51 = arith.constant 0.000000e+00 : f32
    %294 = vector.broadcast %cst_51 : f32 to vector<2x16xf32>
    %295 = arith.maximumf %292, %294 : vector<2x16xf32>
    %cst_52 = arith.constant dense<0.000000e+00> : vector<2x48xf32>
    %296 = tpu.matmul %295, %293, %cst_52 {dimension_numbers = #tpu.dot_dimension_numbers<[1], [0], [0], [1], [0, 0, 1, 1], [], []>} : vector<2x16xf32>, vector<16x48xf32>, vector<2x48xf32> -> vector<2x48xf32>
    %297 = arith.addf %271, %296 : vector<2x48xf32>
    %cst_53 = arith.constant dense<0.000000e+00> : vector<2x48xf32>
    %298 = tpu.matmul %292, %3, %cst_53 {dimension_numbers = #tpu.dot_dimension_numbers<[1], [0], [0], [1], [0, 0, 1, 1], [], []>} : vector<2x16xf32>, vector<16x48xf32>, vector<2x48xf32> -> vector<2x48xf32>
    %299 = arith.addf %298, %9 : vector<2x48xf32>
    %300 = vector.extract_strided_slice %21 {offsets = [8, 0], sizes = [2, 48], strides = [1, 1]} : vector<16x48xf32> to vector<2x48xf32>
    %301 = vector.extract_strided_slice %300 {offsets = [0, 0], sizes = [2, 32], strides = [1, 1]} : vector<2x48xf32> to vector<2x32xf32>
    %302 = vector.extract_strided_slice %299 {offsets = [0, 0], sizes = [2, 32], strides = [1, 1]} : vector<2x48xf32> to vector<2x32xf32>
    %303 = arith.addf %301, %302 : vector<2x32xf32>
    %304 = arith.negf %303 : vector<2x32xf32>
    %305 = math.exp %304 : vector<2x32xf32>
    %cst_54 = arith.constant 1.000000e+00 : f32
    %306 = vector.broadcast %cst_54 : f32 to vector<2x32xf32>
    %307 = arith.addf %306, %305 : vector<2x32xf32>
    %308 = arith.divf %306, %307 : vector<2x32xf32>
    %309 = vector.extract_strided_slice %308 {offsets = [0, 0], sizes = [2, 16], strides = [1, 1]} : vector<2x32xf32> to vector<2x16xf32>
    %310 = vector.extract_strided_slice %308 {offsets = [0, 16], sizes = [2, 16], strides = [1, 1]} : vector<2x32xf32> to vector<2x16xf32>
    %311 = vector.extract_strided_slice %300 {offsets = [0, 32], sizes = [2, 16], strides = [1, 1]} : vector<2x48xf32> to vector<2x16xf32>
    %312 = vector.extract_strided_slice %299 {offsets = [0, 32], sizes = [2, 16], strides = [1, 1]} : vector<2x48xf32> to vector<2x16xf32>
    %313 = arith.mulf %309, %312 : vector<2x16xf32>
    %314 = arith.addf %311, %313 : vector<2x16xf32>
    %315 = math.tanh %314 : vector<2x16xf32>
    %316 = arith.subf %292, %315 : vector<2x16xf32>
    %317 = arith.mulf %310, %316 : vector<2x16xf32>
    %318 = arith.addf %315, %317 : vector<2x16xf32>
    %c112 = arith.constant 112 : index
    %c0_55 = arith.constant 0 : index
    %319 = vector.load %arg3[%c112, %c0_55] : memref<176x48xf32, #tpu.memory_space<vmem>>, vector<16x48xf32>
    %cst_56 = arith.constant 0.000000e+00 : f32
    %320 = vector.broadcast %cst_56 : f32 to vector<2x16xf32>
    %321 = arith.maximumf %318, %320 : vector<2x16xf32>
    %cst_57 = arith.constant dense<0.000000e+00> : vector<2x48xf32>
    %322 = tpu.matmul %321, %319, %cst_57 {dimension_numbers = #tpu.dot_dimension_numbers<[1], [0], [0], [1], [0, 0, 1, 1], [], []>} : vector<2x16xf32>, vector<16x48xf32>, vector<2x48xf32> -> vector<2x48xf32>
    %323 = arith.addf %297, %322 : vector<2x48xf32>
    %cst_58 = arith.constant dense<0.000000e+00> : vector<2x48xf32>
    %324 = tpu.matmul %318, %3, %cst_58 {dimension_numbers = #tpu.dot_dimension_numbers<[1], [0], [0], [1], [0, 0, 1, 1], [], []>} : vector<2x16xf32>, vector<16x48xf32>, vector<2x48xf32> -> vector<2x48xf32>
    %325 = arith.addf %324, %9 : vector<2x48xf32>
    %326 = vector.extract_strided_slice %21 {offsets = [10, 0], sizes = [2, 48], strides = [1, 1]} : vector<16x48xf32> to vector<2x48xf32>
    %327 = vector.extract_strided_slice %326 {offsets = [0, 0], sizes = [2, 32], strides = [1, 1]} : vector<2x48xf32> to vector<2x32xf32>
    %328 = vector.extract_strided_slice %325 {offsets = [0, 0], sizes = [2, 32], strides = [1, 1]} : vector<2x48xf32> to vector<2x32xf32>
    %329 = arith.addf %327, %328 : vector<2x32xf32>
    %330 = arith.negf %329 : vector<2x32xf32>
    %331 = math.exp %330 : vector<2x32xf32>
    %cst_59 = arith.constant 1.000000e+00 : f32
    %332 = vector.broadcast %cst_59 : f32 to vector<2x32xf32>
    %333 = arith.addf %332, %331 : vector<2x32xf32>
    %334 = arith.divf %332, %333 : vector<2x32xf32>
    %335 = vector.extract_strided_slice %334 {offsets = [0, 0], sizes = [2, 16], strides = [1, 1]} : vector<2x32xf32> to vector<2x16xf32>
    %336 = vector.extract_strided_slice %334 {offsets = [0, 16], sizes = [2, 16], strides = [1, 1]} : vector<2x32xf32> to vector<2x16xf32>
    %337 = vector.extract_strided_slice %326 {offsets = [0, 32], sizes = [2, 16], strides = [1, 1]} : vector<2x48xf32> to vector<2x16xf32>
    %338 = vector.extract_strided_slice %325 {offsets = [0, 32], sizes = [2, 16], strides = [1, 1]} : vector<2x48xf32> to vector<2x16xf32>
    %339 = arith.mulf %335, %338 : vector<2x16xf32>
    %340 = arith.addf %337, %339 : vector<2x16xf32>
    %341 = math.tanh %340 : vector<2x16xf32>
    %342 = arith.subf %318, %341 : vector<2x16xf32>
    %343 = arith.mulf %336, %342 : vector<2x16xf32>
    %344 = arith.addf %341, %343 : vector<2x16xf32>
    %c128 = arith.constant 128 : index
    %c0_60 = arith.constant 0 : index
    %345 = vector.load %arg3[%c128, %c0_60] : memref<176x48xf32, #tpu.memory_space<vmem>>, vector<16x48xf32>
    %cst_61 = arith.constant 0.000000e+00 : f32
    %346 = vector.broadcast %cst_61 : f32 to vector<2x16xf32>
    %347 = arith.maximumf %344, %346 : vector<2x16xf32>
    %cst_62 = arith.constant dense<0.000000e+00> : vector<2x48xf32>
    %348 = tpu.matmul %347, %345, %cst_62 {dimension_numbers = #tpu.dot_dimension_numbers<[1], [0], [0], [1], [0, 0, 1, 1], [], []>} : vector<2x16xf32>, vector<16x48xf32>, vector<2x48xf32> -> vector<2x48xf32>
    %349 = arith.addf %323, %348 : vector<2x48xf32>
    %cst_63 = arith.constant dense<0.000000e+00> : vector<2x48xf32>
    %350 = tpu.matmul %344, %3, %cst_63 {dimension_numbers = #tpu.dot_dimension_numbers<[1], [0], [0], [1], [0, 0, 1, 1], [], []>} : vector<2x16xf32>, vector<16x48xf32>, vector<2x48xf32> -> vector<2x48xf32>
    %351 = arith.addf %350, %9 : vector<2x48xf32>
    %352 = vector.extract_strided_slice %21 {offsets = [12, 0], sizes = [2, 48], strides = [1, 1]} : vector<16x48xf32> to vector<2x48xf32>
    %353 = vector.extract_strided_slice %352 {offsets = [0, 0], sizes = [2, 32], strides = [1, 1]} : vector<2x48xf32> to vector<2x32xf32>
    %354 = vector.extract_strided_slice %351 {offsets = [0, 0], sizes = [2, 32], strides = [1, 1]} : vector<2x48xf32> to vector<2x32xf32>
    %355 = arith.addf %353, %354 : vector<2x32xf32>
    %356 = arith.negf %355 : vector<2x32xf32>
    %357 = math.exp %356 : vector<2x32xf32>
    %cst_64 = arith.constant 1.000000e+00 : f32
    %358 = vector.broadcast %cst_64 : f32 to vector<2x32xf32>
    %359 = arith.addf %358, %357 : vector<2x32xf32>
    %360 = arith.divf %358, %359 : vector<2x32xf32>
    %361 = vector.extract_strided_slice %360 {offsets = [0, 0], sizes = [2, 16], strides = [1, 1]} : vector<2x32xf32> to vector<2x16xf32>
    %362 = vector.extract_strided_slice %360 {offsets = [0, 16], sizes = [2, 16], strides = [1, 1]} : vector<2x32xf32> to vector<2x16xf32>
    %363 = vector.extract_strided_slice %352 {offsets = [0, 32], sizes = [2, 16], strides = [1, 1]} : vector<2x48xf32> to vector<2x16xf32>
    %364 = vector.extract_strided_slice %351 {offsets = [0, 32], sizes = [2, 16], strides = [1, 1]} : vector<2x48xf32> to vector<2x16xf32>
    %365 = arith.mulf %361, %364 : vector<2x16xf32>
    %366 = arith.addf %363, %365 : vector<2x16xf32>
    %367 = math.tanh %366 : vector<2x16xf32>
    %368 = arith.subf %344, %367 : vector<2x16xf32>
    %369 = arith.mulf %362, %368 : vector<2x16xf32>
    %370 = arith.addf %367, %369 : vector<2x16xf32>
    %c144 = arith.constant 144 : index
    %c0_65 = arith.constant 0 : index
    %371 = vector.load %arg3[%c144, %c0_65] : memref<176x48xf32, #tpu.memory_space<vmem>>, vector<16x48xf32>
    %cst_66 = arith.constant 0.000000e+00 : f32
    %372 = vector.broadcast %cst_66 : f32 to vector<2x16xf32>
    %373 = arith.maximumf %370, %372 : vector<2x16xf32>
    %cst_67 = arith.constant dense<0.000000e+00> : vector<2x48xf32>
    %374 = tpu.matmul %373, %371, %cst_67 {dimension_numbers = #tpu.dot_dimension_numbers<[1], [0], [0], [1], [0, 0, 1, 1], [], []>} : vector<2x16xf32>, vector<16x48xf32>, vector<2x48xf32> -> vector<2x48xf32>
    %375 = arith.addf %349, %374 : vector<2x48xf32>
    %cst_68 = arith.constant dense<0.000000e+00> : vector<2x48xf32>
    %376 = tpu.matmul %370, %3, %cst_68 {dimension_numbers = #tpu.dot_dimension_numbers<[1], [0], [0], [1], [0, 0, 1, 1], [], []>} : vector<2x16xf32>, vector<16x48xf32>, vector<2x48xf32> -> vector<2x48xf32>
    %377 = arith.addf %376, %9 : vector<2x48xf32>
    %378 = vector.extract_strided_slice %21 {offsets = [14, 0], sizes = [2, 48], strides = [1, 1]} : vector<16x48xf32> to vector<2x48xf32>
    %379 = vector.extract_strided_slice %378 {offsets = [0, 0], sizes = [2, 32], strides = [1, 1]} : vector<2x48xf32> to vector<2x32xf32>
    %380 = vector.extract_strided_slice %377 {offsets = [0, 0], sizes = [2, 32], strides = [1, 1]} : vector<2x48xf32> to vector<2x32xf32>
    %381 = arith.addf %379, %380 : vector<2x32xf32>
    %382 = arith.negf %381 : vector<2x32xf32>
    %383 = math.exp %382 : vector<2x32xf32>
    %cst_69 = arith.constant 1.000000e+00 : f32
    %384 = vector.broadcast %cst_69 : f32 to vector<2x32xf32>
    %385 = arith.addf %384, %383 : vector<2x32xf32>
    %386 = arith.divf %384, %385 : vector<2x32xf32>
    %387 = vector.extract_strided_slice %386 {offsets = [0, 0], sizes = [2, 16], strides = [1, 1]} : vector<2x32xf32> to vector<2x16xf32>
    %388 = vector.extract_strided_slice %386 {offsets = [0, 16], sizes = [2, 16], strides = [1, 1]} : vector<2x32xf32> to vector<2x16xf32>
    %389 = vector.extract_strided_slice %378 {offsets = [0, 32], sizes = [2, 16], strides = [1, 1]} : vector<2x48xf32> to vector<2x16xf32>
    %390 = vector.extract_strided_slice %377 {offsets = [0, 32], sizes = [2, 16], strides = [1, 1]} : vector<2x48xf32> to vector<2x16xf32>
    %391 = arith.mulf %387, %390 : vector<2x16xf32>
    %392 = arith.addf %389, %391 : vector<2x16xf32>
    %393 = math.tanh %392 : vector<2x16xf32>
    %394 = arith.subf %370, %393 : vector<2x16xf32>
    %395 = arith.mulf %388, %394 : vector<2x16xf32>
    %396 = arith.addf %393, %395 : vector<2x16xf32>
    %c160 = arith.constant 160 : index
    %c0_70 = arith.constant 0 : index
    %397 = vector.load %arg3[%c160, %c0_70] : memref<176x48xf32, #tpu.memory_space<vmem>>, vector<16x48xf32>
    %cst_71 = arith.constant 0.000000e+00 : f32
    %398 = vector.broadcast %cst_71 : f32 to vector<2x16xf32>
    %399 = arith.maximumf %396, %398 : vector<2x16xf32>
    %cst_72 = arith.constant dense<0.000000e+00> : vector<2x48xf32>
    %400 = tpu.matmul %399, %397, %cst_72 {dimension_numbers = #tpu.dot_dimension_numbers<[1], [0], [0], [1], [0, 0, 1, 1], [], []>} : vector<2x16xf32>, vector<16x48xf32>, vector<2x48xf32> -> vector<2x48xf32>
    %401 = arith.addf %375, %400 : vector<2x48xf32>
    %c0_73 = arith.constant 0 : index
    %c0_74 = arith.constant 0 : index
    %402 = vector.load %arg5[%c0_73, %c0_74] : memref<2x48xf32, #tpu.memory_space<vmem>>, vector<2x48xf32>
    tpu.vector_store %arg5[%c0_73, %c0_74], %401 {strides = array<i32>} : memref<2x48xf32, #tpu.memory_space<vmem>>, vector<2x48xf32>,
    return
  }
}

</mosaic_0001>

<llo_original>
// kernel: maize_gru_forward.1
$region0: #{maize_gru_forward.1}
  #allocation0 [shape = 'u32[]', space=smem, size = 0x4, offset = 0x4, fixed_abs, tag = 'smem constant byte address 0x4 - core index']
  #allocation1 [shape = 'u32[144,128]{1,0:T(1,128)}', space=vmem, size = 0x12000, scoped, tag = 'internal scratch']
  %s0 = inlined_call_operand.vmem [shape: f32[16,7], index: 0, kind: input, shape index: {}]
  %s1 = inlined_call_operand.vmem [shape: f32[16,6], index: 1, kind: input, shape index: {}]
  %s2 = inlined_call_operand.vmem [shape: f32[2,16], index: 2, kind: input, shape index: {}]
  %s3 = inlined_call_operand.vmem [shape: f32[176,48], index: 3, kind: input, shape index: {}]
  %s4 = inlined_call_operand.vmem [shape: f32[5,48], index: 4, kind: input, shape index: {}]
  %s5 = inlined_call_operand.vmem [shape: f32[2,48], index: 5, kind: output, shape index: {}]
  %s6 = sld [smem:[#allocation0]]
  $region30: #{maize_gru_forward.1} parent=0
    _
  %s8 = ssub.s32 1, %s6
  %s9 = scalar_select 0, %s8, %s6
  // Predicated region
  $region2: #{maize_gru_forward.1} parent=0 // pred_check
    _
  $region3: #{maize_gru_forward.1} parent=0 // pred_check_branch
    %11 = sbr.rel (0) target = $region5
  $region4: #{maize_gru_forward.1} parent=0 // pred_region
    _
  $region5: #{maize_gru_forward.1} parent=0 // pred_fallthru
    _
  // Predicated region
  $region6: #{maize_gru_forward.1} parent=0 // pred_check
    _
  $region7: #{maize_gru_forward.1} parent=0 // pred_check_branch
    %13 = sbr.rel (0) target = $region9
  $region8: #{maize_gru_forward.1} parent=0 // pred_region
    _
  $region9: #{maize_gru_forward.1} parent=0 // pred_fallthru
    _
  // Predicated region
  $region10: #{maize_gru_forward.1} parent=0 // pred_check
    _
  $region11: #{maize_gru_forward.1} parent=0 // pred_check_branch
    %15 = sbr.rel (0) target = $region13
  $region12: #{maize_gru_forward.1} parent=0 // pred_region
    _
  $region13: #{maize_gru_forward.1} parent=0 // pred_fallthru
    _
  // Predicated region
  $region14: #{maize_gru_forward.1} parent=0 // pred_check
    _
  $region15: #{maize_gru_forward.1} parent=0 // pred_check_branch
    %17 = sbr.rel (0) target = $region17
  $region16: #{maize_gru_forward.1} parent=0 // pred_region
    _
  $region17: #{maize_gru_forward.1} parent=0 // pred_fallthru
    _
  // Predicated region
  $region18: #{maize_gru_forward.1} parent=0 // pred_check
    _
  $region19: #{maize_gru_forward.1} parent=0 // pred_check_branch
    %19 = sbr.rel (0) target = $region21
  $region20: #{maize_gru_forward.1} parent=0 // pred_region
    _
  $region21: #{maize_gru_forward.1} parent=0 // pred_fallthru
    _
  %v20 = vld [vmem:[%s3] sm:$0x7f]
  %v21 = vld [vmem:[%s3 + $0x8] sm:$0x3f]
  %v22 = vld [vmem:[%s3 + $0x10] sm:$0xff]
  %v23 = vld [vmem:[%s3 + $0x18] sm:$0xff]
  %v24 = vld [vmem:[%s3 + $0x20] sm:$0xff]
  %v25 = vld [vmem:[%s3 + $0x28] sm:$0xff]
  %v26 = vld [vmem:[%s4 + $0x1] sm:$0x1]
  %v27 = vlaneseq
  %v28 = vshrl.u32 %v27, 7
  %v29 = vsub.s32 0, %v28
  %v30 = vrot.slane %v26, %v29
  %v31 = vld [vmem:[%s4 + $0x3] sm:$0x1]
  %v32 = vlaneseq
  %v33 = vshrl.u32 %v32, 7
  %v34 = vsub.s32 0, %v33
  %v35 = vrot.slane %v31, %v34
  %v36 = vld [vmem:[%s0] sm:$0xff]
  %v37 = vld [vmem:[%s0 + $0x8] sm:$0xff]
  %v38 = vld [vmem:[%s4] sm:$0x1]
  %v39 = vlaneseq
  %v40 = vshrl.u32 %v39, 7
  %v41 = vsub.s32 0, %v40
  %v42 = vrot.slane %v38, %v41
  %vm43 = vcmask 56320
  %v45 = vsel %vm43, %v36, 0
  %v48 = vsel %vm43, %v37, 0
  %vm50 = vcmask 1046528
  %v52 = vsel %vm50, %v20, 0
  %54 = vmatprep.subr.mxu0 0.0
  %55 = vmatpush1.msra.mxu0 %v52
  %56 = vmatprep.subr.mxu0 0.0
  %57 = vmatpush1.msra.mxu0 0.0
  %58 = vmatprep.subr.mxu0 0.0
  %59 = vmatpush1.msra.mxu0 0.0
  %60 = vmatprep.subr.mxu0 0.0
  %61 = vmatpush1.msra.mxu0 0.0
  %62 = vmatprep.subr.mxu0 0.0
  %63 = vmatpush1.msra.mxu0 0.0
  %64 = vmatprep.subr.mxu0 0.0
  %65 = vmatpush1.msra.mxu0 0.0
  %66 = vmatprep.subr.mxu0 0.0
  %67 = vmatpush1.msra.mxu0 0.0
  %68 = vmatprep.subr.mxu0 0.0
  %69 = vmatpush1.msra.mxu0 0.0
  %70 = vmatprep.subr.mxu0 0.0
  %71 = vmatpush1.msra.mxu0 0.0
  %72 = vmatprep.subr.mxu0 0.0
  %73 = vmatpush1.msra.mxu0 0.0
  %74 = vmatprep.subr.mxu0 0.0
  %75 = vmatpush1.msra.mxu0 0.0
  %76 = vmatprep.subr.mxu0 0.0
  %77 = vmatpush1.msra.mxu0 0.0
  %78 = vmatprep.subr.mxu0 0.0
  %79 = vmatpush1.msra.mxu0 0.0
  %80 = vmatprep.subr.mxu0 0.0
  %81 = vmatpush1.msra.mxu0 0.0
  %82 = vmatprep.subr.mxu0 0.0
  %83 = vmatpush1.msra.mxu0 0.0
  %84 = vmatprep.subr.mxu0 0.0
  %85 = vmatpush1.msra.mxu0 0.0
  %86 = vmatprep.subr.mxu0 0.0
  %87 = vmatpush1.msra.mxu0 0.0
  %88 = vmatprep.subr.mxu0 0.0
  %89 = vmatpush1.msra.mxu0 0.0
  %90 = vmatprep.subr.mxu0 0.0
  %91 = vmatpush1.msra.mxu0 0.0
  %92 = vmatprep.subr.mxu0 0.0
  %93 = vmatpush1.msra.mxu0 0.0
  %94 = vmatprep.subr.mxu0 0.0
  %95 = vmatpush1.msra.mxu0 0.0
  %96 = vmatprep.subr.mxu0 0.0
  %97 = vmatpush1.msra.mxu0 0.0
  %98 = vmatprep.subr.mxu0 0.0
  %99 = vmatpush1.msra.mxu0 0.0
  %100 = vmatprep.subr.mxu0 0.0
  %101 = vmatpush1.msra.mxu0 0.0
  %102 = vmatprep.subr.mxu0 0.0
  %103 = vmatpush1.msra.mxu0 0.0
  %104 = vmatprep.subr.mxu0 0.0
  %105 = vmatpush1.msra.mxu0 0.0
  %106 = vmatprep.subr.mxu0 0.0
  %107 = vmatpush1.msra.mxu0 0.0
  %108 = vmatprep.subr.mxu0 0.0
  %109 = vmatpush1.msra.mxu0 0.0
  %110 = vmatprep.subr.mxu0 0.0
  %111 = vmatpush1.msra.mxu0 0.0
  %112 = vmatprep.subr.mxu0 0.0
  %113 = vmatpush1.msra.mxu0 0.0
  %114 = vmatprep.subr.mxu0 0.0
  %115 = vmatpush1.msra.mxu0 0.0
  %116 = vmatprep.subr.mxu0 0.0
  %117 = vmatpush1.msra.mxu0 0.0
  %118 = vmatprep.mubr.f32.mxu0 0.0
  %119 = vmatmul.mubr.f32.gmra.mrb[0].mxu0 %v45
  %v120 = vpop.f32.mrb[0].mxu0
  %v121 = vadd.f32 %v42, %v120
  %v122 = vpop.f32.mrb[0].mxu0
  %123 = vmatprep.mubr.f32.mxu0 0.0
  %124 = vmatmul.mubr.f32.gmra.mrb[0].mxu0 %v48
  %v125 = vpop.f32.mrb[0].mxu0
  %v126 = vadd.f32 %v42, %v125
  %v127 = vpop.f32.mrb[0].mxu0
  %128 = vdwg.mxu0
  %v129 = vld [vmem:[%s1] sm:$0xff]
  %v130 = vld [vmem:[%s1 + $0x8] sm:$0xff]
  %v131 = vld [vmem:[%s4 + $0x2] sm:$0x1]
  %v132 = vlaneseq
  %v133 = vshrl.u32 %v132, 7
  %v134 = vsub.s32 0, %v133
  %v135 = vrot.slane %v131, %v134
  %vm136 = vcmask 48128
  %v138 = vsel %vm136, %v129, 0
  %v141 = vsel %vm136, %v130, 0
  %vm143 = vcmask 1045504
  %v145 = vsel %vm143, %v21, 0
  %147 = vmatprep.subr.mxu0 0.0
  %148 = vmatpush1.msra.mxu0 %v145
  %149 = vmatprep.subr.mxu0 0.0
  %150 = vmatpush1.msra.mxu0 0.0
  %151 = vmatprep.subr.mxu0 0.0
  %152 = vmatpush1.msra.mxu0 0.0
  %153 = vmatprep.subr.mxu0 0.0
  %154 = vmatpush1.msra.mxu0 0.0
  %155 = vmatprep.subr.mxu0 0.0
  %156 = vmatpush1.msra.mxu0 0.0
  %157 = vmatprep.subr.mxu0 0.0
  %158 = vmatpush1.msra.mxu0 0.0
  %159 = vmatprep.subr.mxu0 0.0
  %160 = vmatpush1.msra.mxu0 0.0
  %161 = vmatprep.subr.mxu0 0.0
  %162 = vmatpush1.msra.mxu0 0.0
  %163 = vmatprep.subr.mxu0 0.0
  %164 = vmatpush1.msra.mxu0 0.0
  %165 = vmatprep.subr.mxu0 0.0
  %166 = vmatpush1.msra.mxu0 0.0
  %167 = vmatprep.subr.mxu0 0.0
  %168 = vmatpush1.msra.mxu0 0.0
  %169 = vmatprep.subr.mxu0 0.0
  %170 = vmatpush1.msra.mxu0 0.0
  %171 = vmatprep.subr.mxu0 0.0
  %172 = vmatpush1.msra.mxu0 0.0
  %173 = vmatprep.subr.mxu0 0.0
  %174 = vmatpush1.msra.mxu0 0.0
  %175 = vmatprep.subr.mxu0 0.0
  %176 = vmatpush1.msra.mxu0 0.0
  %177 = vmatprep.subr.mxu0 0.0
  %178 = vmatpush1.msra.mxu0 0.0
  %179 = vmatprep.subr.mxu0 0.0
  %180 = vmatpush1.msra.mxu0 0.0
  %181 = vmatprep.subr.mxu0 0.0
  %182 = vmatpush1.msra.mxu0 0.0
  %183 = vmatprep.subr.mxu0 0.0
  %184 = vmatpush1.msra.mxu0 0.0
  %185 = vmatprep.subr.mxu0 0.0
  %186 = vmatpush1.msra.mxu0 0.0
  %187 = vmatprep.subr.mxu0 0.0
  %188 = vmatpush1.msra.mxu0 0.0
  %189 = vmatprep.subr.mxu0 0.0
  %190 = vmatpush1.msra.mxu0 0.0
  %191 = vmatprep.subr.mxu0 0.0
  %192 = vmatpush1.msra.mxu0 0.0
  %193 = vmatprep.subr.mxu0 0.0
  %194 = vmatpush1.msra.mxu0 0.0
  %195 = vmatprep.subr.mxu0 0.0
  %196 = vmatpush1.msra.mxu0 0.0
  %197 = vmatprep.subr.mxu0 0.0
  %198 = vmatpush1.msra.mxu0 0.0
  %199 = vmatprep.subr.mxu0 0.0
  %200 = vmatpush1.msra.mxu0 0.0
  %201 = vmatprep.subr.mxu0 0.0
  %202 = vmatpush1.msra.mxu0 0.0
  %203 = vmatprep.subr.mxu0 0.0
  %204 = vmatpush1.msra.mxu0 0.0
  %205 = vmatprep.subr.mxu0 0.0
  %206 = vmatpush1.msra.mxu0 0.0
  %207 = vmatprep.subr.mxu0 0.0
  %208 = vmatpush1.msra.mxu0 0.0
  %209 = vmatprep.subr.mxu0 0.0
  %210 = vmatpush1.msra.mxu0 0.0
  %211 = vmatprep.mubr.f32.mxu0 0.0
  %212 = vmatmul.mubr.f32.gmra.mrb[0].mxu0 %v138
  %v213 = vpop.f32.mrb[0].mxu0
  %v214 = vadd.f32 %v135, %v213
  %v215 = vpop.f32.mrb[0].mxu0
  %216 = vmatprep.mubr.f32.mxu0 0.0
  %217 = vmatmul.mubr.f32.gmra.mrb[0].mxu0 %v141
  %v218 = vpop.f32.mrb[0].mxu0
  %v219 = vadd.f32 %v135, %v218
  %v220 = vpop.f32.mrb[0].mxu0
  %221 = vdwg.mxu0
  %v222 = vld [vmem:[%s2] sm:$0x3]
  %vm223 = vcmask 130048
  %v225 = vsel %vm223, %v222, 0
  %227 = vmatprep.subr.mxu0 0.0
  %228 = vmatpush1.msra.mxu0 %v22
  %229 = vmatprep.subr.mxu0 0.0
  %230 = vmatpush1.msra.mxu0 %v23
  %231 = vmatprep.subr.mxu0 0.0
  %232 = vmatpush1.msra.mxu0 0.0
  %233 = vmatprep.subr.mxu0 0.0
  %234 = vmatpush1.msra.mxu0 0.0
  %235 = vmatprep.subr.mxu0 0.0
  %236 = vmatpush1.msra.mxu0 0.0
  %237 = vmatprep.subr.mxu0 0.0
  %238 = vmatpush1.msra.mxu0 0.0
  %239 = vmatprep.subr.mxu0 0.0
  %240 = vmatpush1.msra.mxu0 0.0
  %241 = vmatprep.subr.mxu0 0.0
  %242 = vmatpush1.msra.mxu0 0.0
  %243 = vmatprep.subr.mxu0 0.0
  %244 = vmatpush1.msra.mxu0 0.0
  %245 = vmatprep.subr.mxu0 0.0
  %246 = vmatpush1.msra.mxu0 0.0
  %247 = vmatprep.subr.mxu0 0.0
  %248 = vmatpush1.msra.mxu0 0.0
  %249 = vmatprep.subr.mxu0 0.0
  %250 = vmatpush1.msra.mxu0 0.0
  %251 = vmatprep.subr.mxu0 0.0
  %252 = vmatpush1.msra.mxu0 0.0
  %253 = vmatprep.subr.mxu0 0.0
  %254 = vmatpush1.msra.mxu0 0.0
  %255 = vmatprep.subr.mxu0 0.0
  %256 = vmatpush1.msra.mxu0 0.0
  %257 = vmatprep.subr.mxu0 0.0
  %258 = vmatpush1.msra.mxu0 0.0
  %259 = vmatprep.subr.mxu0 0.0
  %260 = vmatpush1.msra.mxu0 0.0
  %261 = vmatprep.subr.mxu0 0.0
  %262 = vmatpush1.msra.mxu0 0.0
  %263 = vmatprep.subr.mxu0 0.0
  %264 = vmatpush1.msra.mxu0 0.0
  %265 = vmatprep.subr.mxu0 0.0
  %266 = vmatpush1.msra.mxu0 0.0
  %267 = vmatprep.subr.mxu0 0.0
  %268 = vmatpush1.msra.mxu0 0.0
  %269 = vmatprep.subr.mxu0 0.0
  %270 = vmatpush1.msra.mxu0 0.0
  %271 = vmatprep.subr.mxu0 0.0
  %272 = vmatpush1.msra.mxu0 0.0
  %273 = vmatprep.subr.mxu0 0.0
  %274 = vmatpush1.msra.mxu0 0.0
  %275 = vmatprep.subr.mxu0 0.0
  %276 = vmatpush1.msra.mxu0 0.0
  %277 = vmatprep.subr.mxu0 0.0
  %278 = vmatpush1.msra.mxu0 0.0
  %279 = vmatprep.subr.mxu0 0.0
  %280 = vmatpush1.msra.mxu0 0.0
  %281 = vmatprep.subr.mxu0 0.0
  %282 = vmatpush1.msra.mxu0 0.0
  %283 = vmatprep.subr.mxu0 0.0
  %284 = vmatpush1.msra.mxu0 0.0
  %285 = vmatprep.subr.mxu0 0.0
  %286 = vmatpush1.msra.mxu0 0.0
  %287 = vmatprep.subr.mxu0 0.0
  %288 = vmatpush1.msra.mxu0 0.0
  %289 = vmatprep.subr.mxu0 0.0
  %290 = vmatpush1.msra.mxu0 0.0
  %291 = vmatprep.mubr.f32.mxu0 0.0
  %292 = vmatmul.mubr.f32.gmra.mrb[0].mxu0 %v225
  %v293 = vpop.f32.mrb[0].mxu0
  %v294 = vadd.f32 %v30, %v293
  %v295 = vpop.f32.mrb[0].mxu0
  %296 = vdwg.mxu0
  %v297 = vadd.f32 %v121, %v294
  %v298 = vxor.u32 %v297, 2147483648
  %v299 = vmul.f32 %v298, 1.442695
  %v300 = vpow.pop %v299
  %v301 = vadd.f32 %v300, 1.0
  %v302 = vrcp.pop %v301
  %v303 = vmul.f32 1.0, %v302
  %305 = vrot.lane.b32.xlu0 %v294, 96
  %v306 = vpop.permute.xlu0 %305
  %v308 = vmul.f32 %v303, %v306
  %310 = vrot.lane.b32.xlu0 %v308, 32
  %v311 = vpop.permute.xlu0 %310
  %v313 = vadd.f32 %v121, %v311
  %v314 = vtanh.pop %v313
  %316 = vrot.lane.b32.xlu0 %v314, 96
  %v317 = vpop.permute.xlu0 %316
  %v319 = vsub.f32 %v222, %v317
  %321 = vrot.lane.b32.xlu0 %v319, 16
  %v322 = vpop.permute.xlu0 %321
  %v324 = vmul.f32 %v303, %v322
  %326 = vrot.lane.b32.xlu0 %v324, 16
  %v327 = vpop.permute.xlu0 %326
  %v329 = vadd.f32 %v314, %v327
  %331 = vrot.lane.b32.xlu0 %v329, 96
  %v332 = vpop.permute.xlu0 %331
  %v333 = vsel %vm223, %v332, 0
  %335 = vmatprep.subr.mxu0 0.0
  %336 = vmatpush1.msra.mxu0 %v22
  %337 = vmatprep.subr.mxu0 0.0
  %338 = vmatpush1.msra.mxu0 %v23
  %339 = vmatprep.subr.mxu0 0.0
  %340 = vmatpush1.msra.mxu0 0.0
  %341 = vmatprep.subr.mxu0 0.0
  %342 = vmatpush1.msra.mxu0 0.0
  %343 = vmatprep.subr.mxu0 0.0
  %344 = vmatpush1.msra.mxu0 0.0
  %345 = vmatprep.subr.mxu0 0.0
  %346 = vmatpush1.msra.mxu0 0.0
  %347 = vmatprep.subr.mxu0 0.0
  %348 = vmatpush1.msra.mxu0 0.0
  %349 = vmatprep.subr.mxu0 0.0
  %350 = vmatpush1.msra.mxu0 0.0
  %351 = vmatprep.subr.mxu0 0.0
  %352 = vmatpush1.msra.mxu0 0.0
  %353 = vmatprep.subr.mxu0 0.0
  %354 = vmatpush1.msra.mxu0 0.0
  %355 = vmatprep.subr.mxu0 0.0
  %356 = vmatpush1.msra.mxu0 0.0
  %357 = vmatprep.subr.mxu0 0.0
  %358 = vmatpush1.msra.mxu0 0.0
  %359 = vmatprep.subr.mxu0 0.0
  %360 = vmatpush1.msra.mxu0 0.0
  %361 = vmatprep.subr.mxu0 0.0
  %362 = vmatpush1.msra.mxu0 0.0
  %363 = vmatprep.subr.mxu0 0.0
  %364 = vmatpush1.msra.mxu0 0.0
  %365 = vmatprep.subr.mxu0 0.0
  %366 = vmatpush1.msra.mxu0 0.0
  %367 = vmatprep.subr.mxu0 0.0
  %368 = vmatpush1.msra.mxu0 0.0
  %369 = vmatprep.subr.mxu0 0.0
  %370 = vmatpush1.msra.mxu0 0.0
  %371 = vmatprep.subr.mxu0 0.0
  %372 = vmatpush1.msra.mxu0 0.0
  %373 = vmatprep.subr.mxu0 0.0
  %374 = vmatpush1.msra.mxu0 0.0
  %375 = vmatprep.subr.mxu0 0.0
  %376 = vmatpush1.msra.mxu0 0.0
  %377 = vmatprep.subr.mxu0 0.0
  %378 = vmatpush1.msra.mxu0 0.0
  %379 = vmatprep.subr.mxu0 0.0
  %380 = vmatpush1.msra.mxu0 0.0
  %381 = vmatprep.subr.mxu0 0.0
  %382 = vmatpush1.msra.mxu0 0.0
  %383 = vmatprep.subr.mxu0 0.0
  %384 = vmatpush1.msra.mxu0 0.0
  %385 = vmatprep.subr.mxu0 0.0
  %386 = vmatpush1.msra.mxu0 0.0
  %387 = vmatprep.subr.mxu0 0.0
  %388 = vmatpush1.msra.mxu0 0.0
  %389 = vmatprep.subr.mxu0 0.0
  %390 = vmatpush1.msra.mxu0 0.0
  %391 = vmatprep.subr.mxu0 0.0
  %392 = vmatpush1.msra.mxu0 0.0
  %393 = vmatprep.subr.mxu0 0.0
  %394 = vmatpush1.msra.mxu0 0.0
  %395 = vmatprep.subr.mxu0 0.0
  %396 = vmatpush1.msra.mxu0 0.0
  %397 = vmatprep.subr.mxu0 0.0
  %398 = vmatpush1.msra.mxu0 0.0
  %399 = vmatprep.mubr.f32.mxu0 0.0
  %400 = vmatmul.mubr.f32.gmra.mrb[0].mxu0 %v333
  %v401 = vpop.f32.mrb[0].mxu0
  %v402 = vadd.f32 %v30, %v401
  %v403 = vpop.f32.mrb[0].mxu0
  %404 = vdwg.mxu0
  %v406 = vrot.slane %v402, 6
  %v408 = vadd.f32 %v121, %v406
  %v409 = vxor.u32 %v408, 2147483648
  %v410 = vmul.f32 %v409, 1.442695
  %v411 = vpow.pop %v410
  %v412 = vadd.f32 %v411, 1.0
  %v413 = vrcp.pop %v412
  %v414 = vmul.f32 1.0, %v413
  %415 = vrot.lane.b32.xlu0 %v406, 96
  %v416 = vpop.permute.xlu0 %415
  %v418 = vmul.f32 %v414, %v416
  %420 = vrot.lane.b32.xlu0 %v418, 32
  %v421 = vpop.permute.xlu0 %420
  %v423 = vadd.f32 %v121, %v421
  %v424 = vtanh.pop %v423
  %v426 = vrot.slane %v424, 2
  %v428 = vsub.f32 %v329, %v426
  %v430 = vrot.slane %v428, 6
  %431 = vrot.lane.b32.xlu0 %v430, 112
  %v432 = vpop.permute.xlu0 %431
  %v434 = vmul.f32 %v414, %v432
  %436 = vrot.lane.b32.xlu0 %v434, 16
  %v437 = vpop.permute.xlu0 %436
  %v439 = vadd.f32 %v424, %v437
  %v441 = vrot.slane %v439, 2
  %442 = vrot.lane.b32.xlu0 %v441, 96
  %v443 = vpop.permute.xlu0 %442
  %v444 = vsel %vm223, %v443, 0
  %446 = vmatprep.subr.mxu0 0.0
  %447 = vmatpush1.msra.mxu0 %v22
  %448 = vmatprep.subr.mxu0 0.0
  %449 = vmatpush1.msra.mxu0 %v23
  %450 = vmatprep.subr.mxu0 0.0
  %451 = vmatpush1.msra.mxu0 0.0
  %452 = vmatprep.subr.mxu0 0.0
  %453 = vmatpush1.msra.mxu0 0.0
  %454 = vmatprep.subr.mxu0 0.0
  %455 = vmatpush1.msra.mxu0 0.0
  %456 = vmatprep.subr.mxu0 0.0
  %457 = vmatpush1.msra.mxu0 0.0
  %458 = vmatprep.subr.mxu0 0.0
  %459 = vmatpush1.msra.mxu0 0.0
  %460 = vmatprep.subr.mxu0 0.0
  %461 = vmatpush1.msra.mxu0 0.0
  %462 = vmatprep.subr.mxu0 0.0
  %463 = vmatpush1.msra.mxu0 0.0
  %464 = vmatprep.subr.mxu0 0.0
  %465 = vmatpush1.msra.mxu0 0.0
  %466 = vmatprep.subr.mxu0 0.0
  %467 = vmatpush1.msra.mxu0 0.0
  %468 = vmatprep.subr.mxu0 0.0
  %469 = vmatpush1.msra.mxu0 0.0
  %470 = vmatprep.subr.mxu0 0.0
  %471 = vmatpush1.msra.mxu0 0.0
  %472 = vmatprep.subr.mxu0 0.0
  %473 = vmatpush1.msra.mxu0 0.0
  %474 = vmatprep.subr.mxu0 0.0
  %475 = vmatpush1.msra.mxu0 0.0
  %476 = vmatprep.subr.mxu0 0.0
  %477 = vmatpush1.msra.mxu0 0.0
  %478 = vmatprep.subr.mxu0 0.0
  %479 = vmatpush1.msra.mxu0 0.0
  %480 = vmatprep.subr.mxu0 0.0
  %481 = vmatpush1.msra.mxu0 0.0
  %482 = vmatprep.subr.mxu0 0.0
  %483 = vmatpush1.msra.mxu0 0.0
  %484 = vmatprep.subr.mxu0 0.0
  %485 = vmatpush1.msra.mxu0 0.0
  %486 = vmatprep.subr.mxu0 0.0
  %487 = vmatpush1.msra.mxu0 0.0
  %488 = vmatprep.subr.mxu0 0.0
  %489 = vmatpush1.msra.mxu0 0.0
  %490 = vmatprep.subr.mxu0 0.0
  %491 = vmatpush1.msra.mxu0 0.0
  %492 = vmatprep.subr.mxu0 0.0
  %493 = vmatpush1.msra.mxu0 0.0
  %494 = vmatprep.subr.mxu0 0.0
  %495 = vmatpush1.msra.mxu0 0.0
  %496 = vmatprep.subr.mxu0 0.0
  %497 = vmatpush1.msra.mxu0 0.0
  %498 = vmatprep.subr.mxu0 0.0
  %499 = vmatpush1.msra.mxu0 0.0
  %500 = vmatprep.subr.mxu0 0.0
  %501 = vmatpush1.msra.mxu0 0.0
  %502 = vmatprep.subr.mxu0 0.0
  %503 = vmatpush1.msra.mxu0 0.0
  %504 = vmatprep.subr.mxu0 0.0
  %505 = vmatpush1.msra.mxu0 0.0
  %506 = vmatprep.subr.mxu0 0.0
  %507 = vmatpush1.msra.mxu0 0.0
  %508 = vmatprep.subr.mxu0 0.0
  %509 = vmatpush1.msra.mxu0 0.0
  %510 = vmatprep.mubr.f32.mxu0 0.0
  %511 = vmatmul.mubr.f32.gmra.mrb[0].mxu0 %v444
  %v512 = vpop.f32.mrb[0].mxu0
  %v513 = vadd.f32 %v30, %v512
  %v514 = vpop.f32.mrb[0].mxu0
  %515 = vdwg.mxu0
  %v517 = vrot.slane %v513, 4
  %v519 = vadd.f32 %v121, %v517
  %v520 = vxor.u32 %v519, 2147483648
  %v521 = vmul.f32 %v520, 1.442695
  %v522 = vpow.pop %v521
  %v523 = vadd.f32 %v522, 1.0
  %v524 = vrcp.pop %v523
  %v525 = vmul.f32 1.0, %v524
  %526 = vrot.lane.b32.xlu0 %v517, 96
  %v527 = vpop.permute.xlu0 %526
  %v529 = vmul.f32 %v525, %v527
  %531 = vrot.lane.b32.xlu0 %v529, 32
  %v532 = vpop.permute.xlu0 %531
  %v534 = vadd.f32 %v121, %v532
  %v535 = vtanh.pop %v534
  %v537 = vrot.slane %v535, 2
  %v539 = vsub.f32 %v439, %v537
  %v541 = vrot.slane %v539, 6
  %542 = vrot.lane.b32.xlu0 %v541, 112
  %v543 = vpop.permute.xlu0 %542
  %v545 = vmul.f32 %v525, %v543
  %547 = vrot.lane.b32.xlu0 %v545, 16
  %v548 = vpop.permute.xlu0 %547
  %v550 = vadd.f32 %v535, %v548
  %v552 = vrot.slane %v550, 4
  %553 = vrot.lane.b32.xlu0 %v552, 96
  %v554 = vpop.permute.xlu0 %553
  %v555 = vsel %vm223, %v554, 0
  %557 = vmatprep.subr.mxu0 0.0
  %558 = vmatpush1.msra.mxu0 %v22
  %559 = vmatprep.subr.mxu0 0.0
  %560 = vmatpush1.msra.mxu0 %v23
  %561 = vmatprep.subr.mxu0 0.0
  %562 = vmatpush1.msra.mxu0 0.0
  %563 = vmatprep.subr.mxu0 0.0
  %564 = vmatpush1.msra.mxu0 0.0
  %565 = vmatprep.subr.mxu0 0.0
  %566 = vmatpush1.msra.mxu0 0.0
  %567 = vmatprep.subr.mxu0 0.0
  %568 = vmatpush1.msra.mxu0 0.0
  %569 = vmatprep.subr.mxu0 0.0
  %570 = vmatpush1.msra.mxu0 0.0
  %571 = vmatprep.subr.mxu0 0.0
  %572 = vmatpush1.msra.mxu0 0.0
  %573 = vmatprep.subr.mxu0 0.0
  %574 = vmatpush1.msra.mxu0 0.0
  %575 = vmatprep.subr.mxu0 0.0
  %576 = vmatpush1.msra.mxu0 0.0
  %577 = vmatprep.subr.mxu0 0.0
  %578 = vmatpush1.msra.mxu0 0.0
  %579 = vmatprep.subr.mxu0 0.0
  %580 = vmatpush1.msra.mxu0 0.0
  %581 = vmatprep.subr.mxu0 0.0
  %582 = vmatpush1.msra.mxu0 0.0
  %583 = vmatprep.subr.mxu0 0.0
  %584 = vmatpush1.msra.mxu0 0.0
  %585 = vmatprep.subr.mxu0 0.0
  %586 = vmatpush1.msra.mxu0 0.0
  %587 = vmatprep.subr.mxu0 0.0
  %588 = vmatpush1.msra.mxu0 0.0
  %589 = vmatprep.subr.mxu0 0.0
  %590 = vmatpush1.msra.mxu0 0.0
  %591 = vmatprep.subr.mxu0 0.0
  %592 = vmatpush1.msra.mxu0 0.0
  %593 = vmatprep.subr.mxu0 0.0
  %594 = vmatpush1.msra.mxu0 0.0
  %595 = vmatprep.subr.mxu0 0.0
  %596 = vmatpush1.msra.mxu0 0.0
  %597 = vmatprep.subr.mxu0 0.0
  %598 = vmatpush1.msra.mxu0 0.0
  %599 = vmatprep.subr.mxu0 0.0
  %600 = vmatpush1.msra.mxu0 0.0
  %601 = vmatprep.subr.mxu0 0.0
  %602 = vmatpush1.msra.mxu0 0.0
  %603 = vmatprep.subr.mxu0 0.0
  %604 = vmatpush1.msra.mxu0 0.0
  %605 = vmatprep.subr.mxu0 0.0
  %606 = vmatpush1.msra.mxu0 0.0
  %607 = vmatprep.subr.mxu0 0.0
  %608 = vmatpush1.msra.mxu0 0.0
  %609 = vmatprep.subr.mxu0 0.0
  %610 = vmatpush1.msra.mxu0 0.0
  %611 = vmatprep.subr.mxu0 0.0
  %612 = vmatpush1.msra.mxu0 0.0
  %613 = vmatprep.subr.mxu0 0.0
  %614 = vmatpush1.msra.mxu0 0.0
  %615 = vmatprep.subr.mxu0 0.0
  %616 = vmatpush1.msra.mxu0 0.0
  %617 = vmatprep.subr.mxu0 0.0
  %618 = vmatpush1.msra.mxu0 0.0
  %619 = vmatprep.subr.mxu0 0.0
  %620 = vmatpush1.msra.mxu0 0.0
  %621 = vmatprep.mubr.f32.mxu0 0.0
  %622 = vmatmul.mubr.f32.gmra.mrb[0].mxu0 %v555
  %v623 = vpop.f32.mrb[0].mxu0
  %v624 = vadd.f32 %v30, %v623
  %v625 = vpop.f32.mrb[0].mxu0
  %626 = vdwg.mxu0
  %v628 = vrot.slane %v624, 2
  %v630 = vadd.f32 %v121, %v628
  %v631 = vxor.u32 %v630, 2147483648
  %v632 = vmul.f32 %v631, 1.442695
  %v633 = vpow.pop %v632
  %v634 = vadd.f32 %v633, 1.0
  %v635 = vrcp.pop %v634
  %v636 = vmul.f32 1.0, %v635
  %637 = vrot.lane.b32.xlu0 %v628, 96
  %v638 = vpop.permute.xlu0 %637
  %v640 = vmul.f32 %v636, %v638
  %642 = vrot.lane.b32.xlu0 %v640, 32
  %v643 = vpop.permute.xlu0 %642
  %v645 = vadd.f32 %v121, %v643
  %v646 = vtanh.pop %v645
  %v648 = vrot.slane %v646, 2
  %v650 = vsub.f32 %v550, %v648
  %v652 = vrot.slane %v650, 6
  %653 = vrot.lane.b32.xlu0 %v652, 112
  %v654 = vpop.permute.xlu0 %653
  %v656 = vmul.f32 %v636, %v654
  %658 = vrot.lane.b32.xlu0 %v656, 16
  %v659 = vpop.permute.xlu0 %658
  %v661 = vadd.f32 %v646, %v659
  %v663 = vrot.slane %v661, 6
  %664 = vrot.lane.b32.xlu0 %v663, 96
  %v665 = vpop.permute.xlu0 %664
  %v666 = vsel %vm223, %v665, 0
  %668 = vmatprep.subr.mxu0 0.0
  %669 = vmatpush1.msra.mxu0 %v22
  %670 = vmatprep.subr.mxu0 0.0
  %671 = vmatpush1.msra.mxu0 %v23
  %672 = vmatprep.subr.mxu0 0.0
  %673 = vmatpush1.msra.mxu0 0.0
  %674 = vmatprep.subr.mxu0 0.0
  %675 = vmatpush1.msra.mxu0 0.0
  %676 = vmatprep.subr.mxu0 0.0
  %677 = vmatpush1.msra.mxu0 0.0
  %678 = vmatprep.subr.mxu0 0.0
  %679 = vmatpush1.msra.mxu0 0.0
  %680 = vmatprep.subr.mxu0 0.0
  %681 = vmatpush1.msra.mxu0 0.0
  %682 = vmatprep.subr.mxu0 0.0
  %683 = vmatpush1.msra.mxu0 0.0
  %684 = vmatprep.subr.mxu0 0.0
  %685 = vmatpush1.msra.mxu0 0.0
  %686 = vmatprep.subr.mxu0 0.0
  %687 = vmatpush1.msra.mxu0 0.0
  %688 = vmatprep.subr.mxu0 0.0
  %689 = vmatpush1.msra.mxu0 0.0
  %690 = vmatprep.subr.mxu0 0.0
  %691 = vmatpush1.msra.mxu0 0.0
  %692 = vmatprep.subr.mxu0 0.0
  %693 = vmatpush1.msra.mxu0 0.0
  %694 = vmatprep.subr.mxu0 0.0
  %695 = vmatpush1.msra.mxu0 0.0
  %696 = vmatprep.subr.mxu0 0.0
  %697 = vmatpush1.msra.mxu0 0.0
  %698 = vmatprep.subr.mxu0 0.0
  %699 = vmatpush1.msra.mxu0 0.0
  %700 = vmatprep.subr.mxu0 0.0
  %701 = vmatpush1.msra.mxu0 0.0
  %702 = vmatprep.subr.mxu0 0.0
  %703 = vmatpush1.msra.mxu0 0.0
  %704 = vmatprep.subr.mxu0 0.0
  %705 = vmatpush1.msra.mxu0 0.0
  %706 = vmatprep.subr.mxu0 0.0
  %707 = vmatpush1.msra.mxu0 0.0
  %708 = vmatprep.subr.mxu0 0.0
  %709 = vmatpush1.msra.mxu0 0.0
  %710 = vmatprep.subr.mxu0 0.0
  %711 = vmatpush1.msra.mxu0 0.0
  %712 = vmatprep.subr.mxu0 0.0
  %713 = vmatpush1.msra.mxu0 0.0
  %714 = vmatprep.subr.mxu0 0.0
  %715 = vmatpush1.msra.mxu0 0.0
  %716 = vmatprep.subr.mxu0 0.0
  %717 = vmatpush1.msra.mxu0 0.0
  %718 = vmatprep.subr.mxu0 0.0
  %719 = vmatpush1.msra.mxu0 0.0
  %720 = vmatprep.subr.mxu0 0.0
  %721 = vmatpush1.msra.mxu0 0.0
  %722 = vmatprep.subr.mxu0 0.0
  %723 = vmatpush1.msra.mxu0 0.0
  %724 = vmatprep.subr.mxu0 0.0
  %725 = vmatpush1.msra.mxu0 0.0
  %726 = vmatprep.subr.mxu0 0.0
  %727 = vmatpush1.msra.mxu0 0.0
  %728 = vmatprep.subr.mxu0 0.0
  %729 = vmatpush1.msra.mxu0 0.0
  %730 = vmatprep.subr.mxu0 0.0
  %731 = vmatpush1.msra.mxu0 0.0
  %732 = vmatprep.mubr.f32.mxu0 0.0
  %733 = vmatmul.mubr.f32.gmra.mrb[0].mxu0 %v666
  %v734 = vpop.f32.mrb[0].mxu0
  %v735 = vadd.f32 %v30, %v734
  %v736 = vpop.f32.mrb[0].mxu0
  %737 = vdwg.mxu0
  %v738 = vadd.f32 %v126, %v735
  %v739 = vxor.u32 %v738, 2147483648
  %v740 = vmul.f32 %v739, 1.442695
  %v741 = vpow.pop %v740
  %v742 = vadd.f32 %v741, 1.0
  %v743 = vrcp.pop %v742
  %v744 = vmul.f32 1.0, %v743
  %746 = vrot.lane.b32.xlu0 %v735, 96
  %v747 = vpop.permute.xlu0 %746
  %v749 = vmul.f32 %v744, %v747
  %751 = vrot.lane.b32.xlu0 %v749, 32
  %v752 = vpop.permute.xlu0 %751
  %v754 = vadd.f32 %v126, %v752
  %v755 = vtanh.pop %v754
  %v757 = vrot.slane %v755, 2
  %v759 = vsub.f32 %v661, %v757
  %v761 = vrot.slane %v759, 6
  %762 = vrot.lane.b32.xlu0 %v761, 112
  %v763 = vpop.permute.xlu0 %762
  %v765 = vmul.f32 %v744, %v763
  %767 = vrot.lane.b32.xlu0 %v765, 16
  %v768 = vpop.permute.xlu0 %767
  %v770 = vadd.f32 %v755, %v768
  %772 = vrot.lane.b32.xlu0 %v770, 96
  %v773 = vpop.permute.xlu0 %772
  %v774 = vsel %vm223, %v773, 0
  %776 = vmatprep.subr.mxu0 0.0
  %777 = vmatpush1.msra.mxu0 %v22
  %778 = vmatprep.subr.mxu0 0.0
  %779 = vmatpush1.msra.mxu0 %v23
  %780 = vmatprep.subr.mxu0 0.0
  %781 = vmatpush1.msra.mxu0 0.0
  %782 = vmatprep.subr.mxu0 0.0
  %783 = vmatpush1.msra.mxu0 0.0
  %784 = vmatprep.subr.mxu0 0.0
  %785 = vmatpush1.msra.mxu0 0.0
  %786 = vmatprep.subr.mxu0 0.0
  %787 = vmatpush1.msra.mxu0 0.0
  %788 = vmatprep.subr.mxu0 0.0
  %789 = vmatpush1.msra.mxu0 0.0
  %790 = vmatprep.subr.mxu0 0.0
  %791 = vmatpush1.msra.mxu0 0.0
  %792 = vmatprep.subr.mxu0 0.0
  %793 = vmatpush1.msra.mxu0 0.0
  %794 = vmatprep.subr.mxu0 0.0
  %795 = vmatpush1.msra.mxu0 0.0
  %796 = vmatprep.subr.mxu0 0.0
  %797 = vmatpush1.msra.mxu0 0.0
  %798 = vmatprep.subr.mxu0 0.0
  %799 = vmatpush1.msra.mxu0 0.0
  %800 = vmatprep.subr.mxu0 0.0
  %801 = vmatpush1.msra.mxu0 0.0
  %802 = vmatprep.subr.mxu0 0.0
  %803 = vmatpush1.msra.mxu0 0.0
  %804 = vmatprep.subr.mxu0 0.0
  %805 = vmatpush1.msra.mxu0 0.0
  %806 = vmatprep.subr.mxu0 0.0
  %807 = vmatpush1.msra.mxu0 0.0
  %808 = vmatprep.subr.mxu0 0.0
  %809 = vmatpush1.msra.mxu0 0.0
  %810 = vmatprep.subr.mxu0 0.0
  %811 = vmatpush1.msra.mxu0 0.0
  %812 = vmatprep.subr.mxu0 0.0
  %813 = vmatpush1.msra.mxu0 0.0
  %814 = vmatprep.subr.mxu0 0.0
  %815 = vmatpush1.msra.mxu0 0.0
  %816 = vmatprep.subr.mxu0 0.0
  %817 = vmatpush1.msra.mxu0 0.0
  %818 = vmatprep.subr.mxu0 0.0
  %819 = vmatpush1.msra.mxu0 0.0
  %820 = vmatprep.subr.mxu0 0.0
  %821 = vmatpush1.msra.mxu0 0.0
  %822 = vmatprep.subr.mxu0 0.0
  %823 = vmatpush1.msra.mxu0 0.0
  %824 = vmatprep.subr.mxu0 0.0
  %825 = vmatpush1.msra.mxu0 0.0
  %826 = vmatprep.subr.mxu0 0.0
  %827 = vmatpush1.msra.mxu0 0.0
  %828 = vmatprep.subr.mxu0 0.0
  %829 = vmatpush1.msra.mxu0 0.0
  %830 = vmatprep.subr.mxu0 0.0
  %831 = vmatpush1.msra.mxu0 0.0
  %832 = vmatprep.subr.mxu0 0.0
  %833 = vmatpush1.msra.mxu0 0.0
  %834 = vmatprep.subr.mxu0 0.0
  %835 = vmatpush1.msra.mxu0 0.0
  %836 = vmatprep.subr.mxu0 0.0
  %837 = vmatpush1.msra.mxu0 0.0
  %838 = vmatprep.subr.mxu0 0.0
  %839 = vmatpush1.msra.mxu0 0.0
  %840 = vmatprep.mubr.f32.mxu0 0.0
  %841 = vmatmul.mubr.f32.gmra.mrb[0].mxu0 %v774
  %v842 = vpop.f32.mrb[0].mxu0
  %v843 = vadd.f32 %v30, %v842
  %v844 = vpop.f32.mrb[0].mxu0
  %845 = vdwg.mxu0
  %v847 = vrot.slane %v843, 6
  %v849 = vadd.f32 %v126, %v847
  %v850 = vxor.u32 %v849, 2147483648
  %v851 = vmul.f32 %v850, 1.442695
  %v852 = vpow.pop %v851
  %v853 = vadd.f32 %v852, 1.0
  %v854 = vrcp.pop %v853
  %v855 = vmul.f32 1.0, %v854
  %856 = vrot.lane.b32.xlu0 %v847, 96
  %v857 = vpop.permute.xlu0 %856
  %v859 = vmul.f32 %v855, %v857
  %861 = vrot.lane.b32.xlu0 %v859, 32
  %v862 = vpop.permute.xlu0 %861
  %v864 = vadd.f32 %v126, %v862
  %v865 = vtanh.pop %v864
  %v867 = vrot.slane %v865, 2
  %v869 = vsub.f32 %v770, %v867
  %v871 = vrot.slane %v869, 6
  %872 = vrot.lane.b32.xlu0 %v871, 112
  %v873 = vpop.permute.xlu0 %872
  %v875 = vmul.f32 %v855, %v873
  %877 = vrot.lane.b32.xlu0 %v875, 16
  %v878 = vpop.permute.xlu0 %877
  %v880 = vadd.f32 %v865, %v878
  %v882 = vrot.slane %v880, 2
  %883 = vrot.lane.b32.xlu0 %v882, 96
  %v884 = vpop.permute.xlu0 %883
  %v885 = vsel %vm223, %v884, 0
  %887 = vmatprep.subr.mxu0 0.0
  %888 = vmatpush1.msra.mxu0 %v22
  %889 = vmatprep.subr.mxu0 0.0
  %890 = vmatpush1.msra.mxu0 %v23
  %891 = vmatprep.subr.mxu0 0.0
  %892 = vmatpush1.msra.mxu0 0.0
  %893 = vmatprep.subr.mxu0 0.0
  %894 = vmatpush1.msra.mxu0 0.0
  %895 = vmatprep.subr.mxu0 0.0
  %896 = vmatpush1.msra.mxu0 0.0
  %897 = vmatprep.subr.mxu0 0.0
  %898 = vmatpush1.msra.mxu0 0.0
  %899 = vmatprep.subr.mxu0 0.0
  %900 = vmatpush1.msra.mxu0 0.0
  %901 = vmatprep.subr.mxu0 0.0
  %902 = vmatpush1.msra.mxu0 0.0
  %903 = vmatprep.subr.mxu0 0.0
  %904 = vmatpush1.msra.mxu0 0.0
  %905 = vmatprep.subr.mxu0 0.0
  %906 = vmatpush1.msra.mxu0 0.0
  %907 = vmatprep.subr.mxu0 0.0
  %908 = vmatpush1.msra.mxu0 0.0
  %909 = vmatprep.subr.mxu0 0.0
  %910 = vmatpush1.msra.mxu0 0.0
  %911 = vmatprep.subr.mxu0 0.0
  %912 = vmatpush1.msra.mxu0 0.0
  %913 = vmatprep.subr.mxu0 0.0
  %914 = vmatpush1.msra.mxu0 0.0
  %915 = vmatprep.subr.mxu0 0.0
  %916 = vmatpush1.msra.mxu0 0.0
  %917 = vmatprep.subr.mxu0 0.0
  %918 = vmatpush1.msra.mxu0 0.0
  %919 = vmatprep.subr.mxu0 0.0
  %920 = vmatpush1.msra.mxu0 0.0
  %921 = vmatprep.subr.mxu0 0.0
  %922 = vmatpush1.msra.mxu0 0.0
  %923 = vmatprep.subr.mxu0 0.0
  %924 = vmatpush1.msra.mxu0 0.0
  %925 = vmatprep.subr.mxu0 0.0
  %926 = vmatpush1.msra.mxu0 0.0
  %927 = vmatprep.subr.mxu0 0.0
  %928 = vmatpush1.msra.mxu0 0.0
  %929 = vmatprep.subr.mxu0 0.0
  %930 = vmatpush1.msra.mxu0 0.0
  %931 = vmatprep.subr.mxu0 0.0
  %932 = vmatpush1.msra.mxu0 0.0
  %933 = vmatprep.subr.mxu0 0.0
  %934 = vmatpush1.msra.mxu0 0.0
  %935 = vmatprep.subr.mxu0 0.0
  %936 = vmatpush1.msra.mxu0 0.0
  %937 = vmatprep.subr.mxu0 0.0
  %938 = vmatpush1.msra.mxu0 0.0
  %939 = vmatprep.subr.mxu0 0.0
  %940 = vmatpush1.msra.mxu0 0.0
  %941 = vmatprep.subr.mxu0 0.0
  %942 = vmatpush1.msra.mxu0 0.0
  %943 = vmatprep.subr.mxu0 0.0
  %944 = vmatpush1.msra.mxu0 0.0
  %945 = vmatprep.subr.mxu0 0.0
  %946 = vmatpush1.msra.mxu0 0.0
  %947 = vmatprep.subr.mxu0 0.0
  %948 = vmatpush1.msra.mxu0 0.0
  %949 = vmatprep.subr.mxu0 0.0
  %950 = vmatpush1.msra.mxu0 0.0
  %951 = vmatprep.mubr.f32.mxu0 0.0
  %952 = vmatmul.mubr.f32.gmra.mrb[0].mxu0 %v885
  %v953 = vpop.f32.mrb[0].mxu0
  %v954 = vadd.f32 %v30, %v953
  %v955 = vpop.f32.mrb[0].mxu0
  %956 = vdwg.mxu0
  %v958 = vrot.slane %v954, 4
  %v960 = vadd.f32 %v126, %v958
  %v961 = vxor.u32 %v960, 2147483648
  %v962 = vmul.f32 %v961, 1.442695
  %v963 = vpow.pop %v962
  %v964 = vadd.f32 %v963, 1.0
  %v965 = vrcp.pop %v964
  %v966 = vmul.f32 1.0, %v965
  %967 = vrot.lane.b32.xlu0 %v958, 96
  %v968 = vpop.permute.xlu0 %967
  %v970 = vmul.f32 %v966, %v968
  %972 = vrot.lane.b32.xlu0 %v970, 32
  %v973 = vpop.permute.xlu0 %972
  %v975 = vadd.f32 %v126, %v973
  %v976 = vtanh.pop %v975
  %v978 = vrot.slane %v976, 2
  %v980 = vsub.f32 %v880, %v978
  %v982 = vrot.slane %v980, 6
  %983 = vrot.lane.b32.xlu0 %v982, 112
  %v984 = vpop.permute.xlu0 %983
  %v986 = vmul.f32 %v966, %v984
  %988 = vrot.lane.b32.xlu0 %v986, 16
  %v989 = vpop.permute.xlu0 %988
  %v991 = vadd.f32 %v976, %v989
  %v993 = vrot.slane %v991, 4
  %994 = vrot.lane.b32.xlu0 %v993, 96
  %v995 = vpop.permute.xlu0 %994
  %v996 = vsel %vm223, %v995, 0
  %998 = vmatprep.subr.mxu0 0.0
  %999 = vmatpush1.msra.mxu0 %v22
  %1000 = vmatprep.subr.mxu0 0.0
  %1001 = vmatpush1.msra.mxu0 %v23
  %1002 = vmatprep.subr.mxu0 0.0
  %1003 = vmatpush1.msra.mxu0 0.0
  %1004 = vmatprep.subr.mxu0 0.0
  %1005 = vmatpush1.msra.mxu0 0.0
  %1006 = vmatprep.subr.mxu0 0.0
  %1007 = vmatpush1.msra.mxu0 0.0
  %1008 = vmatprep.subr.mxu0 0.0
  %1009 = vmatpush1.msra.mxu0 0.0
  %1010 = vmatprep.subr.mxu0 0.0
  %1011 = vmatpush1.msra.mxu0 0.0
  %1012 = vmatprep.subr.mxu0 0.0
  %1013 = vmatpush1.msra.mxu0 0.0
  %1014 = vmatprep.subr.mxu0 0.0
  %1015 = vmatpush1.msra.mxu0 0.0
  %1016 = vmatprep.subr.mxu0 0.0
  %1017 = vmatpush1.msra.mxu0 0.0
  %1018 = vmatprep.subr.mxu0 0.0
  %1019 = vmatpush1.msra.mxu0 0.0
  %1020 = vmatprep.subr.mxu0 0.0
  %1021 = vmatpush1.msra.mxu0 0.0
  %1022 = vmatprep.subr.mxu0 0.0
  %1023 = vmatpush1.msra.mxu0 0.0
  %1024 = vmatprep.subr.mxu0 0.0
  %1025 = vmatpush1.msra.mxu0 0.0
  %1026 = vmatprep.subr.mxu0 0.0
  %1027 = vmatpush1.msra.mxu0 0.0
  %1028 = vmatprep.subr.mxu0 0.0
  %1029 = vmatpush1.msra.mxu0 0.0
  %1030 = vmatprep.subr.mxu0 0.0
  %1031 = vmatpush1.msra.mxu0 0.0
  %1032 = vmatprep.subr.mxu0 0.0
  %1033 = vmatpush1.msra.mxu0 0.0
  %1034 = vmatprep.subr.mxu0 0.0
  %1035 = vmatpush1.msra.mxu0 0.0
  %1036 = vmatprep.subr.mxu0 0.0
  %1037 = vmatpush1.msra.mxu0 0.0
  %1038 = vmatprep.subr.mxu0 0.0
  %1039 = vmatpush1.msra.mxu0 0.0
  %1040 = vmatprep.subr.mxu0 0.0
  %1041 = vmatpush1.msra.mxu0 0.0
  %1042 = vmatprep.subr.mxu0 0.0
  %1043 = vmatpush1.msra.mxu0 0.0
  %1044 = vmatprep.subr.mxu0 0.0
  %1045 = vmatpush1.msra.mxu0 0.0
  %1046 = vmatprep.subr.mxu0 0.0
  %1047 = vmatpush1.msra.mxu0 0.0
  %1048 = vmatprep.subr.mxu0 0.0
  %1049 = vmatpush1.msra.mxu0 0.0
  %1050 = vmatprep.subr.mxu0 0.0
  %1051 = vmatpush1.msra.mxu0 0.0
  %1052 = vmatprep.subr.mxu0 0.0
  %1053 = vmatpush1.msra.mxu0 0.0
  %1054 = vmatprep.subr.mxu0 0.0
  %1055 = vmatpush1.msra.mxu0 0.0
  %1056 = vmatprep.subr.mxu0 0.0
  %1057 = vmatpush1.msra.mxu0 0.0
  %1058 = vmatprep.subr.mxu0 0.0
  %1059 = vmatpush1.msra.mxu0 0.0
  %1060 = vmatprep.subr.mxu0 0.0
  %1061 = vmatpush1.msra.mxu0 0.0
  %1062 = vmatprep.mubr.f32.mxu0 0.0
  %1063 = vmatmul.mubr.f32.gmra.mrb[0].mxu0 %v996
  %v1064 = vpop.f32.mrb[0].mxu0
  %v1065 = vadd.f32 %v30, %v1064
  %v1066 = vpop.f32.mrb[0].mxu0
  %1067 = vdwg.mxu0
  %v1069 = vrot.slane %v1065, 2
  %v1071 = vadd.f32 %v126, %v1069
  %v1072 = vxor.u32 %v1071, 2147483648
  %v1073 = vmul.f32 %v1072, 1.442695
  %v1074 = vpow.pop %v1073
  %v1075 = vadd.f32 %v1074, 1.0
  %v1076 = vrcp.pop %v1075
  %v1077 = vmul.f32 1.0, %v1076
  %1078 = vrot.lane.b32.xlu0 %v1069, 96
  %v1079 = vpop.permute.xlu0 %1078
  %v1081 = vmul.f32 %v1077, %v1079
  %1083 = vrot.lane.b32.xlu0 %v1081, 32
  %v1084 = vpop.permute.xlu0 %1083
  %v1086 = vadd.f32 %v126, %v1084
  %v1087 = vtanh.pop %v1086
  %v1089 = vrot.slane %v1087, 2
  %v1091 = vsub.f32 %v991, %v1089
  %v1093 = vrot.slane %v1091, 6
  %1094 = vrot.lane.b32.xlu0 %v1093, 112
  %v1095 = vpop.permute.xlu0 %1094
  %v1097 = vmul.f32 %v1077, %v1095
  %1099 = vrot.lane.b32.xlu0 %v1097, 16
  %v1100 = vpop.permute.xlu0 %1099
  %v1102 = vadd.f32 %v1087, %v1100
  %v1103 = vld [vmem:[%s4 + $0x4] sm:$0x1]
  %v1104 = vlaneseq
  %v1105 = vshrl.u32 %v1104, 7
  %v1106 = vsub.s32 0, %v1105
  %v1107 = vrot.slane %v1103, %v1106
  %v1109 = vrot.slane %v1102, 6
  %1110 = vrot.lane.b32.xlu0 %v1109, 96
  %v1111 = vpop.permute.xlu0 %1110
  %v1112 = vsel %vm223, %v1111, 0
  %1114 = vmatprep.subr.mxu0 0.0
  %1115 = vmatpush1.msra.mxu0 %v24
  %1116 = vmatprep.subr.mxu0 0.0
  %1117 = vmatpush1.msra.mxu0 %v25
  %1118 = vmatprep.subr.mxu0 0.0
  %1119 = vmatpush1.msra.mxu0 0.0
  %1120 = vmatprep.subr.mxu0 0.0
  %1121 = vmatpush1.msra.mxu0 0.0
  %1122 = vmatprep.subr.mxu0 0.0
  %1123 = vmatpush1.msra.mxu0 0.0
  %1124 = vmatprep.subr.mxu0 0.0
  %1125 = vmatpush1.msra.mxu0 0.0
  %1126 = vmatprep.subr.mxu0 0.0
  %1127 = vmatpush1.msra.mxu0 0.0
  %1128 = vmatprep.subr.mxu0 0.0
  %1129 = vmatpush1.msra.mxu0 0.0
  %1130 = vmatprep.subr.mxu0 0.0
  %1131 = vmatpush1.msra.mxu0 0.0
  %1132 = vmatprep.subr.mxu0 0.0
  %1133 = vmatpush1.msra.mxu0 0.0
  %1134 = vmatprep.subr.mxu0 0.0
  %1135 = vmatpush1.msra.mxu0 0.0
  %1136 = vmatprep.subr.mxu0 0.0
  %1137 = vmatpush1.msra.mxu0 0.0
  %1138 = vmatprep.subr.mxu0 0.0
  %1139 = vmatpush1.msra.mxu0 0.0
  %1140 = vmatprep.subr.mxu0 0.0
  %1141 = vmatpush1.msra.mxu0 0.0
  %1142 = vmatprep.subr.mxu0 0.0
  %1143 = vmatpush1.msra.mxu0 0.0
  %1144 = vmatprep.subr.mxu0 0.0
  %1145 = vmatpush1.msra.mxu0 0.0
  %1146 = vmatprep.subr.mxu0 0.0
  %1147 = vmatpush1.msra.mxu0 0.0
  %1148 = vmatprep.subr.mxu0 0.0
  %1149 = vmatpush1.msra.mxu0 0.0
  %1150 = vmatprep.subr.mxu0 0.0
  %1151 = vmatpush1.msra.mxu0 0.0
  %1152 = vmatprep.subr.mxu0 0.0
  %1153 = vmatpush1.msra.mxu0 0.0
  %1154 = vmatprep.subr.mxu0 0.0
  %1155 = vmatpush1.msra.mxu0 0.0
  %1156 = vmatprep.subr.mxu0 0.0
  %1157 = vmatpush1.msra.mxu0 0.0
  %1158 = vmatprep.subr.mxu0 0.0
  %1159 = vmatpush1.msra.mxu0 0.0
  %1160 = vmatprep.subr.mxu0 0.0
  %1161 = vmatpush1.msra.mxu0 0.0
  %1162 = vmatprep.subr.mxu0 0.0
  %1163 = vmatpush1.msra.mxu0 0.0
  %1164 = vmatprep.subr.mxu0 0.0
  %1165 = vmatpush1.msra.mxu0 0.0
  %1166 = vmatprep.subr.mxu0 0.0
  %1167 = vmatpush1.msra.mxu0 0.0
  %1168 = vmatprep.subr.mxu0 0.0
  %1169 = vmatpush1.msra.mxu0 0.0
  %1170 = vmatprep.subr.mxu0 0.0
  %1171 = vmatpush1.msra.mxu0 0.0
  %1172 = vmatprep.subr.mxu0 0.0
  %1173 = vmatpush1.msra.mxu0 0.0
  %1174 = vmatprep.subr.mxu0 0.0
  %1175 = vmatpush1.msra.mxu0 0.0
  %1176 = vmatprep.subr.mxu0 0.0
  %1177 = vmatpush1.msra.mxu0 0.0
  %1178 = vmatprep.mubr.f32.mxu0 0.0
  %1179 = vmatmul.mubr.f32.gmra.mrb[0].mxu0 %v1112
  %v1180 = vpop.f32.mrb[0].mxu0
  %v1181 = vadd.f32 %v35, %v1180
  %v1182 = vpop.f32.mrb[0].mxu0
  %1183 = vdwg.mxu0
  %v1184 = vadd.f32 %v214, %v1181
  %v1185 = vxor.u32 %v1184, 2147483648
  %v1186 = vmul.f32 %v1185, 1.442695
  %v1187 = vpow.pop %v1186
  %v1188 = vadd.f32 %v1187, 1.0
  %v1189 = vrcp.pop %v1188
  %v1190 = vmul.f32 1.0, %v1189
  %1192 = vrot.lane.b32.xlu0 %v1181, 96
  %v1193 = vpop.permute.xlu0 %1192
  %v1195 = vmul.f32 %v1190, %v1193
  %1197 = vrot.lane.b32.xlu0 %v1195, 32
  %v1198 = vpop.permute.xlu0 %1197
  %v1200 = vadd.f32 %v214, %v1198
  %v1201 = vtanh.pop %v1200
  %v1203 = vrot.slane %v1201, 2
  %v1205 = vsub.f32 %v1102, %v1203
  %v1207 = vrot.slane %v1205, 6
  %1208 = vrot.lane.b32.xlu0 %v1207, 112
  %v1209 = vpop.permute.xlu0 %1208
  %v1211 = vmul.f32 %v1190, %v1209
  %1213 = vrot.lane.b32.xlu0 %v1211, 16
  %v1214 = vpop.permute.xlu0 %1213
  %v1216 = vadd.f32 %v1201, %v1214
  %v1217 = vld [vmem:[%s3 + $0x30] sm:$0xff]
  %v1218 = vld [vmem:[%s3 + $0x38] sm:$0xff]
  %v1219 = vmax.f32 %v1216, 0.0
  %1221 = vrot.lane.b32.xlu0 %v1219, 96
  %v1222 = vpop.permute.xlu0 %1221
  %v1223 = vsel %vm223, %v1222, 0
  %1225 = vmatprep.subr.mxu0 0.0
  %1226 = vmatpush1.msra.mxu0 %v1217
  %1227 = vmatprep.subr.mxu0 0.0
  %1228 = vmatpush1.msra.mxu0 %v1218
  %1229 = vmatprep.subr.mxu0 0.0
  %1230 = vmatpush1.msra.mxu0 0.0
  %1231 = vmatprep.subr.mxu0 0.0
  %1232 = vmatpush1.msra.mxu0 0.0
  %1233 = vmatprep.subr.mxu0 0.0
  %1234 = vmatpush1.msra.mxu0 0.0
  %1235 = vmatprep.subr.mxu0 0.0
  %1236 = vmatpush1.msra.mxu0 0.0
  %1237 = vmatprep.subr.mxu0 0.0
  %1238 = vmatpush1.msra.mxu0 0.0
  %1239 = vmatprep.subr.mxu0 0.0
  %1240 = vmatpush1.msra.mxu0 0.0
  %1241 = vmatprep.subr.mxu0 0.0
  %1242 = vmatpush1.msra.mxu0 0.0
  %1243 = vmatprep.subr.mxu0 0.0
  %1244 = vmatpush1.msra.mxu0 0.0
  %1245 = vmatprep.subr.mxu0 0.0
  %1246 = vmatpush1.msra.mxu0 0.0
  %1247 = vmatprep.subr.mxu0 0.0
  %1248 = vmatpush1.msra.mxu0 0.0
  %1249 = vmatprep.subr.mxu0 0.0
  %1250 = vmatpush1.msra.mxu0 0.0
  %1251 = vmatprep.subr.mxu0 0.0
  %1252 = vmatpush1.msra.mxu0 0.0
  %1253 = vmatprep.subr.mxu0 0.0
  %1254 = vmatpush1.msra.mxu0 0.0
  %1255 = vmatprep.subr.mxu0 0.0
  %1256 = vmatpush1.msra.mxu0 0.0
  %1257 = vmatprep.subr.mxu0 0.0
  %1258 = vmatpush1.msra.mxu0 0.0
  %1259 = vmatprep.subr.mxu0 0.0
  %1260 = vmatpush1.msra.mxu0 0.0
  %1261 = vmatprep.subr.mxu0 0.0
  %1262 = vmatpush1.msra.mxu0 0.0
  %1263 = vmatprep.subr.mxu0 0.0
  %1264 = vmatpush1.msra.mxu0 0.0
  %1265 = vmatprep.subr.mxu0 0.0
  %1266 = vmatpush1.msra.mxu0 0.0
  %1267 = vmatprep.subr.mxu0 0.0
  %1268 = vmatpush1.msra.mxu0 0.0
  %1269 = vmatprep.subr.mxu0 0.0
  %1270 = vmatpush1.msra.mxu0 0.0
  %1271 = vmatprep.subr.mxu0 0.0
  %1272 = vmatpush1.msra.mxu0 0.0
  %1273 = vmatprep.subr.mxu0 0.0
  %1274 = vmatpush1.msra.mxu0 0.0
  %1275 = vmatprep.subr.mxu0 0.0
  %1276 = vmatpush1.msra.mxu0 0.0
  %1277 = vmatprep.subr.mxu0 0.0
  %1278 = vmatpush1.msra.mxu0 0.0
  %1279 = vmatprep.subr.mxu0 0.0
  %1280 = vmatpush1.msra.mxu0 0.0
  %1281 = vmatprep.subr.mxu0 0.0
  %1282 = vmatpush1.msra.mxu0 0.0
  %1283 = vmatprep.subr.mxu0 0.0
  %1284 = vmatpush1.msra.mxu0 0.0
  %1285 = vmatprep.subr.mxu0 0.0
  %1286 = vmatpush1.msra.mxu0 0.0
  %1287 = vmatprep.subr.mxu0 0.0
  %1288 = vmatpush1.msra.mxu0 0.0
  %1289 = vmatprep.mubr.f32.mxu0 0.0
  %1290 = vmatmul.mubr.f32.gmra.mrb[0].mxu0 %v1223
  %v1291 = vpop.f32.mrb[0].mxu0
  %v1292 = vadd.f32 0.0, %v1291
  %v1293 = vpop.f32.mrb[0].mxu0
  %1294 = vdwg.mxu0
  %v1295 = vadd.f32 %v1107, %v1292
  %1297 = vrot.lane.b32.xlu0 %v1216, 96
  %v1298 = vpop.permute.xlu0 %1297
  %v1299 = vsel %vm223, %v1298, 0
  %1301 = vmatprep.subr.mxu0 0.0
  %1302 = vmatpush1.msra.mxu0 %v24
  %1303 = vmatprep.subr.mxu0 0.0
  %1304 = vmatpush1.msra.mxu0 %v25
  %1305 = vmatprep.subr.mxu0 0.0
  %1306 = vmatpush1.msra.mxu0 0.0
  %1307 = vmatprep.subr.mxu0 0.0
  %1308 = vmatpush1.msra.mxu0 0.0
  %1309 = vmatprep.subr.mxu0 0.0
  %1310 = vmatpush1.msra.mxu0 0.0
  %1311 = vmatprep.subr.mxu0 0.0
  %1312 = vmatpush1.msra.mxu0 0.0
  %1313 = vmatprep.subr.mxu0 0.0
  %1314 = vmatpush1.msra.mxu0 0.0
  %1315 = vmatprep.subr.mxu0 0.0
  %1316 = vmatpush1.msra.mxu0 0.0
  %1317 = vmatprep.subr.mxu0 0.0
  %1318 = vmatpush1.msra.mxu0 0.0
  %1319 = vmatprep.subr.mxu0 0.0
  %1320 = vmatpush1.msra.mxu0 0.0
  %1321 = vmatprep.subr.mxu0 0.0
  %1322 = vmatpush1.msra.mxu0 0.0
  %1323 = vmatprep.subr.mxu0 0.0
  %1324 = vmatpush1.msra.mxu0 0.0
  %1325 = vmatprep.subr.mxu0 0.0
  %1326 = vmatpush1.msra.mxu0 0.0
  %1327 = vmatprep.subr.mxu0 0.0
  %1328 = vmatpush1.msra.mxu0 0.0
  %1329 = vmatprep.subr.mxu0 0.0
  %1330 = vmatpush1.msra.mxu0 0.0
  %1331 = vmatprep.subr.mxu0 0.0
  %1332 = vmatpush1.msra.mxu0 0.0
  %1333 = vmatprep.subr.mxu0 0.0
  %1334 = vmatpush1.msra.mxu0 0.0
  %1335 = vmatprep.subr.mxu0 0.0
  %1336 = vmatpush1.msra.mxu0 0.0
  %1337 = vmatprep.subr.mxu0 0.0
  %1338 = vmatpush1.msra.mxu0 0.0
  %1339 = vmatprep.subr.mxu0 0.0
  %1340 = vmatpush1.msra.mxu0 0.0
  %1341 = vmatprep.subr.mxu0 0.0
  %1342 = vmatpush1.msra.mxu0 0.0
  %1343 = vmatprep.subr.mxu0 0.0
  %1344 = vmatpush1.msra.mxu0 0.0
  %1345 = vmatprep.subr.mxu0 0.0
  %1346 = vmatpush1.msra.mxu0 0.0
  %1347 = vmatprep.subr.mxu0 0.0
  %1348 = vmatpush1.msra.mxu0 0.0
  %1349 = vmatprep.subr.mxu0 0.0
  %1350 = vmatpush1.msra.mxu0 0.0
  %1351 = vmatprep.subr.mxu0 0.0
  %1352 = vmatpush1.msra.mxu0 0.0
  %1353 = vmatprep.subr.mxu0 0.0
  %1354 = vmatpush1.msra.mxu0 0.0
  %1355 = vmatprep.subr.mxu0 0.0
  %1356 = vmatpush1.msra.mxu0 0.0
  %1357 = vmatprep.subr.mxu0 0.0
  %1358 = vmatpush1.msra.mxu0 0.0
  %1359 = vmatprep.subr.mxu0 0.0
  %1360 = vmatpush1.msra.mxu0 0.0
  %1361 = vmatprep.subr.mxu0 0.0
  %1362 = vmatpush1.msra.mxu0 0.0
  %1363 = vmatprep.subr.mxu0 0.0
  %1364 = vmatpush1.msra.mxu0 0.0
  %1365 = vmatprep.mubr.f32.mxu0 0.0
  %1366 = vmatmul.mubr.f32.gmra.mrb[0].mxu0 %v1299
  %v1367 = vpop.f32.mrb[0].mxu0
  %v1368 = vadd.f32 %v35, %v1367
  %v1369 = vpop.f32.mrb[0].mxu0
  %1370 = vdwg.mxu0
  %v1372 = vrot.slane %v1368, 6
  %v1374 = vadd.f32 %v214, %v1372
  %v1375 = vxor.u32 %v1374, 2147483648
  %v1376 = vmul.f32 %v1375, 1.442695
  %v1377 = vpow.pop %v1376
  %v1378 = vadd.f32 %v1377, 1.0
  %v1379 = vrcp.pop %v1378
  %v1380 = vmul.f32 1.0, %v1379
  %1381 = vrot.lane.b32.xlu0 %v1372, 96
  %v1382 = vpop.permute.xlu0 %1381
  %v1384 = vmul.f32 %v1380, %v1382
  %1386 = vrot.lane.b32.xlu0 %v1384, 32
  %v1387 = vpop.permute.xlu0 %1386
  %v1389 = vadd.f32 %v214, %v1387
  %v1390 = vtanh.pop %v1389
  %v1392 = vrot.slane %v1390, 2
  %v1394 = vsub.f32 %v1216, %v1392
  %v1396 = vrot.slane %v1394, 6
  %1397 = vrot.lane.b32.xlu0 %v1396, 112
  %v1398 = vpop.permute.xlu0 %1397
  %v1400 = vmul.f32 %v1380, %v1398
  %1402 = vrot.lane.b32.xlu0 %v1400, 16
  %v1403 = vpop.permute.xlu0 %1402
  %v1405 = vadd.f32 %v1390, %v1403
  %v1406 = vld [vmem:[%s3 + $0x40] sm:$0xff]
  %v1407 = vld [vmem:[%s3 + $0x48] sm:$0xff]
  %v1408 = vmax.f32 %v1405, 0.0
  %v1410 = vrot.slane %v1408, 2
  %1411 = vrot.lane.b32.xlu0 %v1410, 96
  %v1412 = vpop.permute.xlu0 %1411
  %v1413 = vsel %vm223, %v1412, 0
  %1415 = vmatprep.subr.mxu0 0.0
  %1416 = vmatpush1.msra.mxu0 %v1406
  %1417 = vmatprep.subr.mxu0 0.0
  %1418 = vmatpush1.msra.mxu0 %v1407
  %1419 = vmatprep.subr.mxu0 0.0
  %1420 = vmatpush1.msra.mxu0 0.0
  %1421 = vmatprep.subr.mxu0 0.0
  %1422 = vmatpush1.msra.mxu0 0.0
  %1423 = vmatprep.subr.mxu0 0.0
  %1424 = vmatpush1.msra.mxu0 0.0
  %1425 = vmatprep.subr.mxu0 0.0
  %1426 = vmatpush1.msra.mxu0 0.0
  %1427 = vmatprep.subr.mxu0 0.0
  %1428 = vmatpush1.msra.mxu0 0.0
  %1429 = vmatprep.subr.mxu0 0.0
  %1430 = vmatpush1.msra.mxu0 0.0
  %1431 = vmatprep.subr.mxu0 0.0
  %1432 = vmatpush1.msra.mxu0 0.0
  %1433 = vmatprep.subr.mxu0 0.0
  %1434 = vmatpush1.msra.mxu0 0.0
  %1435 = vmatprep.subr.mxu0 0.0
  %1436 = vmatpush1.msra.mxu0 0.0
  %1437 = vmatprep.subr.mxu0 0.0
  %1438 = vmatpush1.msra.mxu0 0.0
  %1439 = vmatprep.subr.mxu0 0.0
  %1440 = vmatpush1.msra.mxu0 0.0
  %1441 = vmatprep.subr.mxu0 0.0
  %1442 = vmatpush1.msra.mxu0 0.0
  %1443 = vmatprep.subr.mxu0 0.0
  %1444 = vmatpush1.msra.mxu0 0.0
  %1445 = vmatprep.subr.mxu0 0.0
  %1446 = vmatpush1.msra.mxu0 0.0
  %1447 = vmatprep.subr.mxu0 0.0
  %1448 = vmatpush1.msra.mxu0 0.0
  %1449 = vmatprep.subr.mxu0 0.0
  %1450 = vmatpush1.msra.mxu0 0.0
  %1451 = vmatprep.subr.mxu0 0.0
  %1452 = vmatpush1.msra.mxu0 0.0
  %1453 = vmatprep.subr.mxu0 0.0
  %1454 = vmatpush1.msra.mxu0 0.0
  %1455 = vmatprep.subr.mxu0 0.0
  %1456 = vmatpush1.msra.mxu0 0.0
  %1457 = vmatprep.subr.mxu0 0.0
  %1458 = vmatpush1.msra.mxu0 0.0
  %1459 = vmatprep.subr.mxu0 0.0
  %1460 = vmatpush1.msra.mxu0 0.0
  %1461 = vmatprep.subr.mxu0 0.0
  %1462 = vmatpush1.msra.mxu0 0.0
  %1463 = vmatprep.subr.mxu0 0.0
  %1464 = vmatpush1.msra.mxu0 0.0
  %1465 = vmatprep.subr.mxu0 0.0
  %1466 = vmatpush1.msra.mxu0 0.0
  %1467 = vmatprep.subr.mxu0 0.0
  %1468 = vmatpush1.msra.mxu0 0.0
  %1469 = vmatprep.subr.mxu0 0.0
  %1470 = vmatpush1.msra.mxu0 0.0
  %1471 = vmatprep.subr.mxu0 0.0
  %1472 = vmatpush1.msra.mxu0 0.0
  %1473 = vmatprep.subr.mxu0 0.0
  %1474 = vmatpush1.msra.mxu0 0.0
  %1475 = vmatprep.subr.mxu0 0.0
  %1476 = vmatpush1.msra.mxu0 0.0
  %1477 = vmatprep.subr.mxu0 0.0
  %1478 = vmatpush1.msra.mxu0 0.0
  %1479 = vmatprep.mubr.f32.mxu0 0.0
  %1480 = vmatmul.mubr.f32.gmra.mrb[0].mxu0 %v1413
  %v1481 = vpop.f32.mrb[0].mxu0
  %v1482 = vadd.f32 0.0, %v1481
  %v1483 = vpop.f32.mrb[0].mxu0
  %1484 = vdwg.mxu0
  %v1485 = vadd.f32 %v1295, %v1482
  %v1487 = vrot.slane %v1405, 2
  %1488 = vrot.lane.b32.xlu0 %v1487, 96
  %v1489 = vpop.permute.xlu0 %1488
  %v1490 = vsel %vm223, %v1489, 0
  %1492 = vmatprep.subr.mxu0 0.0
  %1493 = vmatpush1.msra.mxu0 %v24
  %1494 = vmatprep.subr.mxu0 0.0
  %1495 = vmatpush1.msra.mxu0 %v25
  %1496 = vmatprep.subr.mxu0 0.0
  %1497 = vmatpush1.msra.mxu0 0.0
  %1498 = vmatprep.subr.mxu0 0.0
  %1499 = vmatpush1.msra.mxu0 0.0
  %1500 = vmatprep.subr.mxu0 0.0
  %1501 = vmatpush1.msra.mxu0 0.0
  %1502 = vmatprep.subr.mxu0 0.0
  %1503 = vmatpush1.msra.mxu0 0.0
  %1504 = vmatprep.subr.mxu0 0.0
  %1505 = vmatpush1.msra.mxu0 0.0
  %1506 = vmatprep.subr.mxu0 0.0
  %1507 = vmatpush1.msra.mxu0 0.0
  %1508 = vmatprep.subr.mxu0 0.0
  %1509 = vmatpush1.msra.mxu0 0.0
  %1510 = vmatprep.subr.mxu0 0.0
  %1511 = vmatpush1.msra.mxu0 0.0
  %1512 = vmatprep.subr.mxu0 0.0
  %1513 = vmatpush1.msra.mxu0 0.0
  %1514 = vmatprep.subr.mxu0 0.0
  %1515 = vmatpush1.msra.mxu0 0.0
  %1516 = vmatprep.subr.mxu0 0.0
  %1517 = vmatpush1.msra.mxu0 0.0
  %1518 = vmatprep.subr.mxu0 0.0
  %1519 = vmatpush1.msra.mxu0 0.0
  %1520 = vmatprep.subr.mxu0 0.0
  %1521 = vmatpush1.msra.mxu0 0.0
  %1522 = vmatprep.subr.mxu0 0.0
  %1523 = vmatpush1.msra.mxu0 0.0
  %1524 = vmatprep.subr.mxu0 0.0
  %1525 = vmatpush1.msra.mxu0 0.0
  %1526 = vmatprep.subr.mxu0 0.0
  %1527 = vmatpush1.msra.mxu0 0.0
  %1528 = vmatprep.subr.mxu0 0.0
  %1529 = vmatpush1.msra.mxu0 0.0
  %1530 = vmatprep.subr.mxu0 0.0
  %1531 = vmatpush1.msra.mxu0 0.0
  %1532 = vmatprep.subr.mxu0 0.0
  %1533 = vmatpush1.msra.mxu0 0.0
  %1534 = vmatprep.subr.mxu0 0.0
  %1535 = vmatpush1.msra.mxu0 0.0
  %1536 = vmatprep.subr.mxu0 0.0
  %1537 = vmatpush1.msra.mxu0 0.0
  %1538 = vmatprep.subr.mxu0 0.0
  %1539 = vmatpush1.msra.mxu0 0.0
  %1540 = vmatprep.subr.mxu0 0.0
  %1541 = vmatpush1.msra.mxu0 0.0
  %1542 = vmatprep.subr.mxu0 0.0
  %1543 = vmatpush1.msra.mxu0 0.0
  %1544 = vmatprep.subr.mxu0 0.0
  %1545 = vmatpush1.msra.mxu0 0.0
  %1546 = vmatprep.subr.mxu0 0.0
  %1547 = vmatpush1.msra.mxu0 0.0
  %1548 = vmatprep.subr.mxu0 0.0
  %1549 = vmatpush1.msra.mxu0 0.0
  %1550 = vmatprep.subr.mxu0 0.0
  %1551 = vmatpush1.msra.mxu0 0.0
  %1552 = vmatprep.subr.mxu0 0.0
  %1553 = vmatpush1.msra.mxu0 0.0
  %1554 = vmatprep.subr.mxu0 0.0
  %1555 = vmatpush1.msra.mxu0 0.0
  %1556 = vmatprep.mubr.f32.mxu0 0.0
  %1557 = vmatmul.mubr.f32.gmra.mrb[0].mxu0 %v1490
  %v1558 = vpop.f32.mrb[0].mxu0
  %v1559 = vadd.f32 %v35, %v1558
  %v1560 = vpop.f32.mrb[0].mxu0
  %1561 = vdwg.mxu0
  %v1563 = vrot.slane %v1559, 4
  %v1565 = vadd.f32 %v214, %v1563
  %v1566 = vxor.u32 %v1565, 2147483648
  %v1567 = vmul.f32 %v1566, 1.442695
  %v1568 = vpow.pop %v1567
  %v1569 = vadd.f32 %v1568, 1.0
  %v1570 = vrcp.pop %v1569
  %v1571 = vmul.f32 1.0, %v1570
  %1572 = vrot.lane.b32.xlu0 %v1563, 96
  %v1573 = vpop.permute.xlu0 %1572
  %v1575 = vmul.f32 %v1571, %v1573
  %1577 = vrot.lane.b32.xlu0 %v1575, 32
  %v1578 = vpop.permute.xlu0 %1577
  %v1580 = vadd.f32 %v214, %v1578
  %v1581 = vtanh.pop %v1580
  %v1583 = vrot.slane %v1581, 2
  %v1585 = vsub.f32 %v1405, %v1583
  %v1587 = vrot.slane %v1585, 6
  %1588 = vrot.lane.b32.xlu0 %v1587, 112
  %v1589 = vpop.permute.xlu0 %1588
  %v1591 = vmul.f32 %v1571, %v1589
  %1593 = vrot.lane.b32.xlu0 %v1591, 16
  %v1594 = vpop.permute.xlu0 %1593
  %v1596 = vadd.f32 %v1581, %v1594
  %v1597 = vld [vmem:[%s3 + $0x50] sm:$0xff]
  %v1598 = vld [vmem:[%s3 + $0x58] sm:$0xff]
  %v1599 = vmax.f32 %v1596, 0.0
  %v1601 = vrot.slane %v1599, 4
  %1602 = vrot.lane.b32.xlu0 %v1601, 96
  %v1603 = vpop.permute.xlu0 %1602
  %v1604 = vsel %vm223, %v1603, 0
  %1606 = vmatprep.subr.mxu0 0.0
  %1607 = vmatpush1.msra.mxu0 %v1597
  %1608 = vmatprep.subr.mxu0 0.0
  %1609 = vmatpush1.msra.mxu0 %v1598
  %1610 = vmatprep.subr.mxu0 0.0
  %1611 = vmatpush1.msra.mxu0 0.0
  %1612 = vmatprep.subr.mxu0 0.0
  %1613 = vmatpush1.msra.mxu0 0.0
  %1614 = vmatprep.subr.mxu0 0.0
  %1615 = vmatpush1.msra.mxu0 0.0
  %1616 = vmatprep.subr.mxu0 0.0
  %1617 = vmatpush1.msra.mxu0 0.0
  %1618 = vmatprep.subr.mxu0 0.0
  %1619 = vmatpush1.msra.mxu0 0.0
  %1620 = vmatprep.subr.mxu0 0.0
  %1621 = vmatpush1.msra.mxu0 0.0
  %1622 = vmatprep.subr.mxu0 0.0
  %1623 = vmatpush1.msra.mxu0 0.0
  %1624 = vmatprep.subr.mxu0 0.0
  %1625 = vmatpush1.msra.mxu0 0.0
  %1626 = vmatprep.subr.mxu0 0.0
  %1627 = vmatpush1.msra.mxu0 0.0
  %1628 = vmatprep.subr.mxu0 0.0
  %1629 = vmatpush1.msra.mxu0 0.0
  %1630 = vmatprep.subr.mxu0 0.0
  %1631 = vmatpush1.msra.mxu0 0.0
  %1632 = vmatprep.subr.mxu0 0.0
  %1633 = vmatpush1.msra.mxu0 0.0
  %1634 = vmatprep.subr.mxu0 0.0
  %1635 = vmatpush1.msra.mxu0 0.0
  %1636 = vmatprep.subr.mxu0 0.0
  %1637 = vmatpush1.msra.mxu0 0.0
  %1638 = vmatprep.subr.mxu0 0.0
  %1639 = vmatpush1.msra.mxu0 0.0
  %1640 = vmatprep.subr.mxu0 0.0
  %1641 = vmatpush1.msra.mxu0 0.0
  %1642 = vmatprep.subr.mxu0 0.0
  %1643 = vmatpush1.msra.mxu0 0.0
  %1644 = vmatprep.subr.mxu0 0.0
  %1645 = vmatpush1.msra.mxu0 0.0
  %1646 = vmatprep.subr.mxu0 0.0
  %1647 = vmatpush1.msra.mxu0 0.0
  %1648 = vmatprep.subr.mxu0 0.0
  %1649 = vmatpush1.msra.mxu0 0.0
  %1650 = vmatprep.subr.mxu0 0.0
  %1651 = vmatpush1.msra.mxu0 0.0
  %1652 = vmatprep.subr.mxu0 0.0
  %1653 = vmatpush1.msra.mxu0 0.0
  %1654 = vmatprep.subr.mxu0 0.0
  %1655 = vmatpush1.msra.mxu0 0.0
  %1656 = vmatprep.subr.mxu0 0.0
  %1657 = vmatpush1.msra.mxu0 0.0
  %1658 = vmatprep.subr.mxu0 0.0
  %1659 = vmatpush1.msra.mxu0 0.0
  %1660 = vmatprep.subr.mxu0 0.0
  %1661 = vmatpush1.msra.mxu0 0.0
  %1662 = vmatprep.subr.mxu0 0.0
  %1663 = vmatpush1.msra.mxu0 0.0
  %1664 = vmatprep.subr.mxu0 0.0
  %1665 = vmatpush1.msra.mxu0 0.0
  %1666 = vmatprep.subr.mxu0 0.0
  %1667 = vmatpush1.msra.mxu0 0.0
  %1668 = vmatprep.subr.mxu0 0.0
  %1669 = vmatpush1.msra.mxu0 0.0
  %1670 = vmatprep.mubr.f32.mxu0 0.0
  %1671 = vmatmul.mubr.f32.gmra.mrb[0].mxu0 %v1604
  %v1672 = vpop.f32.mrb[0].mxu0
  %v1673 = vadd.f32 0.0, %v1672
  %v1674 = vpop.f32.mrb[0].mxu0
  %1675 = vdwg.mxu0
  %v1676 = vadd.f32 %v1485, %v1673
  %v1678 = vrot.slane %v1596, 4
  %1679 = vrot.lane.b32.xlu0 %v1678, 96
  %v1680 = vpop.permute.xlu0 %1679
  %v1681 = vsel %vm223, %v1680, 0
  %1683 = vmatprep.subr.mxu0 0.0
  %1684 = vmatpush1.msra.mxu0 %v24
  %1685 = vmatprep.subr.mxu0 0.0
  %1686 = vmatpush1.msra.mxu0 %v25
  %1687 = vmatprep.subr.mxu0 0.0
  %1688 = vmatpush1.msra.mxu0 0.0
  %1689 = vmatprep.subr.mxu0 0.0
  %1690 = vmatpush1.msra.mxu0 0.0
  %1691 = vmatprep.subr.mxu0 0.0
  %1692 = vmatpush1.msra.mxu0 0.0
  %1693 = vmatprep.subr.mxu0 0.0
  %1694 = vmatpush1.msra.mxu0 0.0
  %1695 = vmatprep.subr.mxu0 0.0
  %1696 = vmatpush1.msra.mxu0 0.0
  %1697 = vmatprep.subr.mxu0 0.0
  %1698 = vmatpush1.msra.mxu0 0.0
  %1699 = vmatprep.subr.mxu0 0.0
  %1700 = vmatpush1.msra.mxu0 0.0
  %1701 = vmatprep.subr.mxu0 0.0
  %1702 = vmatpush1.msra.mxu0 0.0
  %1703 = vmatprep.subr.mxu0 0.0
  %1704 = vmatpush1.msra.mxu0 0.0
  %1705 = vmatprep.subr.mxu0 0.0
  %1706 = vmatpush1.msra.mxu0 0.0
  %1707 = vmatprep.subr.mxu0 0.0
  %1708 = vmatpush1.msra.mxu0 0.0
  %1709 = vmatprep.subr.mxu0 0.0
  %1710 = vmatpush1.msra.mxu0 0.0
  %1711 = vmatprep.subr.mxu0 0.0
  %1712 = vmatpush1.msra.mxu0 0.0
  %1713 = vmatprep.subr.mxu0 0.0
  %1714 = vmatpush1.msra.mxu0 0.0
  %1715 = vmatprep.subr.mxu0 0.0
  %1716 = vmatpush1.msra.mxu0 0.0
  %1717 = vmatprep.subr.mxu0 0.0
  %1718 = vmatpush1.msra.mxu0 0.0
  %1719 = vmatprep.subr.mxu0 0.0
  %1720 = vmatpush1.msra.mxu0 0.0
  %1721 = vmatprep.subr.mxu0 0.0
  %1722 = vmatpush1.msra.mxu0 0.0
  %1723 = vmatprep.subr.mxu0 0.0
  %1724 = vmatpush1.msra.mxu0 0.0
  %1725 = vmatprep.subr.mxu0 0.0
  %1726 = vmatpush1.msra.mxu0 0.0
  %1727 = vmatprep.subr.mxu0 0.0
  %1728 = vmatpush1.msra.mxu0 0.0
  %1729 = vmatprep.subr.mxu0 0.0
  %1730 = vmatpush1.msra.mxu0 0.0
  %1731 = vmatprep.subr.mxu0 0.0
  %1732 = vmatpush1.msra.mxu0 0.0
  %1733 = vmatprep.subr.mxu0 0.0
  %1734 = vmatpush1.msra.mxu0 0.0
  %1735 = vmatprep.subr.mxu0 0.0
  %1736 = vmatpush1.msra.mxu0 0.0
  %1737 = vmatprep.subr.mxu0 0.0
  %1738 = vmatpush1.msra.mxu0 0.0
  %1739 = vmatprep.subr.mxu0 0.0
  %1740 = vmatpush1.msra.mxu0 0.0
  %1741 = vmatprep.subr.mxu0 0.0
  %1742 = vmatpush1.msra.mxu0 0.0
  %1743 = vmatprep.subr.mxu0 0.0
  %1744 = vmatpush1.msra.mxu0 0.0
  %1745 = vmatprep.subr.mxu0 0.0
  %1746 = vmatpush1.msra.mxu0 0.0
  %1747 = vmatprep.mubr.f32.mxu0 0.0
  %1748 = vmatmul.mubr.f32.gmra.mrb[0].mxu0 %v1681
  %v1749 = vpop.f32.mrb[0].mxu0
  %v1750 = vadd.f32 %v35, %v1749
  %v1751 = vpop.f32.mrb[0].mxu0
  %1752 = vdwg.mxu0
  %v1754 = vrot.slane %v1750, 2
  %v1756 = vadd.f32 %v214, %v1754
  %v1757 = vxor.u32 %v1756, 2147483648
  %v1758 = vmul.f32 %v1757, 1.442695
  %v1759 = vpow.pop %v1758
  %v1760 = vadd.f32 %v1759, 1.0
  %v1761 = vrcp.pop %v1760
  %v1762 = vmul.f32 1.0, %v1761
  %1763 = vrot.lane.b32.xlu0 %v1754, 96
  %v1764 = vpop.permute.xlu0 %1763
  %v1766 = vmul.f32 %v1762, %v1764
  %1768 = vrot.lane.b32.xlu0 %v1766, 32
  %v1769 = vpop.permute.xlu0 %1768
  %v1771 = vadd.f32 %v214, %v1769
  %v1772 = vtanh.pop %v1771
  %v1774 = vrot.slane %v1772, 2
  %v1776 = vsub.f32 %v1596, %v1774
  %v1778 = vrot.slane %v1776, 6
  %1779 = vrot.lane.b32.xlu0 %v1778, 112
  %v1780 = vpop.permute.xlu0 %1779
  %v1782 = vmul.f32 %v1762, %v1780
  %1784 = vrot.lane.b32.xlu0 %v1782, 16
  %v1785 = vpop.permute.xlu0 %1784
  %v1787 = vadd.f32 %v1772, %v1785
  %v1788 = vld [vmem:[%s3 + $0x60] sm:$0xff]
  %v1789 = vld [vmem:[%s3 + $0x68] sm:$0xff]
  %v1790 = vmax.f32 %v1787, 0.0
  %v1792 = vrot.slane %v1790, 6
  %1793 = vrot.lane.b32.xlu0 %v1792, 96
  %v1794 = vpop.permute.xlu0 %1793
  %v1795 = vsel %vm223, %v1794, 0
  %1797 = vmatprep.subr.mxu0 0.0
  %1798 = vmatpush1.msra.mxu0 %v1788
  %1799 = vmatprep.subr.mxu0 0.0
  %1800 = vmatpush1.msra.mxu0 %v1789
  %1801 = vmatprep.subr.mxu0 0.0
  %1802 = vmatpush1.msra.mxu0 0.0
  %1803 = vmatprep.subr.mxu0 0.0
  %1804 = vmatpush1.msra.mxu0 0.0
  %1805 = vmatprep.subr.mxu0 0.0
  %1806 = vmatpush1.msra.mxu0 0.0
  %1807 = vmatprep.subr.mxu0 0.0
  %1808 = vmatpush1.msra.mxu0 0.0
  %1809 = vmatprep.subr.mxu0 0.0
  %1810 = vmatpush1.msra.mxu0 0.0
  %1811 = vmatprep.subr.mxu0 0.0
  %1812 = vmatpush1.msra.mxu0 0.0
  %1813 = vmatprep.subr.mxu0 0.0
  %1814 = vmatpush1.msra.mxu0 0.0
  %1815 = vmatprep.subr.mxu0 0.0
  %1816 = vmatpush1.msra.mxu0 0.0
  %1817 = vmatprep.subr.mxu0 0.0
  %1818 = vmatpush1.msra.mxu0 0.0
  %1819 = vmatprep.subr.mxu0 0.0
  %1820 = vmatpush1.msra.mxu0 0.0
  %1821 = vmatprep.subr.mxu0 0.0
  %1822 = vmatpush1.msra.mxu0 0.0
  %1823 = vmatprep.subr.mxu0 0.0
  %1824 = vmatpush1.msra.mxu0 0.0
  %1825 = vmatprep.subr.mxu0 0.0
  %1826 = vmatpush1.msra.mxu0 0.0
  %1827 = vmatprep.subr.mxu0 0.0
  %1828 = vmatpush1.msra.mxu0 0.0
  %1829 = vmatprep.subr.mxu0 0.0
  %1830 = vmatpush1.msra.mxu0 0.0
  %1831 = vmatprep.subr.mxu0 0.0
  %1832 = vmatpush1.msra.mxu0 0.0
  %1833 = vmatprep.subr.mxu0 0.0
  %1834 = vmatpush1.msra.mxu0 0.0
  %1835 = vmatprep.subr.mxu0 0.0
  %1836 = vmatpush1.msra.mxu0 0.0
  %1837 = vmatprep.subr.mxu0 0.0
  %1838 = vmatpush1.msra.mxu0 0.0
  %1839 = vmatprep.subr.mxu0 0.0
  %1840 = vmatpush1.msra.mxu0 0.0
  %1841 = vmatprep.subr.mxu0 0.0
  %1842 = vmatpush1.msra.mxu0 0.0
  %1843 = vmatprep.subr.mxu0 0.0
  %1844 = vmatpush1.msra.mxu0 0.0
  %1845 = vmatprep.subr.mxu0 0.0
  %1846 = vmatpush1.msra.mxu0 0.0
  %1847 = vmatprep.subr.mxu0 0.0
  %1848 = vmatpush1.msra.mxu0 0.0
  %1849 = vmatprep.subr.mxu0 0.0
  %1850 = vmatpush1.msra.mxu0 0.0
  %1851 = vmatprep.subr.mxu0 0.0
  %1852 = vmatpush1.msra.mxu0 0.0
  %1853 = vmatprep.subr.mxu0 0.0
  %1854 = vmatpush1.msra.mxu0 0.0
  %1855 = vmatprep.subr.mxu0 0.0
  %1856 = vmatpush1.msra.mxu0 0.0
  %1857 = vmatprep.subr.mxu0 0.0
  %1858 = vmatpush1.msra.mxu0 0.0
  %1859 = vmatprep.subr.mxu0 0.0
  %1860 = vmatpush1.msra.mxu0 0.0
  %1861 = vmatprep.mubr.f32.mxu0 0.0
  %1862 = vmatmul.mubr.f32.gmra.mrb[0].mxu0 %v1795
  %v1863 = vpop.f32.mrb[0].mxu0
  %v1864 = vadd.f32 0.0, %v1863
  %v1865 = vpop.f32.mrb[0].mxu0
  %1866 = vdwg.mxu0
  %v1867 = vadd.f32 %v1676, %v1864
  %v1869 = vrot.slane %v1787, 6
  %1870 = vrot.lane.b32.xlu0 %v1869, 96
  %v1871 = vpop.permute.xlu0 %1870
  %v1872 = vsel %vm223, %v1871, 0
  %1874 = vmatprep.subr.mxu0 0.0
  %1875 = vmatpush1.msra.mxu0 %v24
  %1876 = vmatprep.subr.mxu0 0.0
  %1877 = vmatpush1.msra.mxu0 %v25
  %1878 = vmatprep.subr.mxu0 0.0
  %1879 = vmatpush1.msra.mxu0 0.0
  %1880 = vmatprep.subr.mxu0 0.0
  %1881 = vmatpush1.msra.mxu0 0.0
  %1882 = vmatprep.subr.mxu0 0.0
  %1883 = vmatpush1.msra.mxu0 0.0
  %1884 = vmatprep.subr.mxu0 0.0
  %1885 = vmatpush1.msra.mxu0 0.0
  %1886 = vmatprep.subr.mxu0 0.0
  %1887 = vmatpush1.msra.mxu0 0.0
  %1888 = vmatprep.subr.mxu0 0.0
  %1889 = vmatpush1.msra.mxu0 0.0
  %1890 = vmatprep.subr.mxu0 0.0
  %1891 = vmatpush1.msra.mxu0 0.0
  %1892 = vmatprep.subr.mxu0 0.0
  %1893 = vmatpush1.msra.mxu0 0.0
  %1894 = vmatprep.subr.mxu0 0.0
  %1895 = vmatpush1.msra.mxu0 0.0
  %1896 = vmatprep.subr.mxu0 0.0
  %1897 = vmatpush1.msra.mxu0 0.0
  %1898 = vmatprep.subr.mxu0 0.0
  %1899 = vmatpush1.msra.mxu0 0.0
  %1900 = vmatprep.subr.mxu0 0.0
  %1901 = vmatpush1.msra.mxu0 0.0
  %1902 = vmatprep.subr.mxu0 0.0
  %1903 = vmatpush1.msra.mxu0 0.0
  %1904 = vmatprep.subr.mxu0 0.0
  %1905 = vmatpush1.msra.mxu0 0.0
  %1906 = vmatprep.subr.mxu0 0.0
  %1907 = vmatpush1.msra.mxu0 0.0
  %1908 = vmatprep.subr.mxu0 0.0
  %1909 = vmatpush1.msra.mxu0 0.0
  %1910 = vmatprep.subr.mxu0 0.0
  %1911 = vmatpush1.msra.mxu0 0.0
  %1912 = vmatprep.subr.mxu0 0.0
  %1913 = vmatpush1.msra.mxu0 0.0
  %1914 = vmatprep.subr.mxu0 0.0
  %1915 = vmatpush1.msra.mxu0 0.0
  %1916 = vmatprep.subr.mxu0 0.0
  %1917 = vmatpush1.msra.mxu0 0.0
  %1918 = vmatprep.subr.mxu0 0.0
  %1919 = vmatpush1.msra.mxu0 0.0
  %1920 = vmatprep.subr.mxu0 0.0
  %1921 = vmatpush1.msra.mxu0 0.0
  %1922 = vmatprep.subr.mxu0 0.0
  %1923 = vmatpush1.msra.mxu0 0.0
  %1924 = vmatprep.subr.mxu0 0.0
  %1925 = vmatpush1.msra.mxu0 0.0
  %1926 = vmatprep.subr.mxu0 0.0
  %1927 = vmatpush1.msra.mxu0 0.0
  %1928 = vmatprep.subr.mxu0 0.0
  %1929 = vmatpush1.msra.mxu0 0.0
  %1930 = vmatprep.subr.mxu0 0.0
  %1931 = vmatpush1.msra.mxu0 0.0
  %1932 = vmatprep.subr.mxu0 0.0
  %1933 = vmatpush1.msra.mxu0 0.0
  %1934 = vmatprep.subr.mxu0 0.0
  %1935 = vmatpush1.msra.mxu0 0.0
  %1936 = vmatprep.subr.mxu0 0.0
  %1937 = vmatpush1.msra.mxu0 0.0
  %1938 = vmatprep.mubr.f32.mxu0 0.0
  %1939 = vmatmul.mubr.f32.gmra.mrb[0].mxu0 %v1872
  %v1940 = vpop.f32.mrb[0].mxu0
  %v1941 = vadd.f32 %v35, %v1940
  %v1942 = vpop.f32.mrb[0].mxu0
  %1943 = vdwg.mxu0
  %v1944 = vadd.f32 %v219, %v1941
  %v1945 = vxor.u32 %v1944, 2147483648
  %v1946 = vmul.f32 %v1945, 1.442695
  %v1947 = vpow.pop %v1946
  %v1948 = vadd.f32 %v1947, 1.0
  %v1949 = vrcp.pop %v1948
  %v1950 = vmul.f32 1.0, %v1949
  %1952 = vrot.lane.b32.xlu0 %v1941, 96
  %v1953 = vpop.permute.xlu0 %1952
  %v1955 = vmul.f32 %v1950, %v1953
  %1957 = vrot.lane.b32.xlu0 %v1955, 32
  %v1958 = vpop.permute.xlu0 %1957
  %v1960 = vadd.f32 %v219, %v1958
  %v1961 = vtanh.pop %v1960
  %v1963 = vrot.slane %v1961, 2
  %v1965 = vsub.f32 %v1787, %v1963
  %v1967 = vrot.slane %v1965, 6
  %1968 = vrot.lane.b32.xlu0 %v1967, 112
  %v1969 = vpop.permute.xlu0 %1968
  %v1971 = vmul.f32 %v1950, %v1969
  %1973 = vrot.lane.b32.xlu0 %v1971, 16
  %v1974 = vpop.permute.xlu0 %1973
  %v1976 = vadd.f32 %v1961, %v1974
  %v1977 = vld [vmem:[%s3 + $0x70] sm:$0xff]
  %v1978 = vld [vmem:[%s3 + $0x78] sm:$0xff]
  %v1979 = vmax.f32 %v1976, 0.0
  %1981 = vrot.lane.b32.xlu0 %v1979, 96
  %v1982 = vpop.permute.xlu0 %1981
  %v1983 = vsel %vm223, %v1982, 0
  %1985 = vmatprep.subr.mxu0 0.0
  %1986 = vmatpush1.msra.mxu0 %v1977
  %1987 = vmatprep.subr.mxu0 0.0
  %1988 = vmatpush1.msra.mxu0 %v1978
  %1989 = vmatprep.subr.mxu0 0.0
  %1990 = vmatpush1.msra.mxu0 0.0
  %1991 = vmatprep.subr.mxu0 0.0
  %1992 = vmatpush1.msra.mxu0 0.0
  %1993 = vmatprep.subr.mxu0 0.0
  %1994 = vmatpush1.msra.mxu0 0.0
  %1995 = vmatprep.subr.mxu0 0.0
  %1996 = vmatpush1.msra.mxu0 0.0
  %1997 = vmatprep.subr.mxu0 0.0
  %1998 = vmatpush1.msra.mxu0 0.0
  %1999 = vmatprep.subr.mxu0 0.0
  %2000 = vmatpush1.msra.mxu0 0.0
  %2001 = vmatprep.subr.mxu0 0.0
  %2002 = vmatpush1.msra.mxu0 0.0
  %2003 = vmatprep.subr.mxu0 0.0
  %2004 = vmatpush1.msra.mxu0 0.0
  %2005 = vmatprep.subr.mxu0 0.0
  %2006 = vmatpush1.msra.mxu0 0.0
  %2007 = vmatprep.subr.mxu0 0.0
  %2008 = vmatpush1.msra.mxu0 0.0
  %2009 = vmatprep.subr.mxu0 0.0
  %2010 = vmatpush1.msra.mxu0 0.0
  %2011 = vmatprep.subr.mxu0 0.0
  %2012 = vmatpush1.msra.mxu0 0.0
  %2013 = vmatprep.subr.mxu0 0.0
  %2014 = vmatpush1.msra.mxu0 0.0
  %2015 = vmatprep.subr.mxu0 0.0
  %2016 = vmatpush1.msra.mxu0 0.0
  %2017 = vmatprep.subr.mxu0 0.0
  %2018 = vmatpush1.msra.mxu0 0.0
  %2019 = vmatprep.subr.mxu0 0.0
  %2020 = vmatpush1.msra.mxu0 0.0
  %2021 = vmatprep.subr.mxu0 0.0
  %2022 = vmatpush1.msra.mxu0 0.0
  %2023 = vmatprep.subr.mxu0 0.0
  %2024 = vmatpush1.msra.mxu0 0.0
  %2025 = vmatprep.subr.mxu0 0.0
  %2026 = vmatpush1.msra.mxu0 0.0
  %2027 = vmatprep.subr.mxu0 0.0
  %2028 = vmatpush1.msra.mxu0 0.0
  %2029 = vmatprep.subr.mxu0 0.0
  %2030 = vmatpush1.msra.mxu0 0.0
  %2031 = vmatprep.subr.mxu0 0.0
  %2032 = vmatpush1.msra.mxu0 0.0
  %2033 = vmatprep.subr.mxu0 0.0
  %2034 = vmatpush1.msra.mxu0 0.0
  %2035 = vmatprep.subr.mxu0 0.0
  %2036 = vmatpush1.msra.mxu0 0.0
  %2037 = vmatprep.subr.mxu0 0.0
  %2038 = vmatpush1.msra.mxu0 0.0
  %2039 = vmatprep.subr.mxu0 0.0
  %2040 = vmatpush1.msra.mxu0 0.0
  %2041 = vmatprep.subr.mxu0 0.0
  %2042 = vmatpush1.msra.mxu0 0.0
  %2043 = vmatprep.subr.mxu0 0.0
  %2044 = vmatpush1.msra.mxu0 0.0
  %2045 = vmatprep.subr.mxu0 0.0
  %2046 = vmatpush1.msra.mxu0 0.0
  %2047 = vmatprep.subr.mxu0 0.0
  %2048 = vmatpush1.msra.mxu0 0.0
  %2049 = vmatprep.mubr.f32.mxu0 0.0
  %2050 = vmatmul.mubr.f32.gmra.mrb[0].mxu0 %v1983
  %v2051 = vpop.f32.mrb[0].mxu0
  %v2052 = vadd.f32 0.0, %v2051
  %v2053 = vpop.f32.mrb[0].mxu0
  %2054 = vdwg.mxu0
  %v2055 = vadd.f32 %v1867, %v2052
  %2057 = vrot.lane.b32.xlu0 %v1976, 96
  %v2058 = vpop.permute.xlu0 %2057
  %v2059 = vsel %vm223, %v2058, 0
  %2061 = vmatprep.subr.mxu0 0.0
  %2062 = vmatpush1.msra.mxu0 %v24
  %2063 = vmatprep.subr.mxu0 0.0
  %2064 = vmatpush1.msra.mxu0 %v25
  %2065 = vmatprep.subr.mxu0 0.0
  %2066 = vmatpush1.msra.mxu0 0.0
  %2067 = vmatprep.subr.mxu0 0.0
  %2068 = vmatpush1.msra.mxu0 0.0
  %2069 = vmatprep.subr.mxu0 0.0
  %2070 = vmatpush1.msra.mxu0 0.0
  %2071 = vmatprep.subr.mxu0 0.0
  %2072 = vmatpush1.msra.mxu0 0.0
  %2073 = vmatprep.subr.mxu0 0.0
  %2074 = vmatpush1.msra.mxu0 0.0
  %2075 = vmatprep.subr.mxu0 0.0
  %2076 = vmatpush1.msra.mxu0 0.0
  %2077 = vmatprep.subr.mxu0 0.0
  %2078 = vmatpush1.msra.mxu0 0.0
  %2079 = vmatprep.subr.mxu0 0.0
  %2080 = vmatpush1.msra.mxu0 0.0
  %2081 = vmatprep.subr.mxu0 0.0
  %2082 = vmatpush1.msra.mxu0 0.0
  %2083 = vmatprep.subr.mxu0 0.0
  %2084 = vmatpush1.msra.mxu0 0.0
  %2085 = vmatprep.subr.mxu0 0.0
  %2086 = vmatpush1.msra.mxu0 0.0
  %2087 = vmatprep.subr.mxu0 0.0
  %2088 = vmatpush1.msra.mxu0 0.0
  %2089 = vmatprep.subr.mxu0 0.0
  %2090 = vmatpush1.msra.mxu0 0.0
  %2091 = vmatprep.subr.mxu0 0.0
  %2092 = vmatpush1.msra.mxu0 0.0
  %2093 = vmatprep.subr.mxu0 0.0
  %2094 = vmatpush1.msra.mxu0 0.0
  %2095 = vmatprep.subr.mxu0 0.0
  %2096 = vmatpush1.msra.mxu0 0.0
  %2097 = vmatprep.subr.mxu0 0.0
  %2098 = vmatpush1.msra.mxu0 0.0
  %2099 = vmatprep.subr.mxu0 0.0
  %2100 = vmatpush1.msra.mxu0 0.0
  %2101 = vmatprep.subr.mxu0 0.0
  %2102 = vmatpush1.msra.mxu0 0.0
  %2103 = vmatprep.subr.mxu0 0.0
  %2104 = vmatpush1.msra.mxu0 0.0
  %2105 = vmatprep.subr.mxu0 0.0
  %2106 = vmatpush1.msra.mxu0 0.0
  %2107 = vmatprep.subr.mxu0 0.0
  %2108 = vmatpush1.msra.mxu0 0.0
  %2109 = vmatprep.subr.mxu0 0.0
  %2110 = vmatpush1.msra.mxu0 0.0
  %2111 = vmatprep.subr.mxu0 0.0
  %2112 = vmatpush1.msra.mxu0 0.0
  %2113 = vmatprep.subr.mxu0 0.0
  %2114 = vmatpush1.msra.mxu0 0.0
  %2115 = vmatprep.subr.mxu0 0.0
  %2116 = vmatpush1.msra.mxu0 0.0
  %2117 = vmatprep.subr.mxu0 0.0
  %2118 = vmatpush1.msra.mxu0 0.0
  %2119 = vmatprep.subr.mxu0 0.0
  %2120 = vmatpush1.msra.mxu0 0.0
  %2121 = vmatprep.subr.mxu0 0.0
  %2122 = vmatpush1.msra.mxu0 0.0
  %2123 = vmatprep.subr.mxu0 0.0
  %2124 = vmatpush1.msra.mxu0 0.0
  %2125 = vmatprep.mubr.f32.mxu0 0.0
  %2126 = vmatmul.mubr.f32.gmra.mrb[0].mxu0 %v2059
  %v2127 = vpop.f32.mrb[0].mxu0
  %v2128 = vadd.f32 %v35, %v2127
  %v2129 = vpop.f32.mrb[0].mxu0
  %2130 = vdwg.mxu0
  %v2132 = vrot.slane %v2128, 6
  %v2134 = vadd.f32 %v219, %v2132
  %v2135 = vxor.u32 %v2134, 2147483648
  %v2136 = vmul.f32 %v2135, 1.442695
  %v2137 = vpow.pop %v2136
  %v2138 = vadd.f32 %v2137, 1.0
  %v2139 = vrcp.pop %v2138
  %v2140 = vmul.f32 1.0, %v2139
  %2141 = vrot.lane.b32.xlu0 %v2132, 96
  %v2142 = vpop.permute.xlu0 %2141
  %v2144 = vmul.f32 %v2140, %v2142
  %2146 = vrot.lane.b32.xlu0 %v2144, 32
  %v2147 = vpop.permute.xlu0 %2146
  %v2149 = vadd.f32 %v219, %v2147
  %v2150 = vtanh.pop %v2149
  %v2152 = vrot.slane %v2150, 2
  %v2154 = vsub.f32 %v1976, %v2152
  %v2156 = vrot.slane %v2154, 6
  %2157 = vrot.lane.b32.xlu0 %v2156, 112
  %v2158 = vpop.permute.xlu0 %2157
  %v2160 = vmul.f32 %v2140, %v2158
  %2162 = vrot.lane.b32.xlu0 %v2160, 16
  %v2163 = vpop.permute.xlu0 %2162
  %v2165 = vadd.f32 %v2150, %v2163
  %v2166 = vld [vmem:[%s3 + $0x80] sm:$0xff]
  %v2167 = vld [vmem:[%s3 + $0x88] sm:$0xff]
  %v2168 = vmax.f32 %v2165, 0.0
  %v2170 = vrot.slane %v2168, 2
  %2171 = vrot.lane.b32.xlu0 %v2170, 96
  %v2172 = vpop.permute.xlu0 %2171
  %v2173 = vsel %vm223, %v2172, 0
  %2175 = vmatprep.subr.mxu0 0.0
  %2176 = vmatpush1.msra.mxu0 %v2166
  %2177 = vmatprep.subr.mxu0 0.0
  %2178 = vmatpush1.msra.mxu0 %v2167
  %2179 = vmatprep.subr.mxu0 0.0
  %2180 = vmatpush1.msra.mxu0 0.0
  %2181 = vmatprep.subr.mxu0 0.0
  %2182 = vmatpush1.msra.mxu0 0.0
  %2183 = vmatprep.subr.mxu0 0.0
  %2184 = vmatpush1.msra.mxu0 0.0
  %2185 = vmatprep.subr.mxu0 0.0
  %2186 = vmatpush1.msra.mxu0 0.0
  %2187 = vmatprep.subr.mxu0 0.0
  %2188 = vmatpush1.msra.mxu0 0.0
  %2189 = vmatprep.subr.mxu0 0.0
  %2190 = vmatpush1.msra.mxu0 0.0
  %2191 = vmatprep.subr.mxu0 0.0
  %2192 = vmatpush1.msra.mxu0 0.0
  %2193 = vmatprep.subr.mxu0 0.0
  %2194 = vmatpush1.msra.mxu0 0.0
  %2195 = vmatprep.subr.mxu0 0.0
  %2196 = vmatpush1.msra.mxu0 0.0
  %2197 = vmatprep.subr.mxu0 0.0
  %2198 = vmatpush1.msra.mxu0 0.0
  %2199 = vmatprep.subr.mxu0 0.0
  %2200 = vmatpush1.msra.mxu0 0.0
  %2201 = vmatprep.subr.mxu0 0.0
  %2202 = vmatpush1.msra.mxu0 0.0
  %2203 = vmatprep.subr.mxu0 0.0
  %2204 = vmatpush1.msra.mxu0 0.0
  %2205 = vmatprep.subr.mxu0 0.0
  %2206 = vmatpush1.msra.mxu0 0.0
  %2207 = vmatprep.subr.mxu0 0.0
  %2208 = vmatpush1.msra.mxu0 0.0
  %2209 = vmatprep.subr.mxu0 0.0
  %2210 = vmatpush1.msra.mxu0 0.0
  %2211 = vmatprep.subr.mxu0 0.0
  %2212 = vmatpush1.msra.mxu0 0.0
  %2213 = vmatprep.subr.mxu0 0.0
  %2214 = vmatpush1.msra.mxu0 0.0
  %2215 = vmatprep.subr.mxu0 0.0
  %2216 = vmatpush1.msra.mxu0 0.0
  %2217 = vmatprep.subr.mxu0 0.0
  %2218 = vmatpush1.msra.mxu0 0.0
  %2219 = vmatprep.subr.mxu0 0.0
  %2220 = vmatpush1.msra.mxu0 0.0
  %2221 = vmatprep.subr.mxu0 0.0
  %2222 = vmatpush1.msra.mxu0 0.0
  %2223 = vmatprep.subr.mxu0 0.0
  %2224 = vmatpush1.msra.mxu0 0.0
  %2225 = vmatprep.subr.mxu0 0.0
  %2226 = vmatpush1.msra.mxu0 0.0
  %2227 = vmatprep.subr.mxu0 0.0
  %2228 = vmatpush1.msra.mxu0 0.0
  %2229 = vmatprep.subr.mxu0 0.0
  %2230 = vmatpush1.msra.mxu0 0.0
  %2231 = vmatprep.subr.mxu0 0.0
  %2232 = vmatpush1.msra.mxu0 0.0
  %2233 = vmatprep.subr.mxu0 0.0
  %2234 = vmatpush1.msra.mxu0 0.0
  %2235 = vmatprep.subr.mxu0 0.0
  %2236 = vmatpush1.msra.mxu0 0.0
  %2237 = vmatprep.subr.mxu0 0.0
  %2238 = vmatpush1.msra.mxu0 0.0
  %2239 = vmatprep.mubr.f32.mxu0 0.0
  %2240 = vmatmul.mubr.f32.gmra.mrb[0].mxu0 %v2173
  %v2241 = vpop.f32.mrb[0].mxu0
  %v2242 = vadd.f32 0.0, %v2241
  %v2243 = vpop.f32.mrb[0].mxu0
  %2244 = vdwg.mxu0
  %v2245 = vadd.f32 %v2055, %v2242
  %v2247 = vrot.slane %v2165, 2
  %2248 = vrot.lane.b32.xlu0 %v2247, 96
  %v2249 = vpop.permute.xlu0 %2248
  %v2250 = vsel %vm223, %v2249, 0
  %2252 = vmatprep.subr.mxu0 0.0
  %2253 = vmatpush1.msra.mxu0 %v24
  %2254 = vmatprep.subr.mxu0 0.0
  %2255 = vmatpush1.msra.mxu0 %v25
  %2256 = vmatprep.subr.mxu0 0.0
  %2257 = vmatpush1.msra.mxu0 0.0
  %2258 = vmatprep.subr.mxu0 0.0
  %2259 = vmatpush1.msra.mxu0 0.0
  %2260 = vmatprep.subr.mxu0 0.0
  %2261 = vmatpush1.msra.mxu0 0.0
  %2262 = vmatprep.subr.mxu0 0.0
  %2263 = vmatpush1.msra.mxu0 0.0
  %2264 = vmatprep.subr.mxu0 0.0
  %2265 = vmatpush1.msra.mxu0 0.0
  %2266 = vmatprep.subr.mxu0 0.0
  %2267 = vmatpush1.msra.mxu0 0.0
  %2268 = vmatprep.subr.mxu0 0.0
  %2269 = vmatpush1.msra.mxu0 0.0
  %2270 = vmatprep.subr.mxu0 0.0
  %2271 = vmatpush1.msra.mxu0 0.0
  %2272 = vmatprep.subr.mxu0 0.0
  %2273 = vmatpush1.msra.mxu0 0.0
  %2274 = vmatprep.subr.mxu0 0.0
  %2275 = vmatpush1.msra.mxu0 0.0
  %2276 = vmatprep.subr.mxu0 0.0
  %2277 = vmatpush1.msra.mxu0 0.0
  %2278 = vmatprep.subr.mxu0 0.0
  %2279 = vmatpush1.msra.mxu0 0.0
  %2280 = vmatprep.subr.mxu0 0.0
  %2281 = vmatpush1.msra.mxu0 0.0
  %2282 = vmatprep.subr.mxu0 0.0
  %2283 = vmatpush1.msra.mxu0 0.0
  %2284 = vmatprep.subr.mxu0 0.0
  %2285 = vmatpush1.msra.mxu0 0.0
  %2286 = vmatprep.subr.mxu0 0.0
  %2287 = vmatpush1.msra.mxu0 0.0
  %2288 = vmatprep.subr.mxu0 0.0
  %2289 = vmatpush1.msra.mxu0 0.0
  %2290 = vmatprep.subr.mxu0 0.0
  %2291 = vmatpush1.msra.mxu0 0.0
  %2292 = vmatprep.subr.mxu0 0.0
  %2293 = vmatpush1.msra.mxu0 0.0
  %2294 = vmatprep.subr.mxu0 0.0
  %2295 = vmatpush1.msra.mxu0 0.0
  %2296 = vmatprep.subr.mxu0 0.0
  %2297 = vmatpush1.msra.mxu0 0.0
  %2298 = vmatprep.subr.mxu0 0.0
  %2299 = vmatpush1.msra.mxu0 0.0
  %2300 = vmatprep.subr.mxu0 0.0
  %2301 = vmatpush1.msra.mxu0 0.0
  %2302 = vmatprep.subr.mxu0 0.0
  %2303 = vmatpush1.msra.mxu0 0.0
  %2304 = vmatprep.subr.mxu0 0.0
  %2305 = vmatpush1.msra.mxu0 0.0
  %2306 = vmatprep.subr.mxu0 0.0
  %2307 = vmatpush1.msra.mxu0 0.0
  %2308 = vmatprep.subr.mxu0 0.0
  %2309 = vmatpush1.msra.mxu0 0.0
  %2310 = vmatprep.subr.mxu0 0.0
  %2311 = vmatpush1.msra.mxu0 0.0
  %2312 = vmatprep.subr.mxu0 0.0
  %2313 = vmatpush1.msra.mxu0 0.0
  %2314 = vmatprep.subr.mxu0 0.0
  %2315 = vmatpush1.msra.mxu0 0.0
  %2316 = vmatprep.mubr.f32.mxu0 0.0
  %2317 = vmatmul.mubr.f32.gmra.mrb[0].mxu0 %v2250
  %v2318 = vpop.f32.mrb[0].mxu0
  %v2319 = vadd.f32 %v35, %v2318
  %v2320 = vpop.f32.mrb[0].mxu0
  %2321 = vdwg.mxu0
  %v2323 = vrot.slane %v2319, 4
  %v2325 = vadd.f32 %v219, %v2323
  %v2326 = vxor.u32 %v2325, 2147483648
  %v2327 = vmul.f32 %v2326, 1.442695
  %v2328 = vpow.pop %v2327
  %v2329 = vadd.f32 %v2328, 1.0
  %v2330 = vrcp.pop %v2329
  %v2331 = vmul.f32 1.0, %v2330
  %2332 = vrot.lane.b32.xlu0 %v2323, 96
  %v2333 = vpop.permute.xlu0 %2332
  %v2335 = vmul.f32 %v2331, %v2333
  %2337 = vrot.lane.b32.xlu0 %v2335, 32
  %v2338 = vpop.permute.xlu0 %2337
  %v2340 = vadd.f32 %v219, %v2338
  %v2341 = vtanh.pop %v2340
  %v2343 = vrot.slane %v2341, 2
  %v2345 = vsub.f32 %v2165, %v2343
  %v2347 = vrot.slane %v2345, 6
  %2348 = vrot.lane.b32.xlu0 %v2347, 112
  %v2349 = vpop.permute.xlu0 %2348
  %v2351 = vmul.f32 %v2331, %v2349
  %2353 = vrot.lane.b32.xlu0 %v2351, 16
  %v2354 = vpop.permute.xlu0 %2353
  %v2356 = vadd.f32 %v2341, %v2354
  %v2357 = vld [vmem:[%s3 + $0x90] sm:$0xff]
  %v2358 = vld [vmem:[%s3 + $0x98] sm:$0xff]
  %v2359 = vmax.f32 %v2356, 0.0
  %v2361 = vrot.slane %v2359, 4
  %2362 = vrot.lane.b32.xlu0 %v2361, 96
  %v2363 = vpop.permute.xlu0 %2362
  %v2364 = vsel %vm223, %v2363, 0
  %2366 = vmatprep.subr.mxu0 0.0
  %2367 = vmatpush1.msra.mxu0 %v2357
  %2368 = vmatprep.subr.mxu0 0.0
  %2369 = vmatpush1.msra.mxu0 %v2358
  %2370 = vmatprep.subr.mxu0 0.0
  %2371 = vmatpush1.msra.mxu0 0.0
  %2372 = vmatprep.subr.mxu0 0.0
  %2373 = vmatpush1.msra.mxu0 0.0
  %2374 = vmatprep.subr.mxu0 0.0
  %2375 = vmatpush1.msra.mxu0 0.0
  %2376 = vmatprep.subr.mxu0 0.0
  %2377 = vmatpush1.msra.mxu0 0.0
  %2378 = vmatprep.subr.mxu0 0.0
  %2379 = vmatpush1.msra.mxu0 0.0
  %2380 = vmatprep.subr.mxu0 0.0
  %2381 = vmatpush1.msra.mxu0 0.0
  %2382 = vmatprep.subr.mxu0 0.0
  %2383 = vmatpush1.msra.mxu0 0.0
  %2384 = vmatprep.subr.mxu0 0.0
  %2385 = vmatpush1.msra.mxu0 0.0
  %2386 = vmatprep.subr.mxu0 0.0
  %2387 = vmatpush1.msra.mxu0 0.0
  %2388 = vmatprep.subr.mxu0 0.0
  %2389 = vmatpush1.msra.mxu0 0.0
  %2390 = vmatprep.subr.mxu0 0.0
  %2391 = vmatpush1.msra.mxu0 0.0
  %2392 = vmatprep.subr.mxu0 0.0
  %2393 = vmatpush1.msra.mxu0 0.0
  %2394 = vmatprep.subr.mxu0 0.0
  %2395 = vmatpush1.msra.mxu0 0.0
  %2396 = vmatprep.subr.mxu0 0.0
  %2397 = vmatpush1.msra.mxu0 0.0
  %2398 = vmatprep.subr.mxu0 0.0
  %2399 = vmatpush1.msra.mxu0 0.0
  %2400 = vmatprep.subr.mxu0 0.0
  %2401 = vmatpush1.msra.mxu0 0.0
  %2402 = vmatprep.subr.mxu0 0.0
  %2403 = vmatpush1.msra.mxu0 0.0
  %2404 = vmatprep.subr.mxu0 0.0
  %2405 = vmatpush1.msra.mxu0 0.0
  %2406 = vmatprep.subr.mxu0 0.0
  %2407 = vmatpush1.msra.mxu0 0.0
  %2408 = vmatprep.subr.mxu0 0.0
  %2409 = vmatpush1.msra.mxu0 0.0
  %2410 = vmatprep.subr.mxu0 0.0
  %2411 = vmatpush1.msra.mxu0 0.0
  %2412 = vmatprep.subr.mxu0 0.0
  %2413 = vmatpush1.msra.mxu0 0.0
  %2414 = vmatprep.subr.mxu0 0.0
  %2415 = vmatpush1.msra.mxu0 0.0
  %2416 = vmatprep.subr.mxu0 0.0
  %2417 = vmatpush1.msra.mxu0 0.0
  %2418 = vmatprep.subr.mxu0 0.0
  %2419 = vmatpush1.msra.mxu0 0.0
  %2420 = vmatprep.subr.mxu0 0.0
  %2421 = vmatpush1.msra.mxu0 0.0
  %2422 = vmatprep.subr.mxu0 0.0
  %2423 = vmatpush1.msra.mxu0 0.0
  %2424 = vmatprep.subr.mxu0 0.0
  %2425 = vmatpush1.msra.mxu0 0.0
  %2426 = vmatprep.subr.mxu0 0.0
  %2427 = vmatpush1.msra.mxu0 0.0
  %2428 = vmatprep.subr.mxu0 0.0
  %2429 = vmatpush1.msra.mxu0 0.0
  %2430 = vmatprep.mubr.f32.mxu0 0.0
  %2431 = vmatmul.mubr.f32.gmra.mrb[0].mxu0 %v2364
  %v2432 = vpop.f32.mrb[0].mxu0
  %v2433 = vadd.f32 0.0, %v2432
  %v2434 = vpop.f32.mrb[0].mxu0
  %2435 = vdwg.mxu0
  %v2436 = vadd.f32 %v2245, %v2433
  %v2438 = vrot.slane %v2356, 4
  %2439 = vrot.lane.b32.xlu0 %v2438, 96
  %v2440 = vpop.permute.xlu0 %2439
  %v2441 = vsel %vm223, %v2440, 0
  %2443 = vmatprep.subr.mxu0 0.0
  %2444 = vmatpush1.msra.mxu0 %v24
  %2445 = vmatprep.subr.mxu0 0.0
  %2446 = vmatpush1.msra.mxu0 %v25
  %2447 = vmatprep.subr.mxu0 0.0
  %2448 = vmatpush1.msra.mxu0 0.0
  %2449 = vmatprep.subr.mxu0 0.0
  %2450 = vmatpush1.msra.mxu0 0.0
  %2451 = vmatprep.subr.mxu0 0.0
  %2452 = vmatpush1.msra.mxu0 0.0
  %2453 = vmatprep.subr.mxu0 0.0
  %2454 = vmatpush1.msra.mxu0 0.0
  %2455 = vmatprep.subr.mxu0 0.0
  %2456 = vmatpush1.msra.mxu0 0.0
  %2457 = vmatprep.subr.mxu0 0.0
  %2458 = vmatpush1.msra.mxu0 0.0
  %2459 = vmatprep.subr.mxu0 0.0
  %2460 = vmatpush1.msra.mxu0 0.0
  %2461 = vmatprep.subr.mxu0 0.0
  %2462 = vmatpush1.msra.mxu0 0.0
  %2463 = vmatprep.subr.mxu0 0.0
  %2464 = vmatpush1.msra.mxu0 0.0
  %2465 = vmatprep.subr.mxu0 0.0
  %2466 = vmatpush1.msra.mxu0 0.0
  %2467 = vmatprep.subr.mxu0 0.0
  %2468 = vmatpush1.msra.mxu0 0.0
  %2469 = vmatprep.subr.mxu0 0.0
  %2470 = vmatpush1.msra.mxu0 0.0
  %2471 = vmatprep.subr.mxu0 0.0
  %2472 = vmatpush1.msra.mxu0 0.0
  %2473 = vmatprep.subr.mxu0 0.0
  %2474 = vmatpush1.msra.mxu0 0.0
  %2475 = vmatprep.subr.mxu0 0.0
  %2476 = vmatpush1.msra.mxu0 0.0
  %2477 = vmatprep.subr.mxu0 0.0
  %2478 = vmatpush1.msra.mxu0 0.0
  %2479 = vmatprep.subr.mxu0 0.0
  %2480 = vmatpush1.msra.mxu0 0.0
  %2481 = vmatprep.subr.mxu0 0.0
  %2482 = vmatpush1.msra.mxu0 0.0
  %2483 = vmatprep.subr.mxu0 0.0
  %2484 = vmatpush1.msra.mxu0 0.0
  %2485 = vmatprep.subr.mxu0 0.0
  %2486 = vmatpush1.msra.mxu0 0.0
  %2487 = vmatprep.subr.mxu0 0.0
  %2488 = vmatpush1.msra.mxu0 0.0
  %2489 = vmatprep.subr.mxu0 0.0
  %2490 = vmatpush1.msra.mxu0 0.0
  %2491 = vmatprep.subr.mxu0 0.0
  %2492 = vmatpush1.msra.mxu0 0.0
  %2493 = vmatprep.subr.mxu0 0.0
  %2494 = vmatpush1.msra.mxu0 0.0
  %2495 = vmatprep.subr.mxu0 0.0
  %2496 = vmatpush1.msra.mxu0 0.0
  %2497 = vmatprep.subr.mxu0 0.0
  %2498 = vmatpush1.msra.mxu0 0.0
  %2499 = vmatprep.subr.mxu0 0.0
  %2500 = vmatpush1.msra.mxu0 0.0
  %2501 = vmatprep.subr.mxu0 0.0
  %2502 = vmatpush1.msra.mxu0 0.0
  %2503 = vmatprep.subr.mxu0 0.0
  %2504 = vmatpush1.msra.mxu0 0.0
  %2505 = vmatprep.subr.mxu0 0.0
  %2506 = vmatpush1.msra.mxu0 0.0
  %2507 = vmatprep.mubr.f32.mxu0 0.0
  %2508 = vmatmul.mubr.f32.gmra.mrb[0].mxu0 %v2441
  %v2509 = vpop.f32.mrb[0].mxu0
  %v2510 = vadd.f32 %v35, %v2509
  %v2511 = vpop.f32.mrb[0].mxu0
  %2512 = vdwg.mxu0
  %v2514 = vrot.slane %v2510, 2
  %v2516 = vadd.f32 %v219, %v2514
  %v2517 = vxor.u32 %v2516, 2147483648
  %v2518 = vmul.f32 %v2517, 1.442695
  %v2519 = vpow.pop %v2518
  %v2520 = vadd.f32 %v2519, 1.0
  %v2521 = vrcp.pop %v2520
  %v2522 = vmul.f32 1.0, %v2521
  %2523 = vrot.lane.b32.xlu0 %v2514, 96
  %v2524 = vpop.permute.xlu0 %2523
  %v2526 = vmul.f32 %v2522, %v2524
  %2528 = vrot.lane.b32.xlu0 %v2526, 32
  %v2529 = vpop.permute.xlu0 %2528
  %v2531 = vadd.f32 %v219, %v2529
  %v2532 = vtanh.pop %v2531
  %v2534 = vrot.slane %v2532, 2
  %v2536 = vsub.f32 %v2356, %v2534
  %v2538 = vrot.slane %v2536, 6
  %2539 = vrot.lane.b32.xlu0 %v2538, 112
  %v2540 = vpop.permute.xlu0 %2539
  %v2542 = vmul.f32 %v2522, %v2540
  %2544 = vrot.lane.b32.xlu0 %v2542, 16
  %v2545 = vpop.permute.xlu0 %2544
  %v2547 = vadd.f32 %v2532, %v2545
  %v2548 = vld [vmem:[%s3 + $0xa0] sm:$0xff]
  %v2549 = vld [vmem:[%s3 + $0xa8] sm:$0xff]
  %v2550 = vmax.f32 %v2547, 0.0
  %v2552 = vrot.slane %v2550, 6
  %2553 = vrot.lane.b32.xlu0 %v2552, 96
  %v2554 = vpop.permute.xlu0 %2553
  %v2555 = vsel %vm223, %v2554, 0
  %2557 = vmatprep.subr.mxu0 0.0
  %2558 = vmatpush1.msra.mxu0 %v2548
  %2559 = vmatprep.subr.mxu0 0.0
  %2560 = vmatpush1.msra.mxu0 %v2549
  %2561 = vmatprep.subr.mxu0 0.0
  %2562 = vmatpush1.msra.mxu0 0.0
  %2563 = vmatprep.subr.mxu0 0.0
  %2564 = vmatpush1.msra.mxu0 0.0
  %2565 = vmatprep.subr.mxu0 0.0
  %2566 = vmatpush1.msra.mxu0 0.0
  %2567 = vmatprep.subr.mxu0 0.0
  %2568 = vmatpush1.msra.mxu0 0.0
  %2569 = vmatprep.subr.mxu0 0.0
  %2570 = vmatpush1.msra.mxu0 0.0
  %2571 = vmatprep.subr.mxu0 0.0
  %2572 = vmatpush1.msra.mxu0 0.0
  %2573 = vmatprep.subr.mxu0 0.0
  %2574 = vmatpush1.msra.mxu0 0.0
  %2575 = vmatprep.subr.mxu0 0.0
  %2576 = vmatpush1.msra.mxu0 0.0
  %2577 = vmatprep.subr.mxu0 0.0
  %2578 = vmatpush1.msra.mxu0 0.0
  %2579 = vmatprep.subr.mxu0 0.0
  %2580 = vmatpush1.msra.mxu0 0.0
  %2581 = vmatprep.subr.mxu0 0.0
  %2582 = vmatpush1.msra.mxu0 0.0
  %2583 = vmatprep.subr.mxu0 0.0
  %2584 = vmatpush1.msra.mxu0 0.0
  %2585 = vmatprep.subr.mxu0 0.0
  %2586 = vmatpush1.msra.mxu0 0.0
  %2587 = vmatprep.subr.mxu0 0.0
  %2588 = vmatpush1.msra.mxu0 0.0
  %2589 = vmatprep.subr.mxu0 0.0
  %2590 = vmatpush1.msra.mxu0 0.0
  %2591 = vmatprep.subr.mxu0 0.0
  %2592 = vmatpush1.msra.mxu0 0.0
  %2593 = vmatprep.subr.mxu0 0.0
  %2594 = vmatpush1.msra.mxu0 0.0
  %2595 = vmatprep.subr.mxu0 0.0
  %2596 = vmatpush1.msra.mxu0 0.0
  %2597 = vmatprep.subr.mxu0 0.0
  %2598 = vmatpush1.msra.mxu0 0.0
  %2599 = vmatprep.subr.mxu0 0.0
  %2600 = vmatpush1.msra.mxu0 0.0
  %2601 = vmatprep.subr.mxu0 0.0
  %2602 = vmatpush1.msra.mxu0 0.0
  %2603 = vmatprep.subr.mxu0 0.0
  %2604 = vmatpush1.msra.mxu0 0.0
  %2605 = vmatprep.subr.mxu0 0.0
  %2606 = vmatpush1.msra.mxu0 0.0
  %2607 = vmatprep.subr.mxu0 0.0
  %2608 = vmatpush1.msra.mxu0 0.0
  %2609 = vmatprep.subr.mxu0 0.0
  %2610 = vmatpush1.msra.mxu0 0.0
  %2611 = vmatprep.subr.mxu0 0.0
  %2612 = vmatpush1.msra.mxu0 0.0
  %2613 = vmatprep.subr.mxu0 0.0
  %2614 = vmatpush1.msra.mxu0 0.0
  %2615 = vmatprep.subr.mxu0 0.0
  %2616 = vmatpush1.msra.mxu0 0.0
  %2617 = vmatprep.subr.mxu0 0.0
  %2618 = vmatpush1.msra.mxu0 0.0
  %2619 = vmatprep.subr.mxu0 0.0
  %2620 = vmatpush1.msra.mxu0 0.0
  %2621 = vmatprep.mubr.f32.mxu0 0.0
  %2622 = vmatmul.mubr.f32.gmra.mrb[0].mxu0 %v2555
  %v2623 = vpop.f32.mrb[0].mxu0
  %v2624 = vadd.f32 0.0, %v2623
  %v2625 = vpop.f32.mrb[0].mxu0
  %2626 = vdwg.mxu0
  %v2627 = vadd.f32 %v2436, %v2624
  %vm2628 = vcmask 386048
  %2629 = vst.msk [vmem:[%s5] sm:$0x3] %vm2628, %v2627
  // Predicated region
  $region22: #{maize_gru_forward.1} parent=0 // pred_check
    _
  $region23: #{maize_gru_forward.1} parent=0 // pred_check_branch
    %2631 = sbr.rel (0) target = $region25
  $region24: #{maize_gru_forward.1} parent=0 // pred_region
    _
  $region25: #{maize_gru_forward.1} parent=0 // pred_fallthru
    _
  // Predicated region
  $region26: #{maize_gru_forward.1} parent=0 // pred_check
    _
  $region27: #{maize_gru_forward.1} parent=0 // pred_check_branch
    %2633 = sbr.rel (0) target = $region29
  $region28: #{maize_gru_forward.1} parent=0 // pred_region
    _
  $region29: #{maize_gru_forward.1} parent=0 // pred_fallthru
    _

</llo_original>
